<compile_context>
chip_gen: v7x
topology: tpu7x:2x2x1
jax: 0.10.0
libtpu: 0.0.40
codegen_flags: <defaults>
</compile_context>

<pallas_src>
import functools
import math

import numpy as np
import jax
import jax.numpy as jnp
from jax import lax
from jax.experimental import pallas as pl
from jax.experimental.pallas import tpu as pltpu

PAD = 0             # Constants.PAD
NEG_INF = -1e30     # large finite negative (avoids NaN on fully-masked rows)
VMEM_LIMIT = 32 * 1024 * 1024   # safe on v5e/v6e (128 MiB) and v7x (64 MiB)


# ----------------------------------------------------------------------------
# tiling helpers
# ----------------------------------------------------------------------------
def _tile_dim(dim, cap):
    """Pick (tile, padded_dim) with tile <= cap.

    dim <= cap        -> full dim, no padding (single block on that axis).
    dim % (128k) == 0 -> largest 128-multiple divisor <= cap.
    otherwise         -> tile = cap, dim zero-padded up to a multiple of cap.
    Bounding the tile (instead of falling back to the full dim) keeps e.g. the
    vocab projection from allocating a full-vocab VMEM block."""
    assert cap % 128 == 0
    if dim <= cap:
        return dim, dim
    for c in range(cap, 127, -128):
        if dim % c == 0:
            return c, dim
    padded = -(-dim // cap) * cap
    return cap, padded


def _seq_tile(s, cap):
    """Sequence tile for attention (no padding path needed at demo sizes)."""
    if s <= cap:
        return s
    for c in range(cap, 127, -128):
        if s % c == 0:
            return c
    return s   # TODO(synk): pad ragged sequence lengths instead of full-S tiles


# ----------------------------------------------------------------------------
# Pallas kernels
# ----------------------------------------------------------------------------
def pallas_linear(x, w, b=None, relu=False, tm_cap=256, tn_cap=256, tk_cap=512):
    """y = x @ w (+ b) (+ ReLU).  x: (M, K) f32, w: (K, N) f32/bf16, b: (N,).

    Tiled over (M, N, K); K is the innermost ("arbitrary") reduction axis and
    the f32 output block itself is the accumulator (resident across K).
    Matmul operands are bf16, accumulation f32."""
    M, K = x.shape
    N = w.shape[1]
    tm, Mp = _tile_dim(M, tm_cap)
    tn, Np = _tile_dim(N, tn_cap)
    tk, Kp = _tile_dim(K, tk_cap)
    nk = Kp // tk
    has_bias = b is not None

    if Mp != M or Kp != K:
        x = jnp.pad(x, ((0, Mp - M), (0, Kp - K)))
    if Kp != K or Np != N:
        w = jnp.pad(w, ((0, Kp - K), (0, Np - N)))
    if has_bias:
        b2 = b.reshape(1, N)
        if Np != N:
            b2 = jnp.pad(b2, ((0, 0), (0, Np - N)))

    def kernel(*refs):
        if has_bias:
            x_ref, w_ref, b_ref, o_ref = refs
        else:
            x_ref, w_ref, o_ref = refs
            b_ref = None

        def matmul():
            return jnp.dot(x_ref[...].astype(jnp.bfloat16),
                           w_ref[...].astype(jnp.bfloat16),
                           preferred_element_type=jnp.float32)

        if nk == 1:                       # single K block: write directly
            y = matmul()
            if has_bias:
                y = y + b_ref[...]
            if relu:
                y = jnp.maximum(y, 0.0)
            o_ref[...] = y
            return

        kstep = pl.program_id(2)

        @pl.when(kstep == 0)
        def _init():
            o_ref[...] = jnp.zeros_like(o_ref)

        o_ref[...] += matmul()            # o_ref is resident across the K axis

        if has_bias or relu:
            @pl.when(kstep == nk - 1)
            def _finalize():
                y = o_ref[...]
                if has_bias:
                    y = y + b_ref[...]
                if relu:
                    y = jnp.maximum(y, 0.0)
                o_ref[...] = y

    in_specs = [pl.BlockSpec((tm, tk), lambda i, j, k: (i, k)),
                pl.BlockSpec((tk, tn), lambda i, j, k: (k, j))]
    args = [x, w]
    if has_bias:
        in_specs.append(pl.BlockSpec((1, tn), lambda i, j, k: (0, j)))
        args.append(b2)

    out = pl.pallas_call(
        kernel,
        out_shape=jax.ShapeDtypeStruct((Mp, Np), jnp.float32),
        grid=(Mp // tm, Np // tn, nk),
        in_specs=in_specs,
        out_specs=pl.BlockSpec((tm, tn), lambda i, j, k: (i, j)),
        compiler_params=pltpu.CompilerParams(
            dimension_semantics=("parallel", "parallel", "arbitrary"),
            vmem_limit_bytes=VMEM_LIMIT),
    )(*args)

    if Mp != M or Np != N:
        out = out[:M, :N]
    return out


def pallas_ffn(x, w1, b1, w2, b2, tm_cap=256):
    """Fused feed-forward: relu(x @ w1 + b1) @ w2 + b2.

    The (tm, F) hidden activation stays in VMEM (never written to HBM).
    Weights are held as full (E, F)/(F, E) bf16 blocks per grid step.
    TODO(synk): tile F for very large d_inner (F bf16 blocks > a few MiB)."""
    M, E = x.shape
    F = w1.shape[1]
    tm, Mp = _tile_dim(M, tm_cap)
    if Mp != M:
        x = jnp.pad(x, ((0, Mp - M), (0, 0)))

    def kernel(x_ref, w1_ref, b1_ref, w2_ref, b2_ref, o_ref):
        h = jnp.dot(x_ref[...].astype(jnp.bfloat16), w1_ref[...].astype(jnp.bfloat16),
                    preferred_element_type=jnp.float32)
        h = jnp.maximum(h + b1_ref[...], 0.0)
        o_ref[...] = jnp.dot(h.astype(jnp.bfloat16), w2_ref[...].astype(jnp.bfloat16),
                             preferred_element_type=jnp.float32) + b2_ref[...]

    out = pl.pallas_call(
        kernel,
        out_shape=jax.ShapeDtypeStruct((Mp, E), jnp.float32),
        grid=(Mp // tm,),
        in_specs=[pl.BlockSpec((tm, E), lambda i: (i, 0)),
                  pl.BlockSpec((E, F), lambda i: (0, 0)),
                  pl.BlockSpec((1, F), lambda i: (0, 0)),
                  pl.BlockSpec((F, E), lambda i: (0, 0)),
                  pl.BlockSpec((1, E), lambda i: (0, 0))],
        out_specs=pl.BlockSpec((tm, E), lambda i: (i, 0)),
        compiler_params=pltpu.CompilerParams(
            dimension_semantics=("parallel",),
            vmem_limit_bytes=VMEM_LIMIT),
    )(x, w1, b1.reshape(1, F), w2, b2.reshape(1, E))
    return out[:M] if Mp != M else out


def pallas_flash_attention(q, k, v, kpm_bias, scale, causal,
                           tq_cap=256, tk_cap=256):
    """Flash-style attention with online softmax.

    q: (B, H, Sq, Dh) f32; k, v: (B, H, Sk, Dh) f32; kpm_bias: (B, 1, Sk)
    additive (0 / NEG_INF).  Grid = (B, H, Sq/tq, Sk/tk); the Sk axis is the
    innermost reduction with m/l/acc state in VMEM scratch, so per-step VMEM
    is O(tq*(tk + Dh)) regardless of sequence length, and B*H*nq parallel
    steps keep both v7x TensorCores busy."""
    B, H, Sq, Dh = q.shape
    Sk = k.shape[2]
    tq = _seq_tile(Sq, tq_cap)
    tk = _seq_tile(Sk, tk_cap)
    nq = Sq // tq
    nk = Sk // tk

    def kernel(q_ref, k_ref, v_ref, bias_ref, o_ref, m_sc, l_sc, acc_sc):
        qi = pl.program_id(2)
        ki = pl.program_id(3)

        @pl.when(ki == 0)
        def _init():
            m_sc[...] = jnp.full_like(m_sc, -jnp.inf)
            l_sc[...] = jnp.zeros_like(l_sc)
            acc_sc[...] = jnp.zeros_like(acc_sc)

        # fold the softmax scale into q (Sq x Dh work, not Sq x Sk)
        qh = (q_ref[...] * scale).astype(jnp.bfloat16)          # (tq, Dh)
        kh = k_ref[...].astype(jnp.bfloat16)                    # (tk, Dh)
        s = lax.dot_general(qh, kh, (((1,), (1,)), ((), ())),
                            preferred_element_type=jnp.float32)  # (tq, tk)
        s = s + bias_ref[...]                                   # key-padding bias
        if causal:
            row = qi * tq + lax.broadcasted_iota(jnp.int32, (tq, tk), 0)
            col = ki * tk + lax.broadcasted_iota(jnp.int32, (tq, tk), 1)
            s = jnp.where(col > row, NEG_INF, s)

        m_prev = m_sc[...]
        m_new = jnp.maximum(m_prev, jnp.max(s, axis=-1, keepdims=True))
        alpha = jnp.exp(m_prev - m_new)
        p = jnp.exp(s - m_new)
        l_sc[...] = alpha * l_sc[...] + jnp.sum(p, axis=-1, keepdims=True)
        acc_sc[...] = alpha * acc_sc[...] + jnp.dot(
            p.astype(jnp.bfloat16), v_ref[...].astype(jnp.bfloat16),
            preferred_element_type=jnp.float32)
        m_sc[...] = m_new

        @pl.when(ki == nk - 1)
        def _finalize():
            o_ref[...] = (acc_sc[...] *
                          pl.reciprocal(l_sc[...], approx=True)).astype(o_ref.dtype)

    return pl.pallas_call(
        kernel,
        out_shape=jax.ShapeDtypeStruct((B, H, Sq, Dh), jnp.float32),
        grid=(B, H, nq, nk),
        in_specs=[
            pl.BlockSpec((None, None, tq, Dh), lambda b, h, qi, ki: (b, h, qi, 0)),
            pl.BlockSpec((None, None, tk, Dh), lambda b, h, qi, ki: (b, h, ki, 0)),
            pl.BlockSpec((None, None, tk, Dh), lambda b, h, qi, ki: (b, h, ki, 0)),
            pl.BlockSpec((None, 1, tk), lambda b, h, qi, ki: (b, 0, ki)),
        ],
        out_specs=pl.BlockSpec((None, None, tq, Dh),
                               lambda b, h, qi, ki: (b, h, qi, 0)),
        scratch_shapes=[pltpu.VMEM((tq, 1), jnp.float32),
                        pltpu.VMEM((tq, 1), jnp.float32),
                        pltpu.VMEM((tq, Dh), jnp.float32)],
        compiler_params=pltpu.CompilerParams(
            dimension_semantics=("parallel", "parallel", "parallel", "arbitrary"),
            vmem_limit_bytes=VMEM_LIMIT),
    )(q, k, v, kpm_bias)


def pallas_layernorm(x, g, b, residual=None, eps=1e-5, tr_cap=256):
    """Row-wise LayerNorm over the last dim of (x [+ residual]).  x: (N, D)."""
    N, D = x.shape
    tr, Np = _tile_dim(N, tr_cap)
    has_res = residual is not None
    if Np != N:
        x = jnp.pad(x, ((0, Np - N), (0, 0)))
        if has_res:
            residual = jnp.pad(residual, ((0, Np - N), (0, 0)))
    g2 = g.reshape(1, D)
    b2 = b.reshape(1, D)

    def kernel(*refs):
        if has_res:
            x_ref, r_ref, g_ref, b_ref, o_ref = refs
            xx = x_ref[...] + r_ref[...]           # fused residual add
        else:
            x_ref, g_ref, b_ref, o_ref = refs
            xx = x_ref[...]
        mu = jnp.mean(xx, axis=-1, keepdims=True)
        var = jnp.mean(jnp.square(xx - mu), axis=-1, keepdims=True)
        o_ref[...] = (xx - mu) * lax.rsqrt(var + eps) * g_ref[...] + b_ref[...]

    row_spec = pl.BlockSpec((tr, D), lambda i: (i, 0))
    vec_spec = pl.BlockSpec((1, D), lambda i: (0, 0))
    in_specs = [row_spec] + ([row_spec] if has_res else []) + [vec_spec, vec_spec]
    args = [x] + ([residual] if has_res else []) + [g2, b2]

    out = pl.pallas_call(
        kernel,
        out_shape=jax.ShapeDtypeStruct((Np, D), jnp.float32),
        grid=(Np // tr,),
        in_specs=in_specs,
        out_specs=row_spec,
        compiler_params=pltpu.CompilerParams(
            dimension_semantics=("parallel",),
            vmem_limit_bytes=VMEM_LIMIT),
    )(*args)
    return out[:N] if Np != N else out


def layernorm_3d(x, g, b, residual=None):
    B, S, E = x.shape
    r2 = residual.reshape(B * S, E) if residual is not None else None
    return pallas_layernorm(x.reshape(B * S, E), g, b, r2).reshape(B, S, E)


# ----------------------------------------------------------------------------
# Model pieces (plain-JAX glue around the Pallas kernels)
# ----------------------------------------------------------------------------
def sinusoid_pos_table(n_position, d_hid):
    def angle_vec(pos):
        return [pos / np.power(10000, 2 * (j // 2) / d_hid) for j in range(d_hid)]

    tbl = np.array([angle_vec(p) for p in range(n_position)])
    tbl[:, 0::2] = np.sin(tbl[:, 0::2])
    tbl[:, 1::2] = np.cos(tbl[:, 1::2])
    return jnp.asarray(tbl[None, :, :], dtype=jnp.float32)  # (1, n_position, d_hid)


def mha_self(x, p, nhead, kpm_bias, causal=False):
    """Self-attention: fused QKV projection + flash attention kernel."""
    B, S, E = x.shape
    Dh = E // nhead
    scale = 1.0 / math.sqrt(Dh)
    qkv = pallas_linear(x.reshape(B * S, E), p["w_qkv"], p["b_qkv"])   # (B*S, 3E)
    # wrapper-side layout plumbing: (B*S, 3E) -> (3, B, H, S, Dh)
    qkv = qkv.reshape(B, S, 3, nhead, Dh).transpose(2, 0, 3, 1, 4)
    o = pallas_flash_attention(qkv[0], qkv[1], qkv[2], kpm_bias, scale, causal)
    o = o.transpose(0, 2, 1, 3).reshape(B * S, E)                      # (B*S, E)
    return pallas_linear(o, p["wo"], p["bo"]).reshape(B, S, E)


def mha_cross(x, mem, p, nhead, kpm_bias):
    """Cross-attention: q from x, fused KV projection from memory."""
    B, Sq, E = x.shape
    Sk = mem.shape[1]
    Dh = E // nhead
    scale = 1.0 / math.sqrt(Dh)
    q = pallas_linear(x.reshape(B * Sq, E), p["w_q"], p["b_q"])
    q = q.reshape(B, Sq, nhead, Dh).transpose(0, 2, 1, 3)              # (B,H,Sq,Dh)
    kv = pallas_linear(mem.reshape(B * Sk, E), p["w_kv"], p["b_kv"])
    kv = kv.reshape(B, Sk, 2, nhead, Dh).transpose(2, 0, 3, 1, 4)      # (2,B,H,Sk,Dh)
    o = pallas_flash_attention(q, kv[0], kv[1], kpm_bias, scale, causal=False)
    o = o.transpose(0, 2, 1, 3).reshape(B * Sq, E)
    return pallas_linear(o, p["wo"], p["bo"]).reshape(B, Sq, E)


def encoder_layer_fwd(x, p, nhead, src_kpm_bias):
    B, S, E = x.shape
    a = mha_self(x, p["mha"], nhead, src_kpm_bias, causal=False)
    x = layernorm_3d(a, p["ln1_g"], p["ln1_b"], residual=x)
    h = pallas_ffn(x.reshape(B * S, E), p["w1"], p["b1"],
                   p["w2"], p["b2"]).reshape(B, S, E)
    x = layernorm_3d(h, p["ln2_g"], p["ln2_b"], residual=x)
    return x


def decoder_layer_fwd(x, mem, p, nhead, tgt_kpm_bias, mem_kpm_bias):
    B, S, E = x.shape
    a = mha_self(x, p["self_mha"], nhead, tgt_kpm_bias, causal=True)
    x = layernorm_3d(a, p["ln1_g"], p["ln1_b"], residual=x)
    c = mha_cross(x, mem, p["cross_mha"], nhead, mem_kpm_bias)
    x = layernorm_3d(c, p["ln2_g"], p["ln2_b"], residual=x)
    h = pallas_ffn(x.reshape(B * S, E), p["w1"], p["b1"],
                   p["w2"], p["b2"]).reshape(B, S, E)
    x = layernorm_3d(h, p["ln3_g"], p["ln3_b"], residual=x)
    return x


@functools.partial(jax.jit, static_argnums=(3,))
def transformer_forward(params, src_seq, trg_seq, nhead):
    """Mirrors Transformer.forward (eval mode: dropout == identity)."""
    B, Ss = src_seq.shape
    _, St = trg_seq.shape

    # key-padding masks as tiny (B, 1, S) additive-bias tensors; the causal
    # mask is generated inside the attention kernel (no HBM mask tensor).
    src_kpm_bias = jnp.where(src_seq == PAD, NEG_INF, 0.0).astype(
        jnp.float32)[:, None, :]
    trg_kpm_bias = jnp.where(trg_seq == PAD, NEG_INF, 0.0).astype(
        jnp.float32)[:, None, :]
    mem_kpm_bias = src_kpm_bias

    pos = params["pos_table"]                                  # (1, 200, E)
    src_x = jnp.take(params["src_emb"], src_seq, axis=0) + pos[:, :Ss]  # (B,Ss,E)
    trg_x = jnp.take(params["trg_emb"], trg_seq, axis=0) + pos[:, :St]  # (B,St,E)

    mem = src_x
    for lp in params["enc_layers"]:
        mem = encoder_layer_fwd(mem, lp, nhead, src_kpm_bias)
    mem = layernorm_3d(mem, params["enc_norm_g"], params["enc_norm_b"])

    out = trg_x
    for lp in params["dec_layers"]:
        out = decoder_layer_fwd(out, mem, lp, nhead, trg_kpm_bias, mem_kpm_bias)
    out = layernorm_3d(out, params["dec_norm_g"], params["dec_norm_b"])

    # final vocab projection: bias-free (matches nn.Linear(bias=False)); the
    # batch-first (B, St, V) flatten matches PyTorch's transpose(1,0)+view(-1,V)
    logits = pallas_linear(out.reshape(B * St, -1), params["w_proj"])  # (B*St, V)
    # returns (flattened logits, enc_attn_list, dec_attn_list, enc_dec_attn_list)
    return logits, [], [], []


# ----------------------------------------------------------------------------
# Deterministic parameter initialization (shapes from the module's __init__).
# Matmul weights are stored bf16 (MXU-native, halves weight DMA); biases,
# LayerNorm params and embeddings stay f32.
# ----------------------------------------------------------------------------
def _xavier(key, shape):
    limit = float(np.sqrt(6.0 / (shape[0] + shape[1])))
    return jax.random.uniform(key, shape, jnp.float32, -limit, limit)


def _bf16(x):
    return x.astype(jnp.bfloat16)


def _init_self_mha(key, E):
    ks = jax.random.split(key, 4)
    return dict(
        w_qkv=_bf16(jnp.concatenate([_xavier(ks[0], (E, E)),
                                     _xavier(ks[1], (E, E)),
                                     _xavier(ks[2], (E, E))], axis=1)),
        b_qkv=jnp.zeros((3 * E,), jnp.float32),
        wo=_bf16(_xavier(ks[3], (E, E))), bo=jnp.zeros((E,), jnp.float32))


def _init_cross_mha(key, E):
    ks = jax.random.split(key, 4)
    return dict(
        w_q=_bf16(_xavier(ks[0], (E, E))), b_q=jnp.zeros((E,), jnp.float32),
        w_kv=_bf16(jnp.concatenate([_xavier(ks[1], (E, E)),
                                    _xavier(ks[2], (E, E))], axis=1)),
        b_kv=jnp.zeros((2 * E,), jnp.float32),
        wo=_bf16(_xavier(ks[3], (E, E))), bo=jnp.zeros((E,), jnp.float32))


def _init_enc_layer(key, E, F):
    ks = jax.random.split(key, 3)
    return dict(mha=_init_self_mha(ks[0], E),
                w1=_bf16(_xavier(ks[1], (E, F))), b1=jnp.zeros((F,), jnp.float32),
                w2=_bf16(_xavier(ks[2], (F, E))), b2=jnp.zeros((E,), jnp.float32),
                ln1_g=jnp.ones((E,), jnp.float32), ln1_b=jnp.zeros((E,), jnp.float32),
                ln2_g=jnp.ones((E,), jnp.float32), ln2_b=jnp.zeros((E,), jnp.float32))


def _init_dec_layer(key, E, F):
    ks = jax.random.split(key, 4)
    return dict(self_mha=_init_self_mha(ks[0], E),
                cross_mha=_init_cross_mha(ks[1], E),
                w1=_bf16(_xavier(ks[2], (E, F))), b1=jnp.zeros((F,), jnp.float32),
                w2=_bf16(_xavier(ks[3], (F, E))), b2=jnp.zeros((E,), jnp.float32),
                ln1_g=jnp.ones((E,), jnp.float32), ln1_b=jnp.zeros((E,), jnp.float32),
                ln2_g=jnp.ones((E,), jnp.float32), ln2_b=jnp.zeros((E,), jnp.float32),
                ln3_g=jnp.ones((E,), jnp.float32), ln3_b=jnp.zeros((E,), jnp.float32))


def init_transformer_params(key, n_src_vocab, n_trg_vocab, d_model, d_inner,
                            n_head, n_layers):
    del n_head  # heads are a runtime-static arg, not a parameter
    ks = jax.random.split(key, 5 + 2 * n_layers)
    src_emb = jax.random.normal(ks[0], (n_src_vocab, d_model), jnp.float32)
    trg_emb = jax.random.normal(ks[1], (n_trg_vocab, d_model), jnp.float32)
    src_emb = src_emb.at[PAD].set(0.0)   # padding_idx row zeroed
    trg_emb = trg_emb.at[PAD].set(0.0)
    enc_layers = [_init_enc_layer(ks[2 + i], d_model, d_inner)
                  for i in range(n_layers)]
    dec_layers = [_init_dec_layer(ks[2 + n_layers + i], d_model, d_inner)
                  for i in range(n_layers)]
    return dict(
        pos_table=sinusoid_pos_table(200, d_model),
        src_emb=src_emb, trg_emb=trg_emb,
        enc_layers=enc_layers, dec_layers=dec_layers,
        enc_norm_g=jnp.ones((d_model,), jnp.float32),
        enc_norm_b=jnp.zeros((d_model,), jnp.float32),
        dec_norm_g=jnp.ones((d_model,), jnp.float32),
        dec_norm_b=jnp.zeros((d_model,), jnp.float32),
        w_proj=_bf16(_xavier(ks[2 + 2 * n_layers], (d_model, n_trg_vocab))),
    )


# ----------------------------------------------------------------------------
if __name__ == "__main__":
    # small shapes: batch=2, seq=8, d_model=32, heads=4, ffn=64, layers=2
    n_src_vocab, n_trg_vocab = 13, 11
    d_model, d_inner, n_head, n_layers = 32, 64, 4, 2
    B, Ss, St = 2, 8, 8

    key = jax.random.PRNGKey(0)
    kp, k_src, k_trg = jax.random.split(key, 3)
    params = init_transformer_params(kp, n_src_vocab, n_trg_vocab,
                                     d_model, d_inner, n_head, n_layers)

    # tokens drawn from [1, vocab) so there is no PAD (matches the module's
    # "no padding" assumption; the padding-mask path is still exercised)
    src_seq = jax.random.randint(k_src, (B, Ss), 1, n_src_vocab, dtype=jnp.int32)
    trg_seq = jax.random.randint(k_trg, (B, St), 1, n_trg_vocab, dtype=jnp.int32)

    logits, enc_attn, dec_attn, enc_dec_attn = transformer_forward(
        params, src_seq, trg_seq, n_head)
    logits = jax.block_until_ready(logits)

    assert logits.shape == (B * St, n_trg_vocab), logits.shape
    assert bool(jnp.all(jnp.isfinite(logits)))
    print("KERNEL_OK")
</pallas_src>

<mosaic_0001>
module attributes {stable_mosaic.version = 11 : i64} {
  func.func @kernel(%arg0: i32, %arg1: i32, %arg2: i32, %arg3: memref<16x32xf32, #tpu.memory_space<vmem>>, %arg4: memref<32x96xbf16, #tpu.memory_space<vmem>>, %arg5: memref<1x96xf32, #tpu.memory_space<vmem>>, %arg6: memref<16x96xf32, #tpu.memory_space<vmem>>) attributes {dimension_semantics = [#tpu.dimension_semantics<parallel>, #tpu.dimension_semantics<parallel>, #tpu.dimension_semantics<arbitrary>], iteration_bounds = array<i64: 1, 1, 1>, scalar_prefetch = 0 : i64, scratch_operands = 0 : i64, tpu.core_type = #tpu.core_type<tc>, window_params = [{transform_indices = @transform_0, window_bounds = array<i64: 16, 32>}, {transform_indices = @transform_1, window_bounds = array<i64: 32, 96>}, {transform_indices = @transform_2, window_bounds = array<i64: 1, 96>}, {transform_indices = @transform_3, window_bounds = array<i64: 16, 96>}]} {
    %c0 = arith.constant 0 : index
    %c0_0 = arith.constant 0 : index
    %0 = vector.load %arg3[%c0, %c0_0] : memref<16x32xf32, #tpu.memory_space<vmem>>, vector<16x32xf32>
    %1 = arith.truncf %0 : vector<16x32xf32> to vector<16x32xbf16>
    %c0_1 = arith.constant 0 : index
    %c0_2 = arith.constant 0 : index
    %2 = vector.load %arg4[%c0_1, %c0_2] : memref<32x96xbf16, #tpu.memory_space<vmem>>, vector<32x96xbf16>
    %cst = arith.constant dense<0.000000e+00> : vector<16x96xf32>
    %3 = tpu.matmul %1, %2, %cst {dimension_numbers = #tpu.dot_dimension_numbers<[1], [0], [0], [1], [0, 0, 1, 1], [], []>} : vector<16x32xbf16>, vector<32x96xbf16>, vector<16x96xf32> -> vector<16x96xf32>
    %c0_3 = arith.constant 0 : index
    %c0_4 = arith.constant 0 : index
    %4 = vector.load %arg5[%c0_3, %c0_4] : memref<1x96xf32, #tpu.memory_space<vmem>>, vector<1x96xf32>
    %5 = vector.broadcast %4 : vector<1x96xf32> to vector<16x96xf32>
    %6 = arith.addf %3, %5 : vector<16x96xf32>
    %c0_5 = arith.constant 0 : index
    %c0_6 = arith.constant 0 : index
    %7 = vector.load %arg6[%c0_5, %c0_6] : memref<16x96xf32, #tpu.memory_space<vmem>>, vector<16x96xf32>
    tpu.vector_store %arg6[%c0_5, %c0_6], %6 {strides = array<i32>} : memref<16x96xf32, #tpu.memory_space<vmem>>, vector<16x96xf32>,
    return
  }
  func.func @transform_0(%arg0: i32, %arg1: i32, %arg2: i32) -> (i32, i32) {
    %c0_i32 = arith.constant 0 : i32
    return %arg0, %arg2 : i32, i32
  }
  func.func @transform_1(%arg0: i32, %arg1: i32, %arg2: i32) -> (i32, i32) {
    %c0_i32 = arith.constant 0 : i32
    return %arg2, %arg1 : i32, i32
  }
  func.func @transform_2(%arg0: i32, %arg1: i32, %arg2: i32) -> (i32, i32) {
    %c0_i32 = arith.constant 0 : i32
    %c0_i32_0 = arith.constant 0 : i32
    return %c0_i32, %arg1 : i32, i32
  }
  func.func @transform_3(%arg0: i32, %arg1: i32, %arg2: i32) -> (i32, i32) {
    %c0_i32 = arith.constant 0 : i32
    return %arg0, %arg1 : i32, i32
  }
}

module attributes {stable_mosaic.version = 11 : i64} {
  func.func @kernel(%arg0: i32, %arg1: i32, %arg2: i32, %arg3: i32, %arg4: memref<1x1x8x8xf32, #tpu.memory_space<vmem>>, %arg5: memref<1x1x8x8xf32, #tpu.memory_space<vmem>>, %arg6: memref<1x1x8x8xf32, #tpu.memory_space<vmem>>, %arg7: memref<1x1x8xf32, #tpu.memory_space<vmem>>, %arg8: memref<1x1x8x8xf32, #tpu.memory_space<vmem>>, %arg9: memref<8x1xf32, #tpu.memory_space<vmem>>, %arg10: memref<8x1xf32, #tpu.memory_space<vmem>>, %arg11: memref<8x8xf32, #tpu.memory_space<vmem>>) attributes {dimension_semantics = [#tpu.dimension_semantics<parallel>, #tpu.dimension_semantics<parallel>, #tpu.dimension_semantics<parallel>, #tpu.dimension_semantics<arbitrary>], iteration_bounds = array<i64: 2, 4, 1, 1>, scalar_prefetch = 0 : i64, scratch_operands = 3 : i64, tpu.core_type = #tpu.core_type<tc>, window_params = [{transform_indices = @transform_0, window_bounds = array<i64: 1, 1, 8, 8>}, {transform_indices = @transform_1, window_bounds = array<i64: 1, 1, 8, 8>}, {transform_indices = @transform_2, window_bounds = array<i64: 1, 1, 8, 8>}, {transform_indices = @transform_3, window_bounds = array<i64: 1, 1, 8>}, {transform_indices = @transform_4, window_bounds = array<i64: 1, 1, 8, 8>}]} {
    %c0_i32 = arith.constant 0 : i32
    %0 = arith.cmpi eq, %arg3, %c0_i32 : i32
    %1 = arith.extui %0 : i1 to i32
    %c0_i32_0 = arith.constant 0 : i32
    %2 = arith.cmpi ne, %1, %c0_i32_0 : i32
    scf.if %2 {
      %cst_35 = arith.constant 0xFF800000 : f32
      %56 = vector.broadcast %cst_35 : f32 to vector<8x1xf32>
      %c0_36 = arith.constant 0 : index
      %c0_37 = arith.constant 0 : index
      %57 = vector.load %arg9[%c0_36, %c0_37] : memref<8x1xf32, #tpu.memory_space<vmem>>, vector<8x1xf32>
      tpu.vector_store %arg9[%c0_36, %c0_37], %56 {strides = array<i32>} : memref<8x1xf32, #tpu.memory_space<vmem>>, vector<8x1xf32>,
      %cst_38 = arith.constant 0.000000e+00 : f32
      %58 = vector.broadcast %cst_38 : f32 to vector<8x1xf32>
      %c0_39 = arith.constant 0 : index
      %c0_40 = arith.constant 0 : index
      %59 = vector.load %arg10[%c0_39, %c0_40] : memref<8x1xf32, #tpu.memory_space<vmem>>, vector<8x1xf32>
      tpu.vector_store %arg10[%c0_39, %c0_40], %58 {strides = array<i32>} : memref<8x1xf32, #tpu.memory_space<vmem>>, vector<8x1xf32>,
      %cst_41 = arith.constant 0.000000e+00 : f32
      %60 = vector.broadcast %cst_41 : f32 to vector<8x8xf32>
      %c0_42 = arith.constant 0 : index
      %c0_43 = arith.constant 0 : index
      %61 = vector.load %arg11[%c0_42, %c0_43] : memref<8x8xf32, #tpu.memory_space<vmem>>, vector<8x8xf32>
      tpu.vector_store %arg11[%c0_42, %c0_43], %60 {strides = array<i32>} : memref<8x8xf32, #tpu.memory_space<vmem>>, vector<8x8xf32>,
    } else {
    }
    %c0 = arith.constant 0 : index
    %c0_1 = arith.constant 0 : index
    %c0_2 = arith.constant 0 : index
    %c0_3 = arith.constant 0 : index
    %3 = vector.load %arg4[%c0, %c0_1, %c0_2, %c0_3] : memref<1x1x8x8xf32, #tpu.memory_space<vmem>>, vector<1x1x8x8xf32>
    %4 = vector.shape_cast %3 : vector<1x1x8x8xf32> to vector<8x8xf32>
    %cst = arith.constant 0.353553385 : f32
    %5 = vector.broadcast %cst : f32 to vector<8x8xf32>
    %6 = arith.mulf %4, %5 : vector<8x8xf32>
    %7 = arith.truncf %6 : vector<8x8xf32> to vector<8x8xbf16>
    %c0_4 = arith.constant 0 : index
    %c0_5 = arith.constant 0 : index
    %c0_6 = arith.constant 0 : index
    %c0_7 = arith.constant 0 : index
    %8 = vector.load %arg5[%c0_4, %c0_5, %c0_6, %c0_7] : memref<1x1x8x8xf32, #tpu.memory_space<vmem>>, vector<1x1x8x8xf32>
    %9 = vector.shape_cast %8 : vector<1x1x8x8xf32> to vector<8x8xf32>
    %10 = arith.truncf %9 : vector<8x8xf32> to vector<8x8xbf16>
    %cst_8 = arith.constant dense<0.000000e+00> : vector<8x8xf32>
    %11 = tpu.matmul %7, %10, %cst_8 {dimension_numbers = #tpu.dot_dimension_numbers<[1], [1], [0], [0], [0, 0, 1, 0], [], []>} : vector<8x8xbf16>, vector<8x8xbf16>, vector<8x8xf32> -> vector<8x8xf32>
    %c0_9 = arith.constant 0 : index
    %c0_10 = arith.constant 0 : index
    %c0_11 = arith.constant 0 : index
    %12 = vector.load %arg7[%c0_9, %c0_10, %c0_11] : memref<1x1x8xf32, #tpu.memory_space<vmem>>, vector<1x1x8xf32>
    %13 = vector.shape_cast %12 : vector<1x1x8xf32> to vector<1x8xf32>
    %14 = vector.broadcast %13 : vector<1x8xf32> to vector<8x8xf32>
    %15 = arith.addf %11, %14 : vector<8x8xf32>
    %c8_i32 = arith.constant 8 : i32
    %16 = arith.muli %arg2, %c8_i32 : i32
    %17 = tpu.iota {dimensions = array<i32: 0>} : vector<8x8xi32>
    %18 = vector.broadcast %16 : i32 to vector<8x8xi32>
    %19 = arith.addi %18, %17 : vector<8x8xi32>
    %c8_i32_12 = arith.constant 8 : i32
    %20 = arith.muli %arg3, %c8_i32_12 : i32
    %21 = tpu.iota {dimensions = array<i32: 1>} : vector<8x8xi32>
    %22 = vector.broadcast %20 : i32 to vector<8x8xi32>
    %23 = arith.addi %22, %21 : vector<8x8xi32>
    %24 = arith.cmpi sgt, %23, %19 : vector<8x8xi32>
    %cst_13 = arith.constant -1.000000e+30 : f32
    %25 = vector.broadcast %cst_13 : f32 to vector<8x8xf32>
    %26 = arith.select %24, %25, %15 : vector<8x8xi1>, vector<8x8xf32>
    %c0_14 = arith.constant 0 : index
    %c0_15 = arith.constant 0 : index
    %27 = vector.load %arg9[%c0_14, %c0_15] : memref<8x1xf32, #tpu.memory_space<vmem>>, vector<8x1xf32>
    %cst_16 = arith.constant dense<0xFF800000> : vector<8xf32>
    %28 = vector.multi_reduction <maximumf>, %26, %cst_16 [1] : vector<8x8xf32> to vector<8xf32>
    %29 = vector.shape_cast %28 : vector<8xf32> to vector<8x1xf32>
    %30 = arith.maximumf %27, %29 : vector<8x1xf32>
    %31 = arith.subf %27, %30 : vector<8x1xf32>
    %32 = math.exp %31 : vector<8x1xf32>
    %33 = vector.broadcast %30 : vector<8x1xf32> to vector<8x8xf32>
    %34 = arith.subf %26, %33 : vector<8x8xf32>
    %35 = math.exp %34 : vector<8x8xf32>
    %c0_17 = arith.constant 0 : index
    %c0_18 = arith.constant 0 : index
    %36 = vector.load %arg10[%c0_17, %c0_18] : memref<8x1xf32, #tpu.memory_space<vmem>>, vector<8x1xf32>
    %37 = arith.mulf %32, %36 : vector<8x1xf32>
    %cst_19 = arith.constant dense<0.000000e+00> : vector<8xf32>
    %38 = vector.multi_reduction <add>, %35, %cst_19 [1] : vector<8x8xf32> to vector<8xf32>
    %39 = vector.shape_cast %38 : vector<8xf32> to vector<8x1xf32>
    %40 = arith.addf %37, %39 : vector<8x1xf32>
    %c0_20 = arith.constant 0 : index
    %c0_21 = arith.constant 0 : index
    %41 = vector.load %arg10[%c0_20, %c0_21] : memref<8x1xf32, #tpu.memory_space<vmem>>, vector<8x1xf32>
    tpu.vector_store %arg10[%c0_20, %c0_21], %40 {strides = array<i32>} : memref<8x1xf32, #tpu.memory_space<vmem>>, vector<8x1xf32>,
    %c0_22 = arith.constant 0 : index
    %c0_23 = arith.constant 0 : index
    %42 = vector.load %arg11[%c0_22, %c0_23] : memref<8x8xf32, #tpu.memory_space<vmem>>, vector<8x8xf32>
    %43 = vector.broadcast %32 : vector<8x1xf32> to vector<8x8xf32>
    %44 = arith.mulf %43, %42 : vector<8x8xf32>
    %45 = arith.truncf %35 : vector<8x8xf32> to vector<8x8xbf16>
    %c0_24 = arith.constant 0 : index
    %c0_25 = arith.constant 0 : index
    %c0_26 = arith.constant 0 : index
    %c0_27 = arith.constant 0 : index
    %46 = vector.load %arg6[%c0_24, %c0_25, %c0_26, %c0_27] : memref<1x1x8x8xf32, #tpu.memory_space<vmem>>, vector<1x1x8x8xf32>
    %47 = vector.shape_cast %46 : vector<1x1x8x8xf32> to vector<8x8xf32>
    %48 = arith.truncf %47 : vector<8x8xf32> to vector<8x8xbf16>
    %cst_28 = arith.constant dense<0.000000e+00> : vector<8x8xf32>
    %49 = tpu.matmul %45, %48, %cst_28 {dimension_numbers = #tpu.dot_dimension_numbers<[1], [0], [0], [1], [0, 0, 1, 1], [], []>} : vector<8x8xbf16>, vector<8x8xbf16>, vector<8x8xf32> -> vector<8x8xf32>
    %50 = arith.addf %44, %49 : vector<8x8xf32>
    %c0_29 = arith.constant 0 : index
    %c0_30 = arith.constant 0 : index
    %51 = vector.load %arg11[%c0_29, %c0_30] : memref<8x8xf32, #tpu.memory_space<vmem>>, vector<8x8xf32>
    tpu.vector_store %arg11[%c0_29, %c0_30], %50 {strides = array<i32>} : memref<8x8xf32, #tpu.memory_space<vmem>>, vector<8x8xf32>,
    %c0_31 = arith.constant 0 : index
    %c0_32 = arith.constant 0 : index
    %52 = vector.load %arg9[%c0_31, %c0_32] : memref<8x1xf32, #tpu.memory_space<vmem>>, vector<8x1xf32>
    tpu.vector_store %arg9[%c0_31, %c0_32], %30 {strides = array<i32>} : memref<8x1xf32, #tpu.memory_space<vmem>>, vector<8x1xf32>,
    %c0_i32_33 = arith.constant 0 : i32
    %53 = arith.cmpi eq, %arg3, %c0_i32_33 : i32
    %54 = arith.extui %53 : i1 to i32
    %c0_i32_34 = arith.constant 0 : i32
    %55 = arith.cmpi ne, %54, %c0_i32_34 : i32
    scf.if %55 {
      %c0_35 = arith.constant 0 : index
      %c0_36 = arith.constant 0 : index
      %56 = vector.load %arg11[%c0_35, %c0_36] : memref<8x8xf32, #tpu.memory_space<vmem>>, vector<8x8xf32>
      %c0_37 = arith.constant 0 : index
      %c0_38 = arith.constant 0 : index
      %57 = vector.load %arg10[%c0_37, %c0_38] : memref<8x1xf32, #tpu.memory_space<vmem>>, vector<8x1xf32>
      %58 = tpu.reciprocal %57 {approx = true} : vector<8x1xf32> -> vector<8x1xf32>
      %59 = vector.broadcast %58 : vector<8x1xf32> to vector<8x8xf32>
      %60 = arith.mulf %56, %59 : vector<8x8xf32>
      %c0_39 = arith.constant 0 : index
      %c0_40 = arith.constant 0 : index
      %c0_41 = arith.constant 0 : index
      %c0_42 = arith.constant 0 : index
      %61 = vector.load %arg8[%c0_39, %c0_40, %c0_41, %c0_42] : memref<1x1x8x8xf32, #tpu.memory_space<vmem>>, vector<1x1x8x8xf32>
      %62 = vector.shape_cast %61 : vector<1x1x8x8xf32> to vector<8x8xf32>
      %63 = vector.shape_cast %60 : vector<8x8xf32> to vector<1x1x8x8xf32>
      tpu.vector_store %arg8[%c0_39, %c0_40, %c0_41, %c0_42], %63 {strides = array<i32>} : memref<1x1x8x8xf32, #tpu.memory_space<vmem>>, vector<1x1x8x8xf32>,
    } else {
    }
    return
  }
  func.func @transform_0(%arg0: i32, %arg1: i32, %arg2: i32, %arg3: i32) -> (i32, i32, i32, i32) {
    %c0_i32 = arith.constant 0 : i32
    %c0_i32_0 = arith.constant 0 : i32
    return %arg0, %arg1, %arg2, %c0_i32 : i32, i32, i32, i32
  }
  func.func @transform_1(%arg0: i32, %arg1: i32, %arg2: i32, %arg3: i32) -> (i32, i32, i32, i32) {
    %c0_i32 = arith.constant 0 : i32
    %c0_i32_0 = arith.constant 0 : i32
    return %arg0, %arg1, %arg3, %c0_i32 : i32, i32, i32, i32
  }
  func.func @transform_2(%arg0: i32, %arg1: i32, %arg2: i32, %arg3: i32) -> (i32, i32, i32, i32) {
    %c0_i32 = arith.constant 0 : i32
    %c0_i32_0 = arith.constant 0 : i32
    return %arg0, %arg1, %arg3, %c0_i32 : i32, i32, i32, i32
  }
  func.func @transform_3(%arg0: i32, %arg1: i32, %arg2: i32, %arg3: i32) -> (i32, i32, i32) {
    %c0_i32 = arith.constant 0 : i32
    %c0_i32_0 = arith.constant 0 : i32
    return %arg0, %c0_i32, %arg3 : i32, i32, i32
  }
  func.func @transform_4(%arg0: i32, %arg1: i32, %arg2: i32, %arg3: i32) -> (i32, i32, i32, i32) {
    %c0_i32 = arith.constant 0 : i32
    %c0_i32_0 = arith.constant 0 : i32
    return %arg0, %arg1, %arg2, %c0_i32 : i32, i32, i32, i32
  }
}

module attributes {stable_mosaic.version = 11 : i64} {
  func.func @kernel(%arg0: i32, %arg1: memref<16x32xf32, #tpu.memory_space<vmem>>, %arg2: memref<16x32xf32, #tpu.memory_space<vmem>>, %arg3: memref<1x32xf32, #tpu.memory_space<vmem>>, %arg4: memref<1x32xf32, #tpu.memory_space<vmem>>, %arg5: memref<16x32xf32, #tpu.memory_space<vmem>>) attributes {dimension_semantics = [#tpu.dimension_semantics<parallel>], iteration_bounds = array<i64: 1>, scalar_prefetch = 0 : i64, scratch_operands = 0 : i64, tpu.core_type = #tpu.core_type<tc>, window_params = [{transform_indices = @transform_0, window_bounds = array<i64: 16, 32>}, {transform_indices = @transform_1, window_bounds = array<i64: 16, 32>}, {pipeline_mode = #tpu.pipeline_mode<synchronous>, transform_indices = @transform_2, window_bounds = array<i64: 1, 32>}, {pipeline_mode = #tpu.pipeline_mode<synchronous>, transform_indices = @transform_3, window_bounds = array<i64: 1, 32>}, {transform_indices = @transform_4, window_bounds = array<i64: 16, 32>}]} {
    %c0 = arith.constant 0 : index
    %c0_0 = arith.constant 0 : index
    %0 = vector.load %arg1[%c0, %c0_0] : memref<16x32xf32, #tpu.memory_space<vmem>>, vector<16x32xf32>
    %c0_1 = arith.constant 0 : index
    %c0_2 = arith.constant 0 : index
    %1 = vector.load %arg2[%c0_1, %c0_2] : memref<16x32xf32, #tpu.memory_space<vmem>>, vector<16x32xf32>
    %2 = arith.addf %0, %1 : vector<16x32xf32>
    %cst = arith.constant dense<0.000000e+00> : vector<16xf32>
    %3 = vector.multi_reduction <add>, %2, %cst [1] : vector<16x32xf32> to vector<16xf32>
    %4 = vector.shape_cast %3 : vector<16xf32> to vector<16x1xf32>
    %cst_3 = arith.constant 3.200000e+01 : f32
    %5 = vector.broadcast %cst_3 : f32 to vector<16x1xf32>
    %6 = arith.divf %4, %5 : vector<16x1xf32>
    %7 = vector.broadcast %6 : vector<16x1xf32> to vector<16x32xf32>
    %8 = arith.subf %2, %7 : vector<16x32xf32>
    %9 = arith.mulf %8, %8 : vector<16x32xf32>
    %cst_4 = arith.constant dense<0.000000e+00> : vector<16xf32>
    %10 = vector.multi_reduction <add>, %9, %cst_4 [1] : vector<16x32xf32> to vector<16xf32>
    %11 = vector.shape_cast %10 : vector<16xf32> to vector<16x1xf32>
    %cst_5 = arith.constant 3.200000e+01 : f32
    %12 = vector.broadcast %cst_5 : f32 to vector<16x1xf32>
    %13 = arith.divf %11, %12 : vector<16x1xf32>
    %14 = vector.broadcast %6 : vector<16x1xf32> to vector<16x32xf32>
    %15 = arith.subf %2, %14 : vector<16x32xf32>
    %cst_6 = arith.constant 9.99999974E-6 : f32
    %16 = vector.broadcast %cst_6 : f32 to vector<16x1xf32>
    %17 = arith.addf %13, %16 : vector<16x1xf32>
    %18 = math.rsqrt %17 : vector<16x1xf32>
    %19 = vector.broadcast %18 : vector<16x1xf32> to vector<16x32xf32>
    %20 = arith.mulf %15, %19 : vector<16x32xf32>
    %c0_7 = arith.constant 0 : index
    %c0_8 = arith.constant 0 : index
    %21 = vector.load %arg3[%c0_7, %c0_8] : memref<1x32xf32, #tpu.memory_space<vmem>>, vector<1x32xf32>
    %22 = vector.broadcast %21 : vector<1x32xf32> to vector<16x32xf32>
    %23 = arith.mulf %20, %22 : vector<16x32xf32>
    %c0_9 = arith.constant 0 : index
    %c0_10 = arith.constant 0 : index
    %24 = vector.load %arg4[%c0_9, %c0_10] : memref<1x32xf32, #tpu.memory_space<vmem>>, vector<1x32xf32>
    %25 = vector.broadcast %24 : vector<1x32xf32> to vector<16x32xf32>
    %26 = arith.addf %23, %25 : vector<16x32xf32>
    %c0_11 = arith.constant 0 : index
    %c0_12 = arith.constant 0 : index
    %27 = vector.load %arg5[%c0_11, %c0_12] : memref<16x32xf32, #tpu.memory_space<vmem>>, vector<16x32xf32>
    tpu.vector_store %arg5[%c0_11, %c0_12], %26 {strides = array<i32>} : memref<16x32xf32, #tpu.memory_space<vmem>>, vector<16x32xf32>,
    return
  }
  func.func @transform_0(%arg0: i32) -> (i32, i32) {
    %c0_i32 = arith.constant 0 : i32
    %c0_i32_0 = arith.constant 0 : i32
    return %arg0, %c0_i32 : i32, i32
  }
  func.func @transform_1(%arg0: i32) -> (i32, i32) {
    %c0_i32 = arith.constant 0 : i32
    %c0_i32_0 = arith.constant 0 : i32
    return %arg0, %c0_i32 : i32, i32
  }
  func.func @transform_2(%arg0: i32) -> (i32, i32) {
    %c0_i32 = arith.constant 0 : i32
    %c0_i32_0 = arith.constant 0 : i32
    %c0_i32_1 = arith.constant 0 : i32
    return %c0_i32, %c0_i32_0 : i32, i32
  }
  func.func @transform_3(%arg0: i32) -> (i32, i32) {
    %c0_i32 = arith.constant 0 : i32
    %c0_i32_0 = arith.constant 0 : i32
    %c0_i32_1 = arith.constant 0 : i32
    return %c0_i32, %c0_i32_0 : i32, i32
  }
  func.func @transform_4(%arg0: i32) -> (i32, i32) {
    %c0_i32 = arith.constant 0 : i32
    %c0_i32_0 = arith.constant 0 : i32
    return %arg0, %c0_i32 : i32, i32
  }
}

module attributes {stable_mosaic.version = 11 : i64} {
  func.func @kernel(%arg0: i32, %arg1: i32, %arg2: i32, %arg3: memref<16x32xf32, #tpu.memory_space<vmem>>, %arg4: memref<32x32xbf16, #tpu.memory_space<vmem>>, %arg5: memref<1x32xf32, #tpu.memory_space<vmem>>, %arg6: memref<16x32xf32, #tpu.memory_space<vmem>>) attributes {dimension_semantics = [#tpu.dimension_semantics<parallel>, #tpu.dimension_semantics<parallel>, #tpu.dimension_semantics<arbitrary>], iteration_bounds = array<i64: 1, 1, 1>, scalar_prefetch = 0 : i64, scratch_operands = 0 : i64, tpu.core_type = #tpu.core_type<tc>, window_params = [{transform_indices = @transform_0, window_bounds = array<i64: 16, 32>}, {transform_indices = @transform_1, window_bounds = array<i64: 32, 32>}, {transform_indices = @transform_2, window_bounds = array<i64: 1, 32>}, {transform_indices = @transform_3, window_bounds = array<i64: 16, 32>}]} {
    %c0 = arith.constant 0 : index
    %c0_0 = arith.constant 0 : index
    %0 = vector.load %arg3[%c0, %c0_0] : memref<16x32xf32, #tpu.memory_space<vmem>>, vector<16x32xf32>
    %1 = arith.truncf %0 : vector<16x32xf32> to vector<16x32xbf16>
    %c0_1 = arith.constant 0 : index
    %c0_2 = arith.constant 0 : index
    %2 = vector.load %arg4[%c0_1, %c0_2] : memref<32x32xbf16, #tpu.memory_space<vmem>>, vector<32x32xbf16>
    %cst = arith.constant dense<0.000000e+00> : vector<16x32xf32>
    %3 = tpu.matmul %1, %2, %cst {dimension_numbers = #tpu.dot_dimension_numbers<[1], [0], [0], [1], [0, 0, 1, 1], [], []>} : vector<16x32xbf16>, vector<32x32xbf16>, vector<16x32xf32> -> vector<16x32xf32>
    %c0_3 = arith.constant 0 : index
    %c0_4 = arith.constant 0 : index
    %4 = vector.load %arg5[%c0_3, %c0_4] : memref<1x32xf32, #tpu.memory_space<vmem>>, vector<1x32xf32>
    %5 = vector.broadcast %4 : vector<1x32xf32> to vector<16x32xf32>
    %6 = arith.addf %3, %5 : vector<16x32xf32>
    %c0_5 = arith.constant 0 : index
    %c0_6 = arith.constant 0 : index
    %7 = vector.load %arg6[%c0_5, %c0_6] : memref<16x32xf32, #tpu.memory_space<vmem>>, vector<16x32xf32>
    tpu.vector_store %arg6[%c0_5, %c0_6], %6 {strides = array<i32>} : memref<16x32xf32, #tpu.memory_space<vmem>>, vector<16x32xf32>,
    return
  }
  func.func @transform_0(%arg0: i32, %arg1: i32, %arg2: i32) -> (i32, i32) {
    %c0_i32 = arith.constant 0 : i32
    return %arg0, %arg2 : i32, i32
  }
  func.func @transform_1(%arg0: i32, %arg1: i32, %arg2: i32) -> (i32, i32) {
    %c0_i32 = arith.constant 0 : i32
    return %arg2, %arg1 : i32, i32
  }
  func.func @transform_2(%arg0: i32, %arg1: i32, %arg2: i32) -> (i32, i32) {
    %c0_i32 = arith.constant 0 : i32
    %c0_i32_0 = arith.constant 0 : i32
    return %c0_i32, %arg1 : i32, i32
  }
  func.func @transform_3(%arg0: i32, %arg1: i32, %arg2: i32) -> (i32, i32) {
    %c0_i32 = arith.constant 0 : i32
    return %arg0, %arg1 : i32, i32
  }
}

module attributes {stable_mosaic.version = 11 : i64} {
  func.func @kernel(%arg0: i32, %arg1: memref<16x32xf32, #tpu.memory_space<vmem>>, %arg2: memref<1x32xf32, #tpu.memory_space<vmem>>, %arg3: memref<1x32xf32, #tpu.memory_space<vmem>>, %arg4: memref<16x32xf32, #tpu.memory_space<vmem>>) attributes {dimension_semantics = [#tpu.dimension_semantics<parallel>], iteration_bounds = array<i64: 1>, scalar_prefetch = 0 : i64, scratch_operands = 0 : i64, tpu.core_type = #tpu.core_type<tc>, window_params = [{transform_indices = @transform_0, window_bounds = array<i64: 16, 32>}, {pipeline_mode = #tpu.pipeline_mode<synchronous>, transform_indices = @transform_1, window_bounds = array<i64: 1, 32>}, {pipeline_mode = #tpu.pipeline_mode<synchronous>, transform_indices = @transform_2, window_bounds = array<i64: 1, 32>}, {transform_indices = @transform_3, window_bounds = array<i64: 16, 32>}]} {
    %c0 = arith.constant 0 : index
    %c0_0 = arith.constant 0 : index
    %0 = vector.load %arg1[%c0, %c0_0] : memref<16x32xf32, #tpu.memory_space<vmem>>, vector<16x32xf32>
    %cst = arith.constant dense<0.000000e+00> : vector<16xf32>
    %1 = vector.multi_reduction <add>, %0, %cst [1] : vector<16x32xf32> to vector<16xf32>
    %2 = vector.shape_cast %1 : vector<16xf32> to vector<16x1xf32>
    %cst_1 = arith.constant 3.200000e+01 : f32
    %3 = vector.broadcast %cst_1 : f32 to vector<16x1xf32>
    %4 = arith.divf %2, %3 : vector<16x1xf32>
    %5 = vector.broadcast %4 : vector<16x1xf32> to vector<16x32xf32>
    %6 = arith.subf %0, %5 : vector<16x32xf32>
    %7 = arith.mulf %6, %6 : vector<16x32xf32>
    %cst_2 = arith.constant dense<0.000000e+00> : vector<16xf32>
    %8 = vector.multi_reduction <add>, %7, %cst_2 [1] : vector<16x32xf32> to vector<16xf32>
    %9 = vector.shape_cast %8 : vector<16xf32> to vector<16x1xf32>
    %cst_3 = arith.constant 3.200000e+01 : f32
    %10 = vector.broadcast %cst_3 : f32 to vector<16x1xf32>
    %11 = arith.divf %9, %10 : vector<16x1xf32>
    %12 = vector.broadcast %4 : vector<16x1xf32> to vector<16x32xf32>
    %13 = arith.subf %0, %12 : vector<16x32xf32>
    %cst_4 = arith.constant 9.99999974E-6 : f32
    %14 = vector.broadcast %cst_4 : f32 to vector<16x1xf32>
    %15 = arith.addf %11, %14 : vector<16x1xf32>
    %16 = math.rsqrt %15 : vector<16x1xf32>
    %17 = vector.broadcast %16 : vector<16x1xf32> to vector<16x32xf32>
    %18 = arith.mulf %13, %17 : vector<16x32xf32>
    %c0_5 = arith.constant 0 : index
    %c0_6 = arith.constant 0 : index
    %19 = vector.load %arg2[%c0_5, %c0_6] : memref<1x32xf32, #tpu.memory_space<vmem>>, vector<1x32xf32>
    %20 = vector.broadcast %19 : vector<1x32xf32> to vector<16x32xf32>
    %21 = arith.mulf %18, %20 : vector<16x32xf32>
    %c0_7 = arith.constant 0 : index
    %c0_8 = arith.constant 0 : index
    %22 = vector.load %arg3[%c0_7, %c0_8] : memref<1x32xf32, #tpu.memory_space<vmem>>, vector<1x32xf32>
    %23 = vector.broadcast %22 : vector<1x32xf32> to vector<16x32xf32>
    %24 = arith.addf %21, %23 : vector<16x32xf32>
    %c0_9 = arith.constant 0 : index
    %c0_10 = arith.constant 0 : index
    %25 = vector.load %arg4[%c0_9, %c0_10] : memref<16x32xf32, #tpu.memory_space<vmem>>, vector<16x32xf32>
    tpu.vector_store %arg4[%c0_9, %c0_10], %24 {strides = array<i32>} : memref<16x32xf32, #tpu.memory_space<vmem>>, vector<16x32xf32>,
    return
  }
  func.func @transform_0(%arg0: i32) -> (i32, i32) {
    %c0_i32 = arith.constant 0 : i32
    %c0_i32_0 = arith.constant 0 : i32
    return %arg0, %c0_i32 : i32, i32
  }
  func.func @transform_1(%arg0: i32) -> (i32, i32) {
    %c0_i32 = arith.constant 0 : i32
    %c0_i32_0 = arith.constant 0 : i32
    %c0_i32_1 = arith.constant 0 : i32
    return %c0_i32, %c0_i32_0 : i32, i32
  }
  func.func @transform_2(%arg0: i32) -> (i32, i32) {
    %c0_i32 = arith.constant 0 : i32
    %c0_i32_0 = arith.constant 0 : i32
    %c0_i32_1 = arith.constant 0 : i32
    return %c0_i32, %c0_i32_0 : i32, i32
  }
  func.func @transform_3(%arg0: i32) -> (i32, i32) {
    %c0_i32 = arith.constant 0 : i32
    %c0_i32_0 = arith.constant 0 : i32
    return %arg0, %c0_i32 : i32, i32
  }
}

module attributes {stable_mosaic.version = 11 : i64} {
  func.func @kernel(%arg0: i32, %arg1: i32, %arg2: i32, %arg3: memref<16x32xf32, #tpu.memory_space<vmem>>, %arg4: memref<32x64xbf16, #tpu.memory_space<vmem>>, %arg5: memref<1x64xf32, #tpu.memory_space<vmem>>, %arg6: memref<16x64xf32, #tpu.memory_space<vmem>>) attributes {dimension_semantics = [#tpu.dimension_semantics<parallel>, #tpu.dimension_semantics<parallel>, #tpu.dimension_semantics<arbitrary>], iteration_bounds = array<i64: 1, 1, 1>, scalar_prefetch = 0 : i64, scratch_operands = 0 : i64, tpu.core_type = #tpu.core_type<tc>, window_params = [{transform_indices = @transform_0, window_bounds = array<i64: 16, 32>}, {transform_indices = @transform_1, window_bounds = array<i64: 32, 64>}, {transform_indices = @transform_2, window_bounds = array<i64: 1, 64>}, {transform_indices = @transform_3, window_bounds = array<i64: 16, 64>}]} {
    %c0 = arith.constant 0 : index
    %c0_0 = arith.constant 0 : index
    %0 = vector.load %arg3[%c0, %c0_0] : memref<16x32xf32, #tpu.memory_space<vmem>>, vector<16x32xf32>
    %1 = arith.truncf %0 : vector<16x32xf32> to vector<16x32xbf16>
    %c0_1 = arith.constant 0 : index
    %c0_2 = arith.constant 0 : index
    %2 = vector.load %arg4[%c0_1, %c0_2] : memref<32x64xbf16, #tpu.memory_space<vmem>>, vector<32x64xbf16>
    %cst = arith.constant dense<0.000000e+00> : vector<16x64xf32>
    %3 = tpu.matmul %1, %2, %cst {dimension_numbers = #tpu.dot_dimension_numbers<[1], [0], [0], [1], [0, 0, 1, 1], [], []>} : vector<16x32xbf16>, vector<32x64xbf16>, vector<16x64xf32> -> vector<16x64xf32>
    %c0_3 = arith.constant 0 : index
    %c0_4 = arith.constant 0 : index
    %4 = vector.load %arg5[%c0_3, %c0_4] : memref<1x64xf32, #tpu.memory_space<vmem>>, vector<1x64xf32>
    %5 = vector.broadcast %4 : vector<1x64xf32> to vector<16x64xf32>
    %6 = arith.addf %3, %5 : vector<16x64xf32>
    %c0_5 = arith.constant 0 : index
    %c0_6 = arith.constant 0 : index
    %7 = vector.load %arg6[%c0_5, %c0_6] : memref<16x64xf32, #tpu.memory_space<vmem>>, vector<16x64xf32>
    tpu.vector_store %arg6[%c0_5, %c0_6], %6 {strides = array<i32>} : memref<16x64xf32, #tpu.memory_space<vmem>>, vector<16x64xf32>,
    return
  }
  func.func @transform_0(%arg0: i32, %arg1: i32, %arg2: i32) -> (i32, i32) {
    %c0_i32 = arith.constant 0 : i32
    return %arg0, %arg2 : i32, i32
  }
  func.func @transform_1(%arg0: i32, %arg1: i32, %arg2: i32) -> (i32, i32) {
    %c0_i32 = arith.constant 0 : i32
    return %arg2, %arg1 : i32, i32
  }
  func.func @transform_2(%arg0: i32, %arg1: i32, %arg2: i32) -> (i32, i32) {
    %c0_i32 = arith.constant 0 : i32
    %c0_i32_0 = arith.constant 0 : i32
    return %c0_i32, %arg1 : i32, i32
  }
  func.func @transform_3(%arg0: i32, %arg1: i32, %arg2: i32) -> (i32, i32) {
    %c0_i32 = arith.constant 0 : i32
    return %arg0, %arg1 : i32, i32
  }
}

module attributes {stable_mosaic.version = 11 : i64} {
  func.func @kernel(%arg0: i32, %arg1: memref<16x32xf32, #tpu.memory_space<vmem>>, %arg2: memref<32x64xbf16, #tpu.memory_space<vmem>>, %arg3: memref<1x64xf32, #tpu.memory_space<vmem>>, %arg4: memref<64x32xbf16, #tpu.memory_space<vmem>>, %arg5: memref<1x32xf32, #tpu.memory_space<vmem>>, %arg6: memref<16x32xf32, #tpu.memory_space<vmem>>) attributes {dimension_semantics = [#tpu.dimension_semantics<parallel>], iteration_bounds = array<i64: 1>, scalar_prefetch = 0 : i64, scratch_operands = 0 : i64, tpu.core_type = #tpu.core_type<tc>, window_params = [{transform_indices = @transform_0, window_bounds = array<i64: 16, 32>}, {pipeline_mode = #tpu.pipeline_mode<synchronous>, transform_indices = @transform_1, window_bounds = array<i64: 32, 64>}, {pipeline_mode = #tpu.pipeline_mode<synchronous>, transform_indices = @transform_2, window_bounds = array<i64: 1, 64>}, {pipeline_mode = #tpu.pipeline_mode<synchronous>, transform_indices = @transform_3, window_bounds = array<i64: 64, 32>}, {pipeline_mode = #tpu.pipeline_mode<synchronous>, transform_indices = @transform_4, window_bounds = array<i64: 1, 32>}, {transform_indices = @transform_5, window_bounds = array<i64: 16, 32>}]} {
    %c0 = arith.constant 0 : index
    %c0_0 = arith.constant 0 : index
    %0 = vector.load %arg1[%c0, %c0_0] : memref<16x32xf32, #tpu.memory_space<vmem>>, vector<16x32xf32>
    %1 = arith.truncf %0 : vector<16x32xf32> to vector<16x32xbf16>
    %c0_1 = arith.constant 0 : index
    %c0_2 = arith.constant 0 : index
    %2 = vector.load %arg2[%c0_1, %c0_2] : memref<32x64xbf16, #tpu.memory_space<vmem>>, vector<32x64xbf16>
    %cst = arith.constant dense<0.000000e+00> : vector<16x64xf32>
    %3 = tpu.matmul %1, %2, %cst {dimension_numbers = #tpu.dot_dimension_numbers<[1], [0], [0], [1], [0, 0, 1, 1], [], []>} : vector<16x32xbf16>, vector<32x64xbf16>, vector<16x64xf32> -> vector<16x64xf32>
    %c0_3 = arith.constant 0 : index
    %c0_4 = arith.constant 0 : index
    %4 = vector.load %arg3[%c0_3, %c0_4] : memref<1x64xf32, #tpu.memory_space<vmem>>, vector<1x64xf32>
    %5 = vector.broadcast %4 : vector<1x64xf32> to vector<16x64xf32>
    %6 = arith.addf %3, %5 : vector<16x64xf32>
    %cst_5 = arith.constant 0.000000e+00 : f32
    %7 = vector.broadcast %cst_5 : f32 to vector<16x64xf32>
    %8 = arith.maximumf %6, %7 : vector<16x64xf32>
    %9 = arith.truncf %8 : vector<16x64xf32> to vector<16x64xbf16>
    %c0_6 = arith.constant 0 : index
    %c0_7 = arith.constant 0 : index
    %10 = vector.load %arg4[%c0_6, %c0_7] : memref<64x32xbf16, #tpu.memory_space<vmem>>, vector<64x32xbf16>
    %cst_8 = arith.constant dense<0.000000e+00> : vector<16x32xf32>
    %11 = tpu.matmul %9, %10, %cst_8 {dimension_numbers = #tpu.dot_dimension_numbers<[1], [0], [0], [1], [0, 0, 1, 1], [], []>} : vector<16x64xbf16>, vector<64x32xbf16>, vector<16x32xf32> -> vector<16x32xf32>
    %c0_9 = arith.constant 0 : index
    %c0_10 = arith.constant 0 : index
    %12 = vector.load %arg5[%c0_9, %c0_10] : memref<1x32xf32, #tpu.memory_space<vmem>>, vector<1x32xf32>
    %13 = vector.broadcast %12 : vector<1x32xf32> to vector<16x32xf32>
    %14 = arith.addf %11, %13 : vector<16x32xf32>
    %c0_11 = arith.constant 0 : index
    %c0_12 = arith.constant 0 : index
    %15 = vector.load %arg6[%c0_11, %c0_12] : memref<16x32xf32, #tpu.memory_space<vmem>>, vector<16x32xf32>
    tpu.vector_store %arg6[%c0_11, %c0_12], %14 {strides = array<i32>} : memref<16x32xf32, #tpu.memory_space<vmem>>, vector<16x32xf32>,
    return
  }
  func.func @transform_0(%arg0: i32) -> (i32, i32) {
    %c0_i32 = arith.constant 0 : i32
    %c0_i32_0 = arith.constant 0 : i32
    return %arg0, %c0_i32 : i32, i32
  }
  func.func @transform_1(%arg0: i32) -> (i32, i32) {
    %c0_i32 = arith.constant 0 : i32
    %c0_i32_0 = arith.constant 0 : i32
    %c0_i32_1 = arith.constant 0 : i32
    return %c0_i32, %c0_i32_0 : i32, i32
  }
  func.func @transform_2(%arg0: i32) -> (i32, i32) {
    %c0_i32 = arith.constant 0 : i32
    %c0_i32_0 = arith.constant 0 : i32
    %c0_i32_1 = arith.constant 0 : i32
    return %c0_i32, %c0_i32_0 : i32, i32
  }
  func.func @transform_3(%arg0: i32) -> (i32, i32) {
    %c0_i32 = arith.constant 0 : i32
    %c0_i32_0 = arith.constant 0 : i32
    %c0_i32_1 = arith.constant 0 : i32
    return %c0_i32, %c0_i32_0 : i32, i32
  }
  func.func @transform_4(%arg0: i32) -> (i32, i32) {
    %c0_i32 = arith.constant 0 : i32
    %c0_i32_0 = arith.constant 0 : i32
    %c0_i32_1 = arith.constant 0 : i32
    return %c0_i32, %c0_i32_0 : i32, i32
  }
  func.func @transform_5(%arg0: i32) -> (i32, i32) {
    %c0_i32 = arith.constant 0 : i32
    %c0_i32_0 = arith.constant 0 : i32
    return %arg0, %c0_i32 : i32, i32
  }
}

module attributes {stable_mosaic.version = 11 : i64} {
  func.func @kernel(%arg0: i32, %arg1: i32, %arg2: i32, %arg3: i32, %arg4: memref<1x1x8x8xf32, #tpu.memory_space<vmem>>, %arg5: memref<1x1x8x8xf32, #tpu.memory_space<vmem>>, %arg6: memref<1x1x8x8xf32, #tpu.memory_space<vmem>>, %arg7: memref<1x1x8xf32, #tpu.memory_space<vmem>>, %arg8: memref<1x1x8x8xf32, #tpu.memory_space<vmem>>, %arg9: memref<8x1xf32, #tpu.memory_space<vmem>>, %arg10: memref<8x1xf32, #tpu.memory_space<vmem>>, %arg11: memref<8x8xf32, #tpu.memory_space<vmem>>) attributes {dimension_semantics = [#tpu.dimension_semantics<parallel>, #tpu.dimension_semantics<parallel>, #tpu.dimension_semantics<parallel>, #tpu.dimension_semantics<arbitrary>], iteration_bounds = array<i64: 2, 4, 1, 1>, scalar_prefetch = 0 : i64, scratch_operands = 3 : i64, tpu.core_type = #tpu.core_type<tc>, window_params = [{transform_indices = @transform_0, window_bounds = array<i64: 1, 1, 8, 8>}, {transform_indices = @transform_1, window_bounds = array<i64: 1, 1, 8, 8>}, {transform_indices = @transform_2, window_bounds = array<i64: 1, 1, 8, 8>}, {transform_indices = @transform_3, window_bounds = array<i64: 1, 1, 8>}, {transform_indices = @transform_4, window_bounds = array<i64: 1, 1, 8, 8>}]} {
    %c0_i32 = arith.constant 0 : i32
    %0 = arith.cmpi eq, %arg3, %c0_i32 : i32
    %1 = arith.extui %0 : i1 to i32
    %c0_i32_0 = arith.constant 0 : i32
    %2 = arith.cmpi ne, %1, %c0_i32_0 : i32
    scf.if %2 {
      %cst_33 = arith.constant 0xFF800000 : f32
      %45 = vector.broadcast %cst_33 : f32 to vector<8x1xf32>
      %c0_34 = arith.constant 0 : index
      %c0_35 = arith.constant 0 : index
      %46 = vector.load %arg9[%c0_34, %c0_35] : memref<8x1xf32, #tpu.memory_space<vmem>>, vector<8x1xf32>
      tpu.vector_store %arg9[%c0_34, %c0_35], %45 {strides = array<i32>} : memref<8x1xf32, #tpu.memory_space<vmem>>, vector<8x1xf32>,
      %cst_36 = arith.constant 0.000000e+00 : f32
      %47 = vector.broadcast %cst_36 : f32 to vector<8x1xf32>
      %c0_37 = arith.constant 0 : index
      %c0_38 = arith.constant 0 : index
      %48 = vector.load %arg10[%c0_37, %c0_38] : memref<8x1xf32, #tpu.memory_space<vmem>>, vector<8x1xf32>
      tpu.vector_store %arg10[%c0_37, %c0_38], %47 {strides = array<i32>} : memref<8x1xf32, #tpu.memory_space<vmem>>, vector<8x1xf32>,
      %cst_39 = arith.constant 0.000000e+00 : f32
      %49 = vector.broadcast %cst_39 : f32 to vector<8x8xf32>
      %c0_40 = arith.constant 0 : index
      %c0_41 = arith.constant 0 : index
      %50 = vector.load %arg11[%c0_40, %c0_41] : memref<8x8xf32, #tpu.memory_space<vmem>>, vector<8x8xf32>
      tpu.vector_store %arg11[%c0_40, %c0_41], %49 {strides = array<i32>} : memref<8x8xf32, #tpu.memory_space<vmem>>, vector<8x8xf32>,
    } else {
    }
    %c0 = arith.constant 0 : index
    %c0_1 = arith.constant 0 : index
    %c0_2 = arith.constant 0 : index
    %c0_3 = arith.constant 0 : index
    %3 = vector.load %arg4[%c0, %c0_1, %c0_2, %c0_3] : memref<1x1x8x8xf32, #tpu.memory_space<vmem>>, vector<1x1x8x8xf32>
    %4 = vector.shape_cast %3 : vector<1x1x8x8xf32> to vector<8x8xf32>
    %cst = arith.constant 0.353553385 : f32
    %5 = vector.broadcast %cst : f32 to vector<8x8xf32>
    %6 = arith.mulf %4, %5 : vector<8x8xf32>
    %7 = arith.truncf %6 : vector<8x8xf32> to vector<8x8xbf16>
    %c0_4 = arith.constant 0 : index
    %c0_5 = arith.constant 0 : index
    %c0_6 = arith.constant 0 : index
    %c0_7 = arith.constant 0 : index
    %8 = vector.load %arg5[%c0_4, %c0_5, %c0_6, %c0_7] : memref<1x1x8x8xf32, #tpu.memory_space<vmem>>, vector<1x1x8x8xf32>
    %9 = vector.shape_cast %8 : vector<1x1x8x8xf32> to vector<8x8xf32>
    %10 = arith.truncf %9 : vector<8x8xf32> to vector<8x8xbf16>
    %cst_8 = arith.constant dense<0.000000e+00> : vector<8x8xf32>
    %11 = tpu.matmul %7, %10, %cst_8 {dimension_numbers = #tpu.dot_dimension_numbers<[1], [1], [0], [0], [0, 0, 1, 0], [], []>} : vector<8x8xbf16>, vector<8x8xbf16>, vector<8x8xf32> -> vector<8x8xf32>
    %c0_9 = arith.constant 0 : index
    %c0_10 = arith.constant 0 : index
    %c0_11 = arith.constant 0 : index
    %12 = vector.load %arg7[%c0_9, %c0_10, %c0_11] : memref<1x1x8xf32, #tpu.memory_space<vmem>>, vector<1x1x8xf32>
    %13 = vector.shape_cast %12 : vector<1x1x8xf32> to vector<1x8xf32>
    %14 = vector.broadcast %13 : vector<1x8xf32> to vector<8x8xf32>
    %15 = arith.addf %11, %14 : vector<8x8xf32>
    %c0_12 = arith.constant 0 : index
    %c0_13 = arith.constant 0 : index
    %16 = vector.load %arg9[%c0_12, %c0_13] : memref<8x1xf32, #tpu.memory_space<vmem>>, vector<8x1xf32>
    %cst_14 = arith.constant dense<0xFF800000> : vector<8xf32>
    %17 = vector.multi_reduction <maximumf>, %15, %cst_14 [1] : vector<8x8xf32> to vector<8xf32>
    %18 = vector.shape_cast %17 : vector<8xf32> to vector<8x1xf32>
    %19 = arith.maximumf %16, %18 : vector<8x1xf32>
    %20 = arith.subf %16, %19 : vector<8x1xf32>
    %21 = math.exp %20 : vector<8x1xf32>
    %22 = vector.broadcast %19 : vector<8x1xf32> to vector<8x8xf32>
    %23 = arith.subf %15, %22 : vector<8x8xf32>
    %24 = math.exp %23 : vector<8x8xf32>
    %c0_15 = arith.constant 0 : index
    %c0_16 = arith.constant 0 : index
    %25 = vector.load %arg10[%c0_15, %c0_16] : memref<8x1xf32, #tpu.memory_space<vmem>>, vector<8x1xf32>
    %26 = arith.mulf %21, %25 : vector<8x1xf32>
    %cst_17 = arith.constant dense<0.000000e+00> : vector<8xf32>
    %27 = vector.multi_reduction <add>, %24, %cst_17 [1] : vector<8x8xf32> to vector<8xf32>
    %28 = vector.shape_cast %27 : vector<8xf32> to vector<8x1xf32>
    %29 = arith.addf %26, %28 : vector<8x1xf32>
    %c0_18 = arith.constant 0 : index
    %c0_19 = arith.constant 0 : index
    %30 = vector.load %arg10[%c0_18, %c0_19] : memref<8x1xf32, #tpu.memory_space<vmem>>, vector<8x1xf32>
    tpu.vector_store %arg10[%c0_18, %c0_19], %29 {strides = array<i32>} : memref<8x1xf32, #tpu.memory_space<vmem>>, vector<8x1xf32>,
    %c0_20 = arith.constant 0 : index
    %c0_21 = arith.constant 0 : index
    %31 = vector.load %arg11[%c0_20, %c0_21] : memref<8x8xf32, #tpu.memory_space<vmem>>, vector<8x8xf32>
    %32 = vector.broadcast %21 : vector<8x1xf32> to vector<8x8xf32>
    %33 = arith.mulf %32, %31 : vector<8x8xf32>
    %34 = arith.truncf %24 : vector<8x8xf32> to vector<8x8xbf16>
    %c0_22 = arith.constant 0 : index
    %c0_23 = arith.constant 0 : index
    %c0_24 = arith.constant 0 : index
    %c0_25 = arith.constant 0 : index
    %35 = vector.load %arg6[%c0_22, %c0_23, %c0_24, %c0_25] : memref<1x1x8x8xf32, #tpu.memory_space<vmem>>, vector<1x1x8x8xf32>
    %36 = vector.shape_cast %35 : vector<1x1x8x8xf32> to vector<8x8xf32>
    %37 = arith.truncf %36 : vector<8x8xf32> to vector<8x8xbf16>
    %cst_26 = arith.constant dense<0.000000e+00> : vector<8x8xf32>
    %38 = tpu.matmul %34, %37, %cst_26 {dimension_numbers = #tpu.dot_dimension_numbers<[1], [0], [0], [1], [0, 0, 1, 1], [], []>} : vector<8x8xbf16>, vector<8x8xbf16>, vector<8x8xf32> -> vector<8x8xf32>
    %39 = arith.addf %33, %38 : vector<8x8xf32>
    %c0_27 = arith.constant 0 : index
    %c0_28 = arith.constant 0 : index
    %40 = vector.load %arg11[%c0_27, %c0_28] : memref<8x8xf32, #tpu.memory_space<vmem>>, vector<8x8xf32>
    tpu.vector_store %arg11[%c0_27, %c0_28], %39 {strides = array<i32>} : memref<8x8xf32, #tpu.memory_space<vmem>>, vector<8x8xf32>,
    %c0_29 = arith.constant 0 : index
    %c0_30 = arith.constant 0 : index
    %41 = vector.load %arg9[%c0_29, %c0_30] : memref<8x1xf32, #tpu.memory_space<vmem>>, vector<8x1xf32>
    tpu.vector_store %arg9[%c0_29, %c0_30], %19 {strides = array<i32>} : memref<8x1xf32, #tpu.memory_space<vmem>>, vector<8x1xf32>,
    %c0_i32_31 = arith.constant 0 : i32
    %42 = arith.cmpi eq, %arg3, %c0_i32_31 : i32
    %43 = arith.extui %42 : i1 to i32
    %c0_i32_32 = arith.constant 0 : i32
    %44 = arith.cmpi ne, %43, %c0_i32_32 : i32
    scf.if %44 {
      %c0_33 = arith.constant 0 : index
      %c0_34 = arith.constant 0 : index
      %45 = vector.load %arg11[%c0_33, %c0_34] : memref<8x8xf32, #tpu.memory_space<vmem>>, vector<8x8xf32>
      %c0_35 = arith.constant 0 : index
      %c0_36 = arith.constant 0 : index
      %46 = vector.load %arg10[%c0_35, %c0_36] : memref<8x1xf32, #tpu.memory_space<vmem>>, vector<8x1xf32>
      %47 = tpu.reciprocal %46 {approx = true} : vector<8x1xf32> -> vector<8x1xf32>
      %48 = vector.broadcast %47 : vector<8x1xf32> to vector<8x8xf32>
      %49 = arith.mulf %45, %48 : vector<8x8xf32>
      %c0_37 = arith.constant 0 : index
      %c0_38 = arith.constant 0 : index
      %c0_39 = arith.constant 0 : index
      %c0_40 = arith.constant 0 : index
      %50 = vector.load %arg8[%c0_37, %c0_38, %c0_39, %c0_40] : memref<1x1x8x8xf32, #tpu.memory_space<vmem>>, vector<1x1x8x8xf32>
      %51 = vector.shape_cast %50 : vector<1x1x8x8xf32> to vector<8x8xf32>
      %52 = vector.shape_cast %49 : vector<8x8xf32> to vector<1x1x8x8xf32>
      tpu.vector_store %arg8[%c0_37, %c0_38, %c0_39, %c0_40], %52 {strides = array<i32>} : memref<1x1x8x8xf32, #tpu.memory_space<vmem>>, vector<1x1x8x8xf32>,
    } else {
    }
    return
  }
  func.func @transform_0(%arg0: i32, %arg1: i32, %arg2: i32, %arg3: i32) -> (i32, i32, i32, i32) {
    %c0_i32 = arith.constant 0 : i32
    %c0_i32_0 = arith.constant 0 : i32
    return %arg0, %arg1, %arg2, %c0_i32 : i32, i32, i32, i32
  }
  func.func @transform_1(%arg0: i32, %arg1: i32, %arg2: i32, %arg3: i32) -> (i32, i32, i32, i32) {
    %c0_i32 = arith.constant 0 : i32
    %c0_i32_0 = arith.constant 0 : i32
    return %arg0, %arg1, %arg3, %c0_i32 : i32, i32, i32, i32
  }
  func.func @transform_2(%arg0: i32, %arg1: i32, %arg2: i32, %arg3: i32) -> (i32, i32, i32, i32) {
    %c0_i32 = arith.constant 0 : i32
    %c0_i32_0 = arith.constant 0 : i32
    return %arg0, %arg1, %arg3, %c0_i32 : i32, i32, i32, i32
  }
  func.func @transform_3(%arg0: i32, %arg1: i32, %arg2: i32, %arg3: i32) -> (i32, i32, i32) {
    %c0_i32 = arith.constant 0 : i32
    %c0_i32_0 = arith.constant 0 : i32
    return %arg0, %c0_i32, %arg3 : i32, i32, i32
  }
  func.func @transform_4(%arg0: i32, %arg1: i32, %arg2: i32, %arg3: i32) -> (i32, i32, i32, i32) {
    %c0_i32 = arith.constant 0 : i32
    %c0_i32_0 = arith.constant 0 : i32
    return %arg0, %arg1, %arg2, %c0_i32 : i32, i32, i32, i32
  }
}

module attributes {stable_mosaic.version = 11 : i64} {
  func.func @kernel(%arg0: i32, %arg1: i32, %arg2: i32, %arg3: memref<16x32xf32, #tpu.memory_space<vmem>>, %arg4: memref<32x11xbf16, #tpu.memory_space<vmem>>, %arg5: memref<16x11xf32, #tpu.memory_space<vmem>>) attributes {dimension_semantics = [#tpu.dimension_semantics<parallel>, #tpu.dimension_semantics<parallel>, #tpu.dimension_semantics<arbitrary>], iteration_bounds = array<i64: 1, 1, 1>, scalar_prefetch = 0 : i64, scratch_operands = 0 : i64, tpu.core_type = #tpu.core_type<tc>, window_params = [{transform_indices = @transform_0, window_bounds = array<i64: 16, 32>}, {transform_indices = @transform_1, window_bounds = array<i64: 32, 11>}, {transform_indices = @transform_2, window_bounds = array<i64: 16, 11>}]} {
    %c0 = arith.constant 0 : index
    %c0_0 = arith.constant 0 : index
    %0 = vector.load %arg3[%c0, %c0_0] : memref<16x32xf32, #tpu.memory_space<vmem>>, vector<16x32xf32>
    %1 = arith.truncf %0 : vector<16x32xf32> to vector<16x32xbf16>
    %c0_1 = arith.constant 0 : index
    %c0_2 = arith.constant 0 : index
    %2 = vector.load %arg4[%c0_1, %c0_2] : memref<32x11xbf16, #tpu.memory_space<vmem>>, vector<32x11xbf16>
    %cst = arith.constant dense<0.000000e+00> : vector<16x11xf32>
    %3 = tpu.matmul %1, %2, %cst {dimension_numbers = #tpu.dot_dimension_numbers<[1], [0], [0], [1], [0, 0, 1, 1], [], []>} : vector<16x32xbf16>, vector<32x11xbf16>, vector<16x11xf32> -> vector<16x11xf32>
    %c0_3 = arith.constant 0 : index
    %c0_4 = arith.constant 0 : index
    %4 = vector.load %arg5[%c0_3, %c0_4] : memref<16x11xf32, #tpu.memory_space<vmem>>, vector<16x11xf32>
    tpu.vector_store %arg5[%c0_3, %c0_4], %3 {strides = array<i32>} : memref<16x11xf32, #tpu.memory_space<vmem>>, vector<16x11xf32>,
    return
  }
  func.func @transform_0(%arg0: i32, %arg1: i32, %arg2: i32) -> (i32, i32) {
    %c0_i32 = arith.constant 0 : i32
    return %arg0, %arg2 : i32, i32
  }
  func.func @transform_1(%arg0: i32, %arg1: i32, %arg2: i32) -> (i32, i32) {
    %c0_i32 = arith.constant 0 : i32
    return %arg2, %arg1 : i32, i32
  }
  func.func @transform_2(%arg0: i32, %arg1: i32, %arg2: i32) -> (i32, i32) {
    %c0_i32 = arith.constant 0 : i32
    return %arg0, %arg1 : i32, i32
  }
}

</mosaic_0001>

<llo_original>
// kernel: transformer_forward.50
$region0: #{transformer_forward.50}
  #allocation0 [shape = 'u32[]', space=smem, size = 0x4, offset = 0x4, fixed_abs, tag = 'smem constant byte address 0x4 - core index']
  #allocation1 [shape = 'u32[144,128]{1,0:T(1,128)}', space=vmem, size = 0x12000, scoped, tag = 'internal scratch']
  %s0 = inlined_call_operand.vmem [shape: f32[16,32], index: 0, kind: input, shape index: {}]
  %s1 = inlined_call_operand.vmem [shape: bf16[32,96], index: 1, kind: input, shape index: {}]
  %s2 = inlined_call_operand.vmem [shape: f32[1,96], index: 2, kind: input, shape index: {}]
  %s3 = inlined_call_operand.vmem [shape: f32[16,96], index: 3, kind: output, shape index: {}]
  %s4 = sld [smem:[#allocation0]]
  $region22: #{transformer_forward.50} parent=0
    _
  %s6 = ssub.s32 1, %s4
  %s7 = scalar_select 0, %s6, %s4
  // Predicated region
  $region2: #{transformer_forward.50} parent=0 // pred_check
    _
  $region3: #{transformer_forward.50} parent=0 // pred_check_branch
    %9 = sbr.rel (0) target = $region5
  $region4: #{transformer_forward.50} parent=0 // pred_region
    _
  $region5: #{transformer_forward.50} parent=0 // pred_fallthru
    _
  // Predicated region
  $region6: #{transformer_forward.50} parent=0 // pred_check
    _
  $region7: #{transformer_forward.50} parent=0 // pred_check_branch
    %11 = sbr.rel (0) target = $region9
  $region8: #{transformer_forward.50} parent=0 // pred_region
    _
  $region9: #{transformer_forward.50} parent=0 // pred_fallthru
    _
  // Predicated region
  $region10: #{transformer_forward.50} parent=0 // pred_check
    _
  $region11: #{transformer_forward.50} parent=0 // pred_check_branch
    %13 = sbr.rel (0) target = $region13
  $region12: #{transformer_forward.50} parent=0 // pred_region
    _
  $region13: #{transformer_forward.50} parent=0 // pred_fallthru
    _
  %v15 = vld [vmem:[%s0] sm:$0xff]
  %v16 = vld [vmem:[%s0 + $0x8] sm:$0xff]
  %v17 = vpack.c.bf16 %v16, %v15
  %v18 = vld [vmem:[%s1] sm:$0xf]
  %v19 = vld [vmem:[%s1 + $0x4] sm:$0xf]
  %v20 = vld [vmem:[%s1 + $0x8] sm:$0xf]
  %v21 = vld [vmem:[%s1 + $0xc] sm:$0xf]
  %v22 = vld [vmem:[%s2] sm:$0x1]
  %v24 = vlaneseq
  %v25 = vshrl.u32 %v24, 7
  %v26 = vsub.s32 0, %v25
  %v27 = vrot.slane %v22, %v26
  %v33 = vunpack.c.l.b16 %v18
  %v34 = vunpack.c.l.b16 %v19
  %v35 = vunpack.c.l.b16 %v20
  %v36 = vunpack.c.l.b16 %v21
  %v37 = vpack.c.b16 %v34, %v33
  %v38 = vpack.c.b16 %v36, %v35
  %vm41 = vcmask 261120
  %v43 = vsel %vm41, %v17, 0
  %45 = vmatprep.subr.bf16.mxu0 0
  %46 = vmatpush1.bf16.msra.mxu0 %v37
  %47 = vmatprep.subr.bf16.mxu0 0
  %48 = vmatpush1.bf16.msra.mxu0 %v38
  %49 = vmatprep.subr.bf16.mxu0 0
  %50 = vmatpush1.bf16.msra.mxu0 0
  %51 = vmatprep.subr.bf16.mxu0 0
  %52 = vmatpush1.bf16.msra.mxu0 0
  %53 = vmatprep.subr.bf16.mxu0 0
  %54 = vmatpush1.bf16.msra.mxu0 0
  %55 = vmatprep.subr.bf16.mxu0 0
  %56 = vmatpush1.bf16.msra.mxu0 0
  %57 = vmatprep.subr.bf16.mxu0 0
  %58 = vmatpush1.bf16.msra.mxu0 0
  %59 = vmatprep.subr.bf16.mxu0 0
  %60 = vmatpush1.bf16.msra.mxu0 0
  %61 = vmatprep.subr.bf16.mxu0 0
  %62 = vmatpush1.bf16.msra.mxu0 0
  %63 = vmatprep.subr.bf16.mxu0 0
  %64 = vmatpush1.bf16.msra.mxu0 0
  %65 = vmatprep.subr.bf16.mxu0 0
  %66 = vmatpush1.bf16.msra.mxu0 0
  %67 = vmatprep.subr.bf16.mxu0 0
  %68 = vmatpush1.bf16.msra.mxu0 0
  %69 = vmatprep.subr.bf16.mxu0 0
  %70 = vmatpush1.bf16.msra.mxu0 0
  %71 = vmatprep.subr.bf16.mxu0 0
  %72 = vmatpush1.bf16.msra.mxu0 0
  %73 = vmatprep.subr.bf16.mxu0 0
  %74 = vmatpush1.bf16.msra.mxu0 0
  %75 = vmatprep.subr.bf16.mxu0 0
  %76 = vmatpush1.bf16.msra.mxu0 0
  %77 = vmatprep.mubr.bf16.mxu0 0
  %78 = vmatmul.mubr.bf16.gmra.mrb[0].mxu0 %v43
  %v79 = vpop.f32.mrb[0].mxu0
  %v80 = vadd.f32 %v27, %v79
  %v81 = vpop.f32.mrb[0].mxu0
  %v82 = vpop.f32.mrb[0].mxu0
  %v83 = vadd.f32 %v27, %v82
  %v84 = vpop.f32.mrb[0].mxu0
  %85 = vdwg.mxu0
  %vm86 = vcmask 785408
  %87 = vst.msk [vmem:[%s3] sm:$0xff] %vm86, %v80
  %88 = vst.msk [vmem:[%s3 + $0x8] sm:$0xff] %vm86, %v83
  // Predicated region
  $region14: #{transformer_forward.50} parent=0 // pred_check
    _
  $region15: #{transformer_forward.50} parent=0 // pred_check_branch
    %90 = sbr.rel (0) target = $region17
  $region16: #{transformer_forward.50} parent=0 // pred_region
    _
  $region17: #{transformer_forward.50} parent=0 // pred_fallthru
    _
  // Predicated region
  $region18: #{transformer_forward.50} parent=0 // pred_check
    _
  $region19: #{transformer_forward.50} parent=0 // pred_check_branch
    %92 = sbr.rel (0) target = $region21
  $region20: #{transformer_forward.50} parent=0 // pred_region
    _
  $region21: #{transformer_forward.50} parent=0 // pred_fallthru
    _

// kernel: transformer_forward.51
$region0: #{transformer_forward.51}
  #allocation0 [shape = 'u32[]', space=smem, size = 0x4, offset = 0x4, fixed_abs, tag = 'smem constant byte address 0x4 - core index']
  #allocation1 [shape = 'u32[144,128]{1,0:T(1,128)}', space=vmem, size = 0x12000, scoped, tag = 'internal scratch']
  #allocation2 [shape = 'f32[8,1]{1,0:T(8,128)}', space=vmem, size = 0x1000, scoped, tag = 'scratch operand']
  #allocation3 [shape = 'f32[8,1]{1,0:T(8,128)}', space=vmem, size = 0x1000, scoped, tag = 'scratch operand']
  #allocation4 [shape = 'f32[8,8]{1,0:T(8,128)}', space=vmem, size = 0x1000, scoped, tag = 'scratch operand']
  %s0 = inlined_call_operand.vmem [shape: f32[2,4,8,8], index: 0, kind: input, shape index: {}]
  %s1 = inlined_call_operand.vmem [shape: f32[2,4,8,8], index: 1, kind: input, shape index: {}]
  %s2 = inlined_call_operand.vmem [shape: f32[2,4,8,8], index: 2, kind: input, shape index: {}]
  %s3 = inlined_call_operand.vmem [shape: f32[2,1,8], index: 3, kind: input, shape index: {}]
  %s4 = inlined_call_operand.vmem [shape: f32[2,4,8,8], index: 4, kind: output, shape index: {}]
  %s5 = sld [smem:[#allocation0]]
  $region57: #{transformer_forward.51} parent=0
    _
  %s7 = ssub.s32 1, %s5
  %s8 = scalar_select 0, %s7, %s5
  loop: start=0, step=1, limit=10
  $region2: #{transformer_forward.51} parent=0 // loop_pre_header
    _
  $region3: #{transformer_forward.51} parent=0 // loop_header
    %s10 = sphi 0, %s14
    %p11 = scmp.ge.s32.totalorder %s10, 10
    %s17 = sphi 0, %s43
    %s18 = sphi 0, %s39
    %s19 = sphi 0, %s35
    %s20 = sphi 0, %s31
    %s21 = sphi 0, %s17
    %s22 = sphi 0, %s18
    %s23 = sphi 0, %s19
    %s24 = sphi 0, %s20
    %s25 = sphi 0, %s21
    %s26 = sphi 0, %s22
    %s27 = sphi 0, %s23
    %s28 = sphi 0, %s24
    %s50 = sphi 0, %s52
    %s53 = sphi 0, %s50
    %s54 = sphi 0, %s53
    %s70 = sphi 0, %s54
    %s80 = sphi 0, %s82
    %s83 = sphi 0, %s80
    %s84 = sphi 0, %s83
    %s100 = sphi 0, %s84
    %s110 = sphi 0, %s112
    %s113 = sphi 0, %s110
    %s114 = sphi 0, %s113
    %s130 = sphi 0, %s114
    %s138 = sphi 0, %s140
    %s141 = sphi 0, %s138
    %s142 = sphi 0, %s141
    %s158 = sphi 0, %s142
    %s168 = sphi 0, %s170
    %s171 = sphi 0, %s168
    %s172 = sphi 0, %s171
    %s188 = sphi 0, %s172
  $region4: #{transformer_forward.51} parent=0 // loop_header_branch
    %13 = sbr.rel (%p11) target = $region8
  $region5: #{transformer_forward.51} parent=0 // loop_body
    %s15 = ssub.s32 %s10, 1
    %s16 = ssub.s32 %s10, 2
    %s29 = sadd.s32 1, %s20
    %p30 = scmp.ge.s32.totalorder %s29, 1
    %s31 = scalar_select %p30, 0, %s29
    %s32 = sadd.s32 1, %s19
    %s33 = scalar_select %p30, %s32, %s19
    %p34 = scmp.ge.s32.totalorder %s33, 1
    %s35 = scalar_select %p34, 0, %s33
    %s36 = sadd.s32 1, %s18
    %s37 = scalar_select %p34, %s36, %s18
    %p38 = scmp.ge.s32.totalorder %s37, 4
    %s39 = scalar_select %p38, 0, %s37
    %s40 = sadd.s32 1, %s17
    %s41 = scalar_select %p38, %s40, %s17
    %p42 = scmp.ge.s32.totalorder %s41, 2
    %s43 = scalar_select %p42, 0, %s41
    %s44 = ssub.s32 %s17, %s43
    %s45 = ssub.s32 %s18, %s39
    %s46 = sor.u32 %s44, %s45
    %s47 = ssub.s32 %s19, %s35
    %s48 = sor.u32 %s46, %s47
    %p49 = scmp.eq.s32.totalorder %s48, 0
    %s51 = sadd.s32 %s50, 1
    %s52 = scalar_select %p49, %s50, %s51
    %p55 = pneg %p49
    %p56 = scmp.eq.s32.totalorder %s10, 7
    %p57 = por %p55, %p56
    %p58 = scmp.ne.s32.totalorder %s50, %s53
    %p59 = scmp.eq.s32.totalorder %s10, 0
    %p60 = por %p58, %p59
    %p61 = scmp.ne.s32.totalorder %s50, %s53
    %p62 = scmp.eq.s32.totalorder %s15, 7
    %p63 = por %p61, %p62
    %p64 = scmp.ne.s32.totalorder %s53, %s54
    %p65 = scmp.eq.s32.totalorder %s15, 0
    %p66 = por %p64, %p65
    %p67 = scmp.ne.s32.totalorder %s53, %s54
    %p68 = scmp.eq.s32.totalorder %s16, 7
    %p69 = por %p67, %p68
    %p71 = scmp.ne.s32.totalorder %s54, %s70
    %p72 = scmp.eq.s32.totalorder %s16, 0
    %p73 = por %p71, %p72
    %s74 = ssub.s32 %s17, %s43
    %s75 = ssub.s32 %s18, %s39
    %s76 = sor.u32 %s74, %s75
    %s77 = ssub.s32 %s20, %s31
    %s78 = sor.u32 %s76, %s77
    %p79 = scmp.eq.s32.totalorder %s78, 0
    %s81 = sadd.s32 %s80, 1
    %s82 = scalar_select %p79, %s80, %s81
    %p85 = pneg %p79
    %p86 = scmp.eq.s32.totalorder %s10, 7
    %p87 = por %p85, %p86
    %p88 = scmp.ne.s32.totalorder %s80, %s83
    %p89 = scmp.eq.s32.totalorder %s10, 0
    %p90 = por %p88, %p89
    %p91 = scmp.ne.s32.totalorder %s80, %s83
    %p92 = scmp.eq.s32.totalorder %s15, 7
    %p93 = por %p91, %p92
    %p94 = scmp.ne.s32.totalorder %s83, %s84
    %p95 = scmp.eq.s32.totalorder %s15, 0
    %p96 = por %p94, %p95
    %p97 = scmp.ne.s32.totalorder %s83, %s84
    %p98 = scmp.eq.s32.totalorder %s16, 7
    %p99 = por %p97, %p98
    %p101 = scmp.ne.s32.totalorder %s84, %s100
    %p102 = scmp.eq.s32.totalorder %s16, 0
    %p103 = por %p101, %p102
    %s104 = ssub.s32 %s17, %s43
    %s105 = ssub.s32 %s18, %s39
    %s106 = sor.u32 %s104, %s105
    %s107 = ssub.s32 %s20, %s31
    %s108 = sor.u32 %s106, %s107
    %p109 = scmp.eq.s32.totalorder %s108, 0
    %s111 = sadd.s32 %s110, 1
    %s112 = scalar_select %p109, %s110, %s111
    %p115 = pneg %p109
    %p116 = scmp.eq.s32.totalorder %s10, 7
    %p117 = por %p115, %p116
    %p118 = scmp.ne.s32.totalorder %s110, %s113
    %p119 = scmp.eq.s32.totalorder %s10, 0
    %p120 = por %p118, %p119
    %p121 = scmp.ne.s32.totalorder %s110, %s113
    %p122 = scmp.eq.s32.totalorder %s15, 7
    %p123 = por %p121, %p122
    %p124 = scmp.ne.s32.totalorder %s113, %s114
    %p125 = scmp.eq.s32.totalorder %s15, 0
    %p126 = por %p124, %p125
    %p127 = scmp.ne.s32.totalorder %s113, %s114
    %p128 = scmp.eq.s32.totalorder %s16, 7
    %p129 = por %p127, %p128
    %p131 = scmp.ne.s32.totalorder %s114, %s130
    %p132 = scmp.eq.s32.totalorder %s16, 0
    %p133 = por %p131, %p132
    %s134 = ssub.s32 %s17, %s43
    %s135 = ssub.s32 %s20, %s31
    %s136 = sor.u32 %s134, %s135
    %p137 = scmp.eq.s32.totalorder %s136, 0
    %s139 = sadd.s32 %s138, 1
    %s140 = scalar_select %p137, %s138, %s139
    %p143 = pneg %p137
    %p144 = scmp.eq.s32.totalorder %s10, 7
    %p145 = por %p143, %p144
    %p146 = scmp.ne.s32.totalorder %s138, %s141
    %p147 = scmp.eq.s32.totalorder %s10, 0
    %p148 = por %p146, %p147
    %p149 = scmp.ne.s32.totalorder %s138, %s141
    %p150 = scmp.eq.s32.totalorder %s15, 7
    %p151 = por %p149, %p150
    %p152 = scmp.ne.s32.totalorder %s141, %s142
    %p153 = scmp.eq.s32.totalorder %s15, 0
    %p154 = por %p152, %p153
    %p155 = scmp.ne.s32.totalorder %s141, %s142
    %p156 = scmp.eq.s32.totalorder %s16, 7
    %p157 = por %p155, %p156
    %p159 = scmp.ne.s32.totalorder %s142, %s158
    %p160 = scmp.eq.s32.totalorder %s16, 0
    %p161 = por %p159, %p160
    %s162 = ssub.s32 %s17, %s43
    %s163 = ssub.s32 %s18, %s39
    %s164 = sor.u32 %s162, %s163
    %s165 = ssub.s32 %s19, %s35
    %s166 = sor.u32 %s164, %s165
    %p167 = scmp.eq.s32.totalorder %s166, 0
    %s169 = sadd.s32 %s168, 1
    %s170 = scalar_select %p167, %s168, %s169
    %p173 = pneg %p167
    %p174 = scmp.eq.s32.totalorder %s10, 7
    %p175 = por %p173, %p174
    %p176 = scmp.ne.s32.totalorder %s168, %s171
    %p177 = scmp.eq.s32.totalorder %s10, 0
    %p178 = por %p176, %p177
    %p179 = scmp.ne.s32.totalorder %s168, %s171
    %p180 = scmp.eq.s32.totalorder %s15, 7
    %p181 = por %p179, %p180
    %p182 = scmp.ne.s32.totalorder %s171, %s172
    %p183 = scmp.eq.s32.totalorder %s15, 0
    %p184 = por %p182, %p183
    %p185 = scmp.ne.s32.totalorder %s171, %s172
    %p186 = scmp.eq.s32.totalorder %s16, 7
    %p187 = por %p185, %p186
    %p189 = scmp.ne.s32.totalorder %s172, %s188
    %p190 = scmp.eq.s32.totalorder %s16, 0
    %p191 = por %p189, %p190
    %p192 = scmp.le.s32.totalorder 1, %s10
    %p193 = scmp.lt.s32.totalorder %s10, 9
    %p194 = pnand %p192, %p193
    %p195 = pneg %p194
    // Predicated region
    $region9: #{transformer_forward.51} parent=5 // pred_check
      _
    $region10: #{transformer_forward.51} parent=5 // pred_check_branch
      %197 = sbr.rel (%p194) target = $region12
    $region11: #{transformer_forward.51} parent=5 // pred_region
      %s198 = ssub.s32 %s10, 1
    $region12: #{transformer_forward.51} parent=5 // pred_fallthru
      _
    %p199 = scmp.lt.s32.totalorder %s10, 8
    // Predicated region
    $region13: #{transformer_forward.51} parent=5 // pred_check
      %p200 = pneg %p199
    $region14: #{transformer_forward.51} parent=5 // pred_check_branch
      %202 = sbr.rel (%p200) target = $region16
    $region15: #{transformer_forward.51} parent=5 // pred_region
      // Predicated region
      $region17: #{transformer_forward.51} parent=15 // pred_check
        %p203 = pneg %p60
      $region18: #{transformer_forward.51} parent=15 // pred_check_branch
        %205 = sbr.rel (%p203) target = $region20
      $region19: #{transformer_forward.51} parent=15 // pred_region
        %p206 = scmp.lt.s32.totalorder %s17, 1
        %s207 = scalar_select %p206, %s17, 1
        %p208 = scmp.lt.s32.totalorder %s18, 3
        %s209 = scalar_select %p208, %s18, 3
        %p210 = scmp.lt.s32.totalorder %s19, 0
        %s211 = scalar_select %p210, %s19, 0
        %s212 = sadd.s32 %s211, %s209
        %s213 = smul.addr %s207, 4
        %s214 = sadd.s32 %s212, %s213
        %s215 = smul.addr %s214, 8
        %s216 = scalar_lea.vmem %s0, %s215
      $region20: #{transformer_forward.51} parent=15 // pred_fallthru
        _
      // Predicated region
      $region21: #{transformer_forward.51} parent=15 // pred_check
        %p217 = pneg %p90
      $region22: #{transformer_forward.51} parent=15 // pred_check_branch
        %219 = sbr.rel (%p217) target = $region24
      $region23: #{transformer_forward.51} parent=15 // pred_region
        %p220 = scmp.lt.s32.totalorder %s17, 1
        %s221 = scalar_select %p220, %s17, 1
        %p222 = scmp.lt.s32.totalorder %s18, 3
        %s223 = scalar_select %p222, %s18, 3
        %p224 = scmp.lt.s32.totalorder %s20, 0
        %s225 = scalar_select %p224, %s20, 0
        %s226 = sadd.s32 %s225, %s223
        %s227 = smul.addr %s221, 4
        %s228 = sadd.s32 %s226, %s227
        %s229 = smul.addr %s228, 8
        %s230 = scalar_lea.vmem %s1, %s229
      $region24: #{transformer_forward.51} parent=15 // pred_fallthru
        _
      // Predicated region
      $region25: #{transformer_forward.51} parent=15 // pred_check
        %p231 = pneg %p120
      $region26: #{transformer_forward.51} parent=15 // pred_check_branch
        %233 = sbr.rel (%p231) target = $region28
      $region27: #{transformer_forward.51} parent=15 // pred_region
        %p234 = scmp.lt.s32.totalorder %s17, 1
        %s235 = scalar_select %p234, %s17, 1
        %p236 = scmp.lt.s32.totalorder %s18, 3
        %s237 = scalar_select %p236, %s18, 3
        %p238 = scmp.lt.s32.totalorder %s20, 0
        %s239 = scalar_select %p238, %s20, 0
        %s240 = sadd.s32 %s239, %s237
        %s241 = smul.addr %s235, 4
        %s242 = sadd.s32 %s240, %s241
        %s243 = smul.addr %s242, 8
        %s244 = scalar_lea.vmem %s2, %s243
      $region28: #{transformer_forward.51} parent=15 // pred_fallthru
        _
      // Predicated region
      $region29: #{transformer_forward.51} parent=15 // pred_check
        %p245 = pneg %p148
      $region30: #{transformer_forward.51} parent=15 // pred_check_branch
        %247 = sbr.rel (%p245) target = $region32
      $region31: #{transformer_forward.51} parent=15 // pred_region
        %p248 = scmp.lt.s32.totalorder %s17, 1
        %s249 = scalar_select %p248, %s17, 1
        %p250 = scmp.lt.s32.totalorder %s20, 0
        %s251 = scalar_select %p250, %s20, 0
        %s252 = sadd.s32 %s251, %s249
        %s253 = scalar_lea.vmem %s3, %s252
      $region32: #{transformer_forward.51} parent=15 // pred_fallthru
        _
    $region16: #{transformer_forward.51} parent=5 // pred_fallthru
      _
    %p254 = scmp.le.s32.totalorder 1, %s10
    %p255 = scmp.lt.s32.totalorder %s10, 9
    %p256 = pnand %p254, %p255
    %p257 = pneg %p256
    // Predicated region
    $region33: #{transformer_forward.51} parent=5 // pred_check
      _
    $region34: #{transformer_forward.51} parent=5 // pred_check_branch
      %259 = sbr.rel (%p256) target = $region36
    $region35: #{transformer_forward.51} parent=5 // pred_region
      %s260 = ssub.s32 %s10, 1
      %p261 = scmp.lt.s32.totalorder %s21, 1
      %s262 = scalar_select %p261, %s21, 1
      %p263 = scmp.lt.s32.totalorder %s22, 3
      %s264 = scalar_select %p263, %s22, 3
      %p265 = scmp.lt.s32.totalorder %s23, 0
      %s266 = scalar_select %p265, %s23, 0
      %s267 = sadd.s32 %s266, %s264
      %s268 = smul.addr %s262, 4
      %s269 = sadd.s32 %s267, %s268
      %s270 = smul.addr %s269, 8
      %s271 = scalar_lea.vmem %s0, %s270
      %p272 = pneg %p66
      %p273 = pneg %p63
      %p274 = scmp.lt.s32.totalorder %s21, 1
      %s275 = scalar_select %p274, %s21, 1
      %p276 = scmp.lt.s32.totalorder %s22, 3
      %s277 = scalar_select %p276, %s22, 3
      %p278 = scmp.lt.s32.totalorder %s24, 0
      %s279 = scalar_select %p278, %s24, 0
      %s280 = sadd.s32 %s279, %s277
      %s281 = smul.addr %s275, 4
      %s282 = sadd.s32 %s280, %s281
      %s283 = smul.addr %s282, 8
      %s284 = scalar_lea.vmem %s1, %s283
      %p285 = pneg %p96
      %p286 = pneg %p93
      %p287 = scmp.lt.s32.totalorder %s21, 1
      %s288 = scalar_select %p287, %s21, 1
      %p289 = scmp.lt.s32.totalorder %s22, 3
      %s290 = scalar_select %p289, %s22, 3
      %p291 = scmp.lt.s32.totalorder %s24, 0
      %s292 = scalar_select %p291, %s24, 0
      %s293 = sadd.s32 %s292, %s290
      %s294 = smul.addr %s288, 4
      %s295 = sadd.s32 %s293, %s294
      %s296 = smul.addr %s295, 8
      %s297 = scalar_lea.vmem %s2, %s296
      %p298 = pneg %p126
      %p299 = pneg %p123
      %p300 = scmp.lt.s32.totalorder %s21, 1
      %s301 = scalar_select %p300, %s21, 1
      %p302 = scmp.lt.s32.totalorder %s24, 0
      %s303 = scalar_select %p302, %s24, 0
      %s304 = sadd.s32 %s303, %s301
      %s305 = scalar_lea.vmem %s3, %s304
      %p306 = pneg %p154
      %p307 = pneg %p151
      %p308 = pneg %p184
      %p309 = pneg %p181
      %p310 = scmp.lt.s32.totalorder %s21, 1
      %s311 = scalar_select %p310, %s21, 1
      %p312 = scmp.lt.s32.totalorder %s22, 3
      %s313 = scalar_select %p312, %s22, 3
      %p314 = scmp.lt.s32.totalorder %s23, 0
      %s315 = scalar_select %p314, %s23, 0
      %s316 = sadd.s32 %s315, %s313
      %s317 = smul.addr %s311, 4
      %s318 = sadd.s32 %s316, %s317
      %s319 = smul.addr %s318, 8
      %s320 = scalar_lea.vmem %s4, %s319
      %p321 = scmp.lt.s32.totalorder %s21, 1
      %s322 = scalar_select %p321, %s21, 1
      %p323 = scmp.lt.s32.totalorder %s22, 3
      %s324 = scalar_select %p323, %s22, 3
      %p325 = scmp.lt.s32.totalorder %s23, 0
      %s326 = scalar_select %p325, %s23, 0
      %s327 = sadd.s32 %s326, %s324
      %s328 = smul.addr %s322, 4
      %s329 = sadd.s32 %s327, %s328
      %s330 = smul.addr %s329, 8
      %s331 = scalar_lea.vmem %s0, %s330
      %p332 = scmp.lt.s32.totalorder %s21, 1
      %s333 = scalar_select %p332, %s21, 1
      %p334 = scmp.lt.s32.totalorder %s22, 3
      %s335 = scalar_select %p334, %s22, 3
      %p336 = scmp.lt.s32.totalorder %s24, 0
      %s337 = scalar_select %p336, %s24, 0
      %s338 = sadd.s32 %s337, %s335
      %s339 = smul.addr %s333, 4
      %s340 = sadd.s32 %s338, %s339
      %s341 = smul.addr %s340, 8
      %s342 = scalar_lea.vmem %s1, %s341
      %p343 = scmp.lt.s32.totalorder %s21, 1
      %s344 = scalar_select %p343, %s21, 1
      %p345 = scmp.lt.s32.totalorder %s22, 3
      %s346 = scalar_select %p345, %s22, 3
      %p347 = scmp.lt.s32.totalorder %s24, 0
      %s348 = scalar_select %p347, %s24, 0
      %s349 = sadd.s32 %s348, %s346
      %s350 = smul.addr %s344, 4
      %s351 = sadd.s32 %s349, %s350
      %s352 = smul.addr %s351, 8
      %s353 = scalar_lea.vmem %s2, %s352
      %p354 = scmp.lt.s32.totalorder %s21, 1
      %s355 = scalar_select %p354, %s21, 1
      %p356 = scmp.lt.s32.totalorder %s24, 0
      %s357 = scalar_select %p356, %s24, 0
      %s358 = sadd.s32 %s357, %s355
      %s359 = scalar_lea.vmem %s3, %s358
      %p360 = scmp.lt.s32.totalorder %s21, 1
      %s361 = scalar_select %p360, %s21, 1
      %p362 = scmp.lt.s32.totalorder %s22, 3
      %s363 = scalar_select %p362, %s22, 3
      %p364 = scmp.lt.s32.totalorder %s23, 0
      %s365 = scalar_select %p364, %s23, 0
      %s366 = sadd.s32 %s365, %s363
      %s367 = smul.addr %s361, 4
      %s368 = sadd.s32 %s366, %s367
      %s369 = smul.addr %s368, 8
      %s370 = scalar_lea.vmem %s4, %s369
      %p372 = scmp.eq.s32.totalorder %s24, 0
      // Predicated region
      $region37: #{transformer_forward.51} parent=35 // pred_check
        %p373 = pneg %p372
      $region38: #{transformer_forward.51} parent=35 // pred_check_branch
        %375 = sbr.rel (%p373) target = $region40
      $region39: #{transformer_forward.51} parent=35 // pred_region
        %vm376 = vcmask 7168
        %377 = vst.msk [vmem:[#allocation2] sm:$0xff] %vm376, -inf
        %378 = vst.msk [vmem:[#allocation3] sm:$0xff] %vm376, 0.0
        %vm379 = vcmask 64512
        %380 = vst.msk [vmem:[#allocation4] sm:$0xff] %vm379, 0.0
      $region40: #{transformer_forward.51} parent=35 // pred_fallthru
        _
      %v381 = vld [vmem:[%s331] sm:$0xff]
      %v382 = vmul.f32 %v381, 0.35355338
      %v383 = vpack.c.bf16 %v382, %v382
      %v384 = vld [vmem:[%s342] sm:$0xff]
      %v385 = vpack.c.bf16 %v384, %v384
      %v386 = vld [vmem:[%s359] sm:$0x1]
      %v388 = vlaneseq
      %v389 = vshrl.u32 %v388, 7
      %v390 = vsub.s32 0, %v389
      %v391 = vrot.slane %v386, %v390
      %vm393 = vcmask 64512
      %v395 = vsel %vm393, %v383, 0
      %v398 = vsel %vm393, %v385, 0
      %400 = vmatprep.subr.bf16.mxu0 0
      %401 = vmatpush1.bf16.xpose.msra.mxu0 %v398
      %402 = vmatprep.subr.bf16.mxu0 0
      %403 = vmatpush1.bf16.xpose.msra.mxu0 0
      %404 = vmatprep.subr.bf16.mxu0 0
      %405 = vmatpush1.bf16.xpose.msra.mxu0 0
      %406 = vmatprep.subr.bf16.mxu0 0
      %407 = vmatpush1.bf16.xpose.msra.mxu0 0
      %408 = vmatprep.subr.bf16.mxu0 0
      %409 = vmatpush1.bf16.xpose.msra.mxu0 0
      %410 = vmatprep.subr.bf16.mxu0 0
      %411 = vmatpush1.bf16.xpose.msra.mxu0 0
      %412 = vmatprep.subr.bf16.mxu0 0
      %413 = vmatpush1.bf16.xpose.msra.mxu0 0
      %414 = vmatprep.subr.bf16.mxu0 0
      %415 = vmatpush1.bf16.xpose.msra.mxu0 0
      %416 = vmatprep.subr.bf16.mxu0 0
      %417 = vmatpush1.bf16.xpose.msra.mxu0 0
      %418 = vmatprep.subr.bf16.mxu0 0
      %419 = vmatpush1.bf16.xpose.msra.mxu0 0
      %420 = vmatprep.subr.bf16.mxu0 0
      %421 = vmatpush1.bf16.xpose.msra.mxu0 0
      %422 = vmatprep.subr.bf16.mxu0 0
      %423 = vmatpush1.bf16.xpose.msra.mxu0 0
      %424 = vmatprep.subr.bf16.mxu0 0
      %425 = vmatpush1.bf16.xpose.msra.mxu0 0
      %426 = vmatprep.subr.bf16.mxu0 0
      %427 = vmatpush1.bf16.xpose.msra.mxu0 0
      %428 = vmatprep.subr.bf16.mxu0 0
      %429 = vmatpush1.bf16.xpose.msra.mxu0 0
      %430 = vmatprep.subr.bf16.mxu0 0
      %431 = vmatpush1.bf16.xpose.msra.mxu0 0
      %432 = vmatprep.mubr.bf16.mxu0 0
      %433 = vmatmul.mubr.bf16.gmra.mrb[0].mxu0 %v395
      %v434 = vpop.f32.mrb[0].mxu0
      %v435 = vadd.f32 %v391, %v434
      %v436 = vpop.f32.mrb[0].mxu0
      %v437 = vpop.f32.mrb[0].mxu0
      %v438 = vpop.f32.mrb[0].mxu0
      %439 = vdwg.mxu0
      %s440 = smul.u32 %s23, 8
      %v441 = vlaneseq
      %v442 = vshrl.u32 %v441, 7
      %v443 = vstv %s440
      %v444 = vadd.s32 %v443, %v442
      %s445 = smul.u32 %s24, 8
      %v446 = vlaneseq
      %v447 = vand.u32 %v446, 127
      %v448 = vstv %s445
      %v449 = vadd.s32 %v448, %v447
      %vm450 = vcmp.gt.s32.totalorder %v449, %v444
      %v451 = vsel %vm450, -1e+30, %v435
      %v452 = vld [vmem:[#allocation2] sm:$0xff]
      %v453 = vsel %vm393, %v451, -inf
      %454 = vmax.xlane.f32.xlu0 %v453
      %v455 = vpop.xlane.xlu0 %454
      %v456 = vmax.f32 %v452, %v455
      %v457 = vsub.f32 %v452, %v456
      %v458 = vmul.f32 %v457, 1.442695
      %v459 = vpow.pop %v458
      %461 = vset.pattern.permute.xlu0 0
      %462 = vperm.xlu0 %461, %v456
      %v463 = vpop.permute.xlu0 %462
      %v465 = vsub.f32 %v451, %v463
      %v466 = vmul.f32 %v465, 1.442695
      %v467 = vpow.pop %v466
      %v468 = vld [vmem:[#allocation3] sm:$0xff]
      %v469 = vmul.f32 %v459, %v468
      %v470 = vsel %vm393, %v467, 0.0
      %471 = vadd.xlane.f32.xlu0 %v470
      %v472 = vpop.xlane.xlu0 %471
      %v473 = vadd.f32 %v469, %v472
      %vm474 = vcmask 7168
      %475 = vst.msk [vmem:[#allocation3] sm:$0xff] %vm474, %v473
      %v476 = vld [vmem:[#allocation4] sm:$0xff]
      %478 = vset.pattern.permute.xlu0 0
      %479 = vperm.xlu0 %478, %v459
      %v480 = vpop.permute.xlu0 %479
      %v482 = vmul.f32 %v480, %v476
      %v483 = vpack.c.bf16 %v467, %v467
      %v484 = vld [vmem:[%s353] sm:$0xff]
      %v485 = vpack.c.bf16 %v484, %v484
      %v487 = vsel %vm393, %v483, 0
      %vm489 = vcmask 1043456
      %v491 = vsel %vm489, %v485, 0
      %493 = vmatprep.subr.bf16.mxu0 0
      %494 = vmatpush1.bf16.msra.mxu0 %v491
      %495 = vmatprep.subr.bf16.mxu0 0
      %496 = vmatpush1.bf16.msra.mxu0 0
      %497 = vmatprep.subr.bf16.mxu0 0
      %498 = vmatpush1.bf16.msra.mxu0 0
      %499 = vmatprep.subr.bf16.mxu0 0
      %500 = vmatpush1.bf16.msra.mxu0 0
      %501 = vmatprep.subr.bf16.mxu0 0
      %502 = vmatpush1.bf16.msra.mxu0 0
      %503 = vmatprep.subr.bf16.mxu0 0
      %504 = vmatpush1.bf16.msra.mxu0 0
      %505 = vmatprep.subr.bf16.mxu0 0
      %506 = vmatpush1.bf16.msra.mxu0 0
      %507 = vmatprep.subr.bf16.mxu0 0
      %508 = vmatpush1.bf16.msra.mxu0 0
      %509 = vmatprep.subr.bf16.mxu0 0
      %510 = vmatpush1.bf16.msra.mxu0 0
      %511 = vmatprep.subr.bf16.mxu0 0
      %512 = vmatpush1.bf16.msra.mxu0 0
      %513 = vmatprep.subr.bf16.mxu0 0
      %514 = vmatpush1.bf16.msra.mxu0 0
      %515 = vmatprep.subr.bf16.mxu0 0
      %516 = vmatpush1.bf16.msra.mxu0 0
      %517 = vmatprep.subr.bf16.mxu0 0
      %518 = vmatpush1.bf16.msra.mxu0 0
      %519 = vmatprep.subr.bf16.mxu0 0
      %520 = vmatpush1.bf16.msra.mxu0 0
      %521 = vmatprep.subr.bf16.mxu0 0
      %522 = vmatpush1.bf16.msra.mxu0 0
      %523 = vmatprep.subr.bf16.mxu0 0
      %524 = vmatpush1.bf16.msra.mxu0 0
      %525 = vmatprep.mubr.bf16.mxu0 0
      %526 = vmatmul.mubr.bf16.gmra.mrb[0].mxu0 %v487
      %v527 = vpop.f32.mrb[0].mxu0
      %v528 = vadd.f32 0.0, %v527
      %v529 = vpop.f32.mrb[0].mxu0
      %v530 = vpop.f32.mrb[0].mxu0
      %v531 = vpop.f32.mrb[0].mxu0
      %532 = vdwg.mxu0
      %v533 = vadd.f32 %v482, %v528
      %534 = vst.msk [vmem:[#allocation4] sm:$0xff] %vm393, %v533
      %535 = vst.msk [vmem:[#allocation2] sm:$0xff] %vm474, %v456
      // Predicated region
      $region41: #{transformer_forward.51} parent=35 // pred_check
        %p536 = pneg %p372
      $region42: #{transformer_forward.51} parent=35 // pred_check_branch
        %538 = sbr.rel (%p536) target = $region44
      $region43: #{transformer_forward.51} parent=35 // pred_region
        %v539 = vld [vmem:[#allocation4] sm:$0xff]
        %v540 = vld [vmem:[#allocation3] sm:$0xff]
        %v541 = vrcp.pop %v540
        %543 = vset.pattern.permute.xlu0 0
        %544 = vperm.xlu0 %543, %v541
        %v545 = vpop.permute.xlu0 %544
        %v547 = vmul.f32 %v539, %v545
        %548 = vst.msk [vmem:[%s370] sm:$0xff] %vm393, %v547
      $region44: #{transformer_forward.51} parent=35 // pred_fallthru
        _
      %p549 = scmp.lt.s32.totalorder %s21, 1
      %s550 = scalar_select %p549, %s21, 1
      %p551 = scmp.lt.s32.totalorder %s22, 3
      %s552 = scalar_select %p551, %s22, 3
      %p553 = scmp.lt.s32.totalorder %s23, 0
      %s554 = scalar_select %p553, %s23, 0
      %s555 = sadd.s32 %s554, %s552
      %s556 = smul.addr %s550, 4
      %s557 = sadd.s32 %s555, %s556
      %s558 = smul.addr %s557, 8
      %s559 = scalar_lea.vmem %s4, %s558
      // Predicated region
      $region45: #{transformer_forward.51} parent=35 // pred_check
        %p560 = pneg %p181
      $region46: #{transformer_forward.51} parent=35 // pred_check_branch
        %562 = sbr.rel (%p560) target = $region48
      $region47: #{transformer_forward.51} parent=35 // pred_region
        _
      $region48: #{transformer_forward.51} parent=35 // pred_fallthru
        _
    $region36: #{transformer_forward.51} parent=5 // pred_fallthru
      _
    %p563 = scmp.le.s32.totalorder 2, %s10
    // Predicated region
    $region49: #{transformer_forward.51} parent=5 // pred_check
      %p564 = pneg %p563
    $region50: #{transformer_forward.51} parent=5 // pred_check_branch
      %566 = sbr.rel (%p564) target = $region52
    $region51: #{transformer_forward.51} parent=5 // pred_region
      %s567 = ssub.s32 %s10, 2
      // Predicated region
      $region53: #{transformer_forward.51} parent=51 // pred_check
        %p568 = pneg %p187
      $region54: #{transformer_forward.51} parent=51 // pred_check_branch
        %570 = sbr.rel (%p568) target = $region56
      $region55: #{transformer_forward.51} parent=51 // pred_region
        %p571 = scmp.lt.s32.totalorder %s25, 1
        %s572 = scalar_select %p571, %s25, 1
        %p573 = scmp.lt.s32.totalorder %s26, 3
        %s574 = scalar_select %p573, %s26, 3
        %p575 = scmp.lt.s32.totalorder %s27, 0
        %s576 = scalar_select %p575, %s27, 0
        %s577 = sadd.s32 %s576, %s574
        %s578 = smul.addr %s572, 4
        %s579 = sadd.s32 %s577, %s578
        %s580 = smul.addr %s579, 8
        %s581 = scalar_lea.vmem %s4, %s580
      $region56: #{transformer_forward.51} parent=51 // pred_fallthru
        _
    $region52: #{transformer_forward.51} parent=5 // pred_fallthru
      _
  $region6: #{transformer_forward.51} parent=0 // loop_footer
    %s14 = sadd.s32 1, %s10
  $region7: #{transformer_forward.51} parent=0 // loop_footer_branch
    %9 = sbr.rel target = $region3
  $region8: #{transformer_forward.51} parent=0 // loop_exit
    _

// kernel: transformer_forward.53
$region0: #{transformer_forward.53}
  #allocation0 [shape = 'u32[]', space=smem, size = 0x4, offset = 0x4, fixed_abs, tag = 'smem constant byte address 0x4 - core index']
  #allocation1 [shape = 'u32[144,128]{1,0:T(1,128)}', space=vmem, size = 0x12000, scoped, tag = 'internal scratch']
  %s0 = inlined_call_operand.vmem [shape: f32[16,32], index: 0, kind: input, shape index: {}]
  %s1 = inlined_call_operand.vmem [shape: f32[16,32], index: 1, kind: input, shape index: {}]
  %s2 = inlined_call_operand.vmem [shape: f32[1,32], index: 2, kind: input, shape index: {}]
  %s3 = inlined_call_operand.vmem [shape: f32[1,32], index: 3, kind: input, shape index: {}]
  %s4 = inlined_call_operand.vmem [shape: f32[16,32], index: 4, kind: output, shape index: {}]
  %s5 = sld [smem:[#allocation0]]
  $region26: #{transformer_forward.53} parent=0
    _
  %s7 = ssub.s32 1, %s5
  %s8 = scalar_select 0, %s7, %s5
  // Predicated region
  $region2: #{transformer_forward.53} parent=0 // pred_check
    _
  $region3: #{transformer_forward.53} parent=0 // pred_check_branch
    %10 = sbr.rel (0) target = $region5
  $region4: #{transformer_forward.53} parent=0 // pred_region
    _
  $region5: #{transformer_forward.53} parent=0 // pred_fallthru
    _
  // Predicated region
  $region6: #{transformer_forward.53} parent=0 // pred_check
    _
  $region7: #{transformer_forward.53} parent=0 // pred_check_branch
    %12 = sbr.rel (0) target = $region9
  $region8: #{transformer_forward.53} parent=0 // pred_region
    _
  $region9: #{transformer_forward.53} parent=0 // pred_fallthru
    _
  // Predicated region
  $region10: #{transformer_forward.53} parent=0 // pred_check
    _
  $region11: #{transformer_forward.53} parent=0 // pred_check_branch
    %14 = sbr.rel (0) target = $region13
  $region12: #{transformer_forward.53} parent=0 // pred_region
    _
  $region13: #{transformer_forward.53} parent=0 // pred_fallthru
    _
  // Predicated region
  $region14: #{transformer_forward.53} parent=0 // pred_check
    _
  $region15: #{transformer_forward.53} parent=0 // pred_check_branch
    %16 = sbr.rel (0) target = $region17
  $region16: #{transformer_forward.53} parent=0 // pred_region
    _
  $region17: #{transformer_forward.53} parent=0 // pred_fallthru
    _
  %v17 = vld [vmem:[%s0] sm:$0xff]
  %v18 = vld [vmem:[%s0 + $0x8] sm:$0xff]
  %v19 = vld [vmem:[%s1] sm:$0xff]
  %v20 = vld [vmem:[%s1 + $0x8] sm:$0xff]
  %v21 = vadd.f32 %v17, %v19
  %v22 = vadd.f32 %v18, %v20
  %vm23 = vcmask 261120
  %v24 = vsel %vm23, %v21, 0.0
  %25 = vadd.xlane.f32.xlu0 %v24
  %v26 = vpop.xlane.xlu0 %25
  %v27 = vsel %vm23, %v22, 0.0
  %28 = vadd.xlane.f32.xlu0 %v27
  %v29 = vpop.xlane.xlu0 %28
  %v30 = vrcp.pop 32.0
  %v31 = vmul.f32 %v26, %v30
  %v32 = vmul.f32 %v29, %v30
  %v33 = vsub.f32 %v21, %v31
  %v34 = vsub.f32 %v22, %v32
  %v35 = vmul.f32 %v33, %v33
  %v36 = vmul.f32 %v34, %v34
  %v37 = vsel %vm23, %v35, 0.0
  %38 = vadd.xlane.f32.xlu0 %v37
  %v39 = vpop.xlane.xlu0 %38
  %v40 = vsel %vm23, %v36, 0.0
  %41 = vadd.xlane.f32.xlu0 %v40
  %v42 = vpop.xlane.xlu0 %41
  %v43 = vmul.f32 %v39, %v30
  %v44 = vmul.f32 %v42, %v30
  %v45 = vadd.f32 %v43, 1e-05
  %v46 = vadd.f32 %v44, 1e-05
  %v47 = vrsqrt.pop %v45
  %v48 = vrsqrt.pop %v46
  %v49 = vmul.f32 %v33, %v47
  %v50 = vmul.f32 %v34, %v48
  %v51 = vld [vmem:[%s2] sm:$0x1]
  %v53 = vlaneseq
  %v54 = vshrl.u32 %v53, 7
  %v55 = vsub.s32 0, %v54
  %v56 = vrot.slane %v51, %v55
  %v58 = vmul.f32 %v49, %v56
  %v59 = vmul.f32 %v50, %v56
  %v60 = vld [vmem:[%s3] sm:$0x1]
  %v62 = vlaneseq
  %v63 = vshrl.u32 %v62, 7
  %v64 = vsub.s32 0, %v63
  %v65 = vrot.slane %v60, %v64
  %v67 = vadd.f32 %v58, %v65
  %v68 = vadd.f32 %v59, %v65
  %69 = vst.msk [vmem:[%s4] sm:$0xff] %vm23, %v67
  %70 = vst.msk [vmem:[%s4 + $0x8] sm:$0xff] %vm23, %v68
  // Predicated region
  $region18: #{transformer_forward.53} parent=0 // pred_check
    _
  $region19: #{transformer_forward.53} parent=0 // pred_check_branch
    %72 = sbr.rel (0) target = $region21
  $region20: #{transformer_forward.53} parent=0 // pred_region
    _
  $region21: #{transformer_forward.53} parent=0 // pred_fallthru
    _
  // Predicated region
  $region22: #{transformer_forward.53} parent=0 // pred_check
    _
  $region23: #{transformer_forward.53} parent=0 // pred_check_branch
    %74 = sbr.rel (0) target = $region25
  $region24: #{transformer_forward.53} parent=0 // pred_region
    _
  $region25: #{transformer_forward.53} parent=0 // pred_fallthru
    _

// kernel: transformer_forward.52
$region0: #{transformer_forward.52}
  #allocation0 [shape = 'u32[]', space=smem, size = 0x4, offset = 0x4, fixed_abs, tag = 'smem constant byte address 0x4 - core index']
  #allocation1 [shape = 'u32[144,128]{1,0:T(1,128)}', space=vmem, size = 0x12000, scoped, tag = 'internal scratch']
  %s0 = inlined_call_operand.vmem [shape: f32[16,32], index: 0, kind: input, shape index: {}]
  %s1 = inlined_call_operand.vmem [shape: bf16[32,32], index: 1, kind: input, shape index: {}]
  %s2 = inlined_call_operand.vmem [shape: f32[1,32], index: 2, kind: input, shape index: {}]
  %s3 = inlined_call_operand.vmem [shape: f32[16,32], index: 3, kind: output, shape index: {}]
  %s4 = sld [smem:[#allocation0]]
  $region22: #{transformer_forward.52} parent=0
    _
  %s6 = ssub.s32 1, %s4
  %s7 = scalar_select 0, %s6, %s4
  // Predicated region
  $region2: #{transformer_forward.52} parent=0 // pred_check
    _
  $region3: #{transformer_forward.52} parent=0 // pred_check_branch
    %9 = sbr.rel (0) target = $region5
  $region4: #{transformer_forward.52} parent=0 // pred_region
    _
  $region5: #{transformer_forward.52} parent=0 // pred_fallthru
    _
  // Predicated region
  $region6: #{transformer_forward.52} parent=0 // pred_check
    _
  $region7: #{transformer_forward.52} parent=0 // pred_check_branch
    %11 = sbr.rel (0) target = $region9
  $region8: #{transformer_forward.52} parent=0 // pred_region
    _
  $region9: #{transformer_forward.52} parent=0 // pred_fallthru
    _
  // Predicated region
  $region10: #{transformer_forward.52} parent=0 // pred_check
    _
  $region11: #{transformer_forward.52} parent=0 // pred_check_branch
    %13 = sbr.rel (0) target = $region13
  $region12: #{transformer_forward.52} parent=0 // pred_region
    _
  $region13: #{transformer_forward.52} parent=0 // pred_fallthru
    _
  %v15 = vld [vmem:[%s0] sm:$0xff]
  %v16 = vld [vmem:[%s0 + $0x8] sm:$0xff]
  %v17 = vpack.c.bf16 %v16, %v15
  %v18 = vld [vmem:[%s1] sm:$0xf]
  %v19 = vld [vmem:[%s1 + $0x4] sm:$0xf]
  %v20 = vld [vmem:[%s1 + $0x8] sm:$0xf]
  %v21 = vld [vmem:[%s1 + $0xc] sm:$0xf]
  %v22 = vld [vmem:[%s2] sm:$0x1]
  %v24 = vlaneseq
  %v25 = vshrl.u32 %v24, 7
  %v26 = vsub.s32 0, %v25
  %v27 = vrot.slane %v22, %v26
  %v33 = vunpack.c.l.b16 %v18
  %v34 = vunpack.c.l.b16 %v19
  %v35 = vunpack.c.l.b16 %v20
  %v36 = vunpack.c.l.b16 %v21
  %v37 = vpack.c.b16 %v34, %v33
  %v38 = vpack.c.b16 %v36, %v35
  %vm41 = vcmask 261120
  %v43 = vsel %vm41, %v17, 0
  %45 = vmatprep.subr.bf16.mxu0 0
  %46 = vmatpush1.bf16.msra.mxu0 %v37
  %47 = vmatprep.subr.bf16.mxu0 0
  %48 = vmatpush1.bf16.msra.mxu0 %v38
  %49 = vmatprep.subr.bf16.mxu0 0
  %50 = vmatpush1.bf16.msra.mxu0 0
  %51 = vmatprep.subr.bf16.mxu0 0
  %52 = vmatpush1.bf16.msra.mxu0 0
  %53 = vmatprep.subr.bf16.mxu0 0
  %54 = vmatpush1.bf16.msra.mxu0 0
  %55 = vmatprep.subr.bf16.mxu0 0
  %56 = vmatpush1.bf16.msra.mxu0 0
  %57 = vmatprep.subr.bf16.mxu0 0
  %58 = vmatpush1.bf16.msra.mxu0 0
  %59 = vmatprep.subr.bf16.mxu0 0
  %60 = vmatpush1.bf16.msra.mxu0 0
  %61 = vmatprep.subr.bf16.mxu0 0
  %62 = vmatpush1.bf16.msra.mxu0 0
  %63 = vmatprep.subr.bf16.mxu0 0
  %64 = vmatpush1.bf16.msra.mxu0 0
  %65 = vmatprep.subr.bf16.mxu0 0
  %66 = vmatpush1.bf16.msra.mxu0 0
  %67 = vmatprep.subr.bf16.mxu0 0
  %68 = vmatpush1.bf16.msra.mxu0 0
  %69 = vmatprep.subr.bf16.mxu0 0
  %70 = vmatpush1.bf16.msra.mxu0 0
  %71 = vmatprep.subr.bf16.mxu0 0
  %72 = vmatpush1.bf16.msra.mxu0 0
  %73 = vmatprep.subr.bf16.mxu0 0
  %74 = vmatpush1.bf16.msra.mxu0 0
  %75 = vmatprep.subr.bf16.mxu0 0
  %76 = vmatpush1.bf16.msra.mxu0 0
  %77 = vmatprep.mubr.bf16.mxu0 0
  %78 = vmatmul.mubr.bf16.gmra.mrb[0].mxu0 %v43
  %v79 = vpop.f32.mrb[0].mxu0
  %v80 = vadd.f32 %v27, %v79
  %v81 = vpop.f32.mrb[0].mxu0
  %v82 = vpop.f32.mrb[0].mxu0
  %v83 = vadd.f32 %v27, %v82
  %v84 = vpop.f32.mrb[0].mxu0
  %85 = vdwg.mxu0
  %86 = vst.msk [vmem:[%s3] sm:$0xff] %vm41, %v80
  %87 = vst.msk [vmem:[%s3 + $0x8] sm:$0xff] %vm41, %v83
  // Predicated region
  $region14: #{transformer_forward.52} parent=0 // pred_check
    _
  $region15: #{transformer_forward.52} parent=0 // pred_check_branch
    %89 = sbr.rel (0) target = $region17
  $region16: #{transformer_forward.52} parent=0 // pred_region
    _
  $region17: #{transformer_forward.52} parent=0 // pred_fallthru
    _
  // Predicated region
  $region18: #{transformer_forward.52} parent=0 // pred_check
    _
  $region19: #{transformer_forward.52} parent=0 // pred_check_branch
    %91 = sbr.rel (0) target = $region21
  $region20: #{transformer_forward.52} parent=0 // pred_region
    _
  $region21: #{transformer_forward.52} parent=0 // pred_fallthru
    _

// kernel: transformer_forward.55
$region0: #{transformer_forward.55}
  #allocation0 [shape = 'u32[]', space=smem, size = 0x4, offset = 0x4, fixed_abs, tag = 'smem constant byte address 0x4 - core index']
  #allocation1 [shape = 'u32[144,128]{1,0:T(1,128)}', space=vmem, size = 0x12000, scoped, tag = 'internal scratch']
  %s0 = inlined_call_operand.vmem [shape: f32[16,32], index: 0, kind: input, shape index: {}]
  %s1 = inlined_call_operand.vmem [shape: bf16[32,64], index: 1, kind: input, shape index: {}]
  %s2 = inlined_call_operand.vmem [shape: f32[1,64], index: 2, kind: input, shape index: {}]
  %s3 = inlined_call_operand.vmem [shape: f32[16,64], index: 3, kind: output, shape index: {}]
  %s4 = sld [smem:[#allocation0]]
  $region22: #{transformer_forward.55} parent=0
    _
  %s6 = ssub.s32 1, %s4
  %s7 = scalar_select 0, %s6, %s4
  // Predicated region
  $region2: #{transformer_forward.55} parent=0 // pred_check
    _
  $region3: #{transformer_forward.55} parent=0 // pred_check_branch
    %9 = sbr.rel (0) target = $region5
  $region4: #{transformer_forward.55} parent=0 // pred_region
    _
  $region5: #{transformer_forward.55} parent=0 // pred_fallthru
    _
  // Predicated region
  $region6: #{transformer_forward.55} parent=0 // pred_check
    _
  $region7: #{transformer_forward.55} parent=0 // pred_check_branch
    %11 = sbr.rel (0) target = $region9
  $region8: #{transformer_forward.55} parent=0 // pred_region
    _
  $region9: #{transformer_forward.55} parent=0 // pred_fallthru
    _
  // Predicated region
  $region10: #{transformer_forward.55} parent=0 // pred_check
    _
  $region11: #{transformer_forward.55} parent=0 // pred_check_branch
    %13 = sbr.rel (0) target = $region13
  $region12: #{transformer_forward.55} parent=0 // pred_region
    _
  $region13: #{transformer_forward.55} parent=0 // pred_fallthru
    _
  %v15 = vld [vmem:[%s0] sm:$0xff]
  %v16 = vld [vmem:[%s0 + $0x8] sm:$0xff]
  %v17 = vpack.c.bf16 %v16, %v15
  %v18 = vld [vmem:[%s1] sm:$0xf]
  %v19 = vld [vmem:[%s1 + $0x4] sm:$0xf]
  %v20 = vld [vmem:[%s1 + $0x8] sm:$0xf]
  %v21 = vld [vmem:[%s1 + $0xc] sm:$0xf]
  %v22 = vld [vmem:[%s2] sm:$0x1]
  %v24 = vlaneseq
  %v25 = vshrl.u32 %v24, 7
  %v26 = vsub.s32 0, %v25
  %v27 = vrot.slane %v22, %v26
  %v33 = vunpack.c.l.b16 %v18
  %v34 = vunpack.c.l.b16 %v19
  %v35 = vunpack.c.l.b16 %v20
  %v36 = vunpack.c.l.b16 %v21
  %v37 = vpack.c.b16 %v34, %v33
  %v38 = vpack.c.b16 %v36, %v35
  %vm41 = vcmask 261120
  %v43 = vsel %vm41, %v17, 0
  %45 = vmatprep.subr.bf16.mxu0 0
  %46 = vmatpush1.bf16.msra.mxu0 %v37
  %47 = vmatprep.subr.bf16.mxu0 0
  %48 = vmatpush1.bf16.msra.mxu0 %v38
  %49 = vmatprep.subr.bf16.mxu0 0
  %50 = vmatpush1.bf16.msra.mxu0 0
  %51 = vmatprep.subr.bf16.mxu0 0
  %52 = vmatpush1.bf16.msra.mxu0 0
  %53 = vmatprep.subr.bf16.mxu0 0
  %54 = vmatpush1.bf16.msra.mxu0 0
  %55 = vmatprep.subr.bf16.mxu0 0
  %56 = vmatpush1.bf16.msra.mxu0 0
  %57 = vmatprep.subr.bf16.mxu0 0
  %58 = vmatpush1.bf16.msra.mxu0 0
  %59 = vmatprep.subr.bf16.mxu0 0
  %60 = vmatpush1.bf16.msra.mxu0 0
  %61 = vmatprep.subr.bf16.mxu0 0
  %62 = vmatpush1.bf16.msra.mxu0 0
  %63 = vmatprep.subr.bf16.mxu0 0
  %64 = vmatpush1.bf16.msra.mxu0 0
  %65 = vmatprep.subr.bf16.mxu0 0
  %66 = vmatpush1.bf16.msra.mxu0 0
  %67 = vmatprep.subr.bf16.mxu0 0
  %68 = vmatpush1.bf16.msra.mxu0 0
  %69 = vmatprep.subr.bf16.mxu0 0
  %70 = vmatpush1.bf16.msra.mxu0 0
  %71 = vmatprep.subr.bf16.mxu0 0
  %72 = vmatpush1.bf16.msra.mxu0 0
  %73 = vmatprep.subr.bf16.mxu0 0
  %74 = vmatpush1.bf16.msra.mxu0 0
  %75 = vmatprep.subr.bf16.mxu0 0
  %76 = vmatpush1.bf16.msra.mxu0 0
  %77 = vmatprep.mubr.bf16.mxu0 0
  %78 = vmatmul.mubr.bf16.gmra.mrb[0].mxu0 %v43
  %v79 = vpop.f32.mrb[0].mxu0
  %v80 = vadd.f32 %v27, %v79
  %v81 = vpop.f32.mrb[0].mxu0
  %v82 = vpop.f32.mrb[0].mxu0
  %v83 = vadd.f32 %v27, %v82
  %v84 = vpop.f32.mrb[0].mxu0
  %85 = vdwg.mxu0
  %vm86 = vcmask 523264
  %87 = vst.msk [vmem:[%s3] sm:$0xff] %vm86, %v80
  %88 = vst.msk [vmem:[%s3 + $0x8] sm:$0xff] %vm86, %v83
  // Predicated region
  $region14: #{transformer_forward.55} parent=0 // pred_check
    _
  $region15: #{transformer_forward.55} parent=0 // pred_check_branch
    %90 = sbr.rel (0) target = $region17
  $region16: #{transformer_forward.55} parent=0 // pred_region
    _
  $region17: #{transformer_forward.55} parent=0 // pred_fallthru
    _
  // Predicated region
  $region18: #{transformer_forward.55} parent=0 // pred_check
    _
  $region19: #{transformer_forward.55} parent=0 // pred_check_branch
    %92 = sbr.rel (0) target = $region21
  $region20: #{transformer_forward.55} parent=0 // pred_region
    _
  $region21: #{transformer_forward.55} parent=0 // pred_fallthru
    _

// kernel: transformer_forward.49
$region0: #{transformer_forward.49}
  #allocation0 [shape = 'u32[]', space=smem, size = 0x4, offset = 0x4, fixed_abs, tag = 'smem constant byte address 0x4 - core index']
  #allocation1 [shape = 'u32[144,128]{1,0:T(1,128)}', space=vmem, size = 0x12000, scoped, tag = 'internal scratch']
  %s0 = inlined_call_operand.vmem [shape: f32[16,32], index: 0, kind: input, shape index: {}]
  %s1 = inlined_call_operand.vmem [shape: f32[1,32], index: 1, kind: input, shape index: {}]
  %s2 = inlined_call_operand.vmem [shape: f32[1,32], index: 2, kind: input, shape index: {}]
  %s3 = inlined_call_operand.vmem [shape: f32[16,32], index: 3, kind: output, shape index: {}]
  %s4 = sld [smem:[#allocation0]]
  $region22: #{transformer_forward.49} parent=0
    _
  %s6 = ssub.s32 1, %s4
  %s7 = scalar_select 0, %s6, %s4
  // Predicated region
  $region2: #{transformer_forward.49} parent=0 // pred_check
    _
  $region3: #{transformer_forward.49} parent=0 // pred_check_branch
    %9 = sbr.rel (0) target = $region5
  $region4: #{transformer_forward.49} parent=0 // pred_region
    _
  $region5: #{transformer_forward.49} parent=0 // pred_fallthru
    _
  // Predicated region
  $region6: #{transformer_forward.49} parent=0 // pred_check
    _
  $region7: #{transformer_forward.49} parent=0 // pred_check_branch
    %11 = sbr.rel (0) target = $region9
  $region8: #{transformer_forward.49} parent=0 // pred_region
    _
  $region9: #{transformer_forward.49} parent=0 // pred_fallthru
    _
  // Predicated region
  $region10: #{transformer_forward.49} parent=0 // pred_check
    _
  $region11: #{transformer_forward.49} parent=0 // pred_check_branch
    %13 = sbr.rel (0) target = $region13
  $region12: #{transformer_forward.49} parent=0 // pred_region
    _
  $region13: #{transformer_forward.49} parent=0 // pred_fallthru
    _
  %v14 = vld [vmem:[%s0] sm:$0xff]
  %v15 = vld [vmem:[%s0 + $0x8] sm:$0xff]
  %vm16 = vcmask 261120
  %v17 = vsel %vm16, %v14, 0.0
  %18 = vadd.xlane.f32.xlu0 %v17
  %v19 = vpop.xlane.xlu0 %18
  %v20 = vsel %vm16, %v15, 0.0
  %21 = vadd.xlane.f32.xlu0 %v20
  %v22 = vpop.xlane.xlu0 %21
  %v23 = vrcp.pop 32.0
  %v24 = vmul.f32 %v19, %v23
  %v25 = vmul.f32 %v22, %v23
  %v26 = vsub.f32 %v14, %v24
  %v27 = vsub.f32 %v15, %v25
  %v28 = vmul.f32 %v26, %v26
  %v29 = vmul.f32 %v27, %v27
  %v30 = vsel %vm16, %v28, 0.0
  %31 = vadd.xlane.f32.xlu0 %v30
  %v32 = vpop.xlane.xlu0 %31
  %v33 = vsel %vm16, %v29, 0.0
  %34 = vadd.xlane.f32.xlu0 %v33
  %v35 = vpop.xlane.xlu0 %34
  %v36 = vmul.f32 %v32, %v23
  %v37 = vmul.f32 %v35, %v23
  %v38 = vadd.f32 %v36, 1e-05
  %v39 = vadd.f32 %v37, 1e-05
  %v40 = vrsqrt.pop %v38
  %v41 = vrsqrt.pop %v39
  %v42 = vmul.f32 %v26, %v40
  %v43 = vmul.f32 %v27, %v41
  %v44 = vld [vmem:[%s1] sm:$0x1]
  %v46 = vlaneseq
  %v47 = vshrl.u32 %v46, 7
  %v48 = vsub.s32 0, %v47
  %v49 = vrot.slane %v44, %v48
  %v51 = vmul.f32 %v42, %v49
  %v52 = vmul.f32 %v43, %v49
  %v53 = vld [vmem:[%s2] sm:$0x1]
  %v55 = vlaneseq
  %v56 = vshrl.u32 %v55, 7
  %v57 = vsub.s32 0, %v56
  %v58 = vrot.slane %v53, %v57
  %v60 = vadd.f32 %v51, %v58
  %v61 = vadd.f32 %v52, %v58
  %62 = vst.msk [vmem:[%s3] sm:$0xff] %vm16, %v60
  %63 = vst.msk [vmem:[%s3 + $0x8] sm:$0xff] %vm16, %v61
  // Predicated region
  $region14: #{transformer_forward.49} parent=0 // pred_check
    _
  $region15: #{transformer_forward.49} parent=0 // pred_check_branch
    %65 = sbr.rel (0) target = $region17
  $region16: #{transformer_forward.49} parent=0 // pred_region
    _
  $region17: #{transformer_forward.49} parent=0 // pred_fallthru
    _
  // Predicated region
  $region18: #{transformer_forward.49} parent=0 // pred_check
    _
  $region19: #{transformer_forward.49} parent=0 // pred_check_branch
    %67 = sbr.rel (0) target = $region21
  $region20: #{transformer_forward.49} parent=0 // pred_region
    _
  $region21: #{transformer_forward.49} parent=0 // pred_fallthru
    _

// kernel: transformer_forward.41
$region0: #{transformer_forward.41}
  #allocation0 [shape = 'u32[]', space=smem, size = 0x4, offset = 0x4, fixed_abs, tag = 'smem constant byte address 0x4 - core index']
  #allocation1 [shape = 'u32[144,128]{1,0:T(1,128)}', space=vmem, size = 0x12000, scoped, tag = 'internal scratch']
  %s0 = inlined_call_operand.vmem [shape: f32[16,32], index: 0, kind: input, shape index: {}]
  %s1 = inlined_call_operand.vmem [shape: bf16[32,64], index: 1, kind: input, shape index: {}]
  %s2 = inlined_call_operand.vmem [shape: f32[1,64], index: 2, kind: input, shape index: {}]
  %s3 = inlined_call_operand.vmem [shape: bf16[64,32], index: 3, kind: input, shape index: {}]
  %s4 = inlined_call_operand.vmem [shape: f32[1,32], index: 4, kind: input, shape index: {}]
  %s5 = inlined_call_operand.vmem [shape: f32[16,32], index: 5, kind: output, shape index: {}]
  %s6 = sld [smem:[#allocation0]]
  $region30: #{transformer_forward.41} parent=0
    _
  %s8 = ssub.s32 1, %s6
  %s9 = scalar_select 0, %s8, %s6
  // Predicated region
  $region2: #{transformer_forward.41} parent=0 // pred_check
    _
  $region3: #{transformer_forward.41} parent=0 // pred_check_branch
    %11 = sbr.rel (0) target = $region5
  $region4: #{transformer_forward.41} parent=0 // pred_region
    _
  $region5: #{transformer_forward.41} parent=0 // pred_fallthru
    _
  // Predicated region
  $region6: #{transformer_forward.41} parent=0 // pred_check
    _
  $region7: #{transformer_forward.41} parent=0 // pred_check_branch
    %13 = sbr.rel (0) target = $region9
  $region8: #{transformer_forward.41} parent=0 // pred_region
    _
  $region9: #{transformer_forward.41} parent=0 // pred_fallthru
    _
  // Predicated region
  $region10: #{transformer_forward.41} parent=0 // pred_check
    _
  $region11: #{transformer_forward.41} parent=0 // pred_check_branch
    %15 = sbr.rel (0) target = $region13
  $region12: #{transformer_forward.41} parent=0 // pred_region
    _
  $region13: #{transformer_forward.41} parent=0 // pred_fallthru
    _
  // Predicated region
  $region14: #{transformer_forward.41} parent=0 // pred_check
    _
  $region15: #{transformer_forward.41} parent=0 // pred_check_branch
    %17 = sbr.rel (0) target = $region17
  $region16: #{transformer_forward.41} parent=0 // pred_region
    _
  $region17: #{transformer_forward.41} parent=0 // pred_fallthru
    _
  // Predicated region
  $region18: #{transformer_forward.41} parent=0 // pred_check
    _
  $region19: #{transformer_forward.41} parent=0 // pred_check_branch
    %19 = sbr.rel (0) target = $region21
  $region20: #{transformer_forward.41} parent=0 // pred_region
    _
  $region21: #{transformer_forward.41} parent=0 // pred_fallthru
    _
  %v21 = vld [vmem:[%s0] sm:$0xff]
  %v22 = vld [vmem:[%s0 + $0x8] sm:$0xff]
  %v23 = vpack.c.bf16 %v22, %v21
  %v24 = vld [vmem:[%s1] sm:$0xf]
  %v25 = vld [vmem:[%s1 + $0x4] sm:$0xf]
  %v26 = vld [vmem:[%s1 + $0x8] sm:$0xf]
  %v27 = vld [vmem:[%s1 + $0xc] sm:$0xf]
  %v28 = vld [vmem:[%s2] sm:$0x1]
  %v30 = vlaneseq
  %v31 = vshrl.u32 %v30, 7
  %v32 = vsub.s32 0, %v31
  %v33 = vrot.slane %v28, %v32
  %v39 = vunpack.c.l.b16 %v24
  %v40 = vunpack.c.l.b16 %v25
  %v41 = vunpack.c.l.b16 %v26
  %v42 = vunpack.c.l.b16 %v27
  %v43 = vpack.c.b16 %v40, %v39
  %v44 = vpack.c.b16 %v42, %v41
  %vm47 = vcmask 261120
  %v49 = vsel %vm47, %v23, 0
  %51 = vmatprep.subr.bf16.mxu0 0
  %52 = vmatpush1.bf16.msra.mxu0 %v43
  %53 = vmatprep.subr.bf16.mxu0 0
  %54 = vmatpush1.bf16.msra.mxu0 %v44
  %55 = vmatprep.subr.bf16.mxu0 0
  %56 = vmatpush1.bf16.msra.mxu0 0
  %57 = vmatprep.subr.bf16.mxu0 0
  %58 = vmatpush1.bf16.msra.mxu0 0
  %59 = vmatprep.subr.bf16.mxu0 0
  %60 = vmatpush1.bf16.msra.mxu0 0
  %61 = vmatprep.subr.bf16.mxu0 0
  %62 = vmatpush1.bf16.msra.mxu0 0
  %63 = vmatprep.subr.bf16.mxu0 0
  %64 = vmatpush1.bf16.msra.mxu0 0
  %65 = vmatprep.subr.bf16.mxu0 0
  %66 = vmatpush1.bf16.msra.mxu0 0
  %67 = vmatprep.subr.bf16.mxu0 0
  %68 = vmatpush1.bf16.msra.mxu0 0
  %69 = vmatprep.subr.bf16.mxu0 0
  %70 = vmatpush1.bf16.msra.mxu0 0
  %71 = vmatprep.subr.bf16.mxu0 0
  %72 = vmatpush1.bf16.msra.mxu0 0
  %73 = vmatprep.subr.bf16.mxu0 0
  %74 = vmatpush1.bf16.msra.mxu0 0
  %75 = vmatprep.subr.bf16.mxu0 0
  %76 = vmatpush1.bf16.msra.mxu0 0
  %77 = vmatprep.subr.bf16.mxu0 0
  %78 = vmatpush1.bf16.msra.mxu0 0
  %79 = vmatprep.subr.bf16.mxu0 0
  %80 = vmatpush1.bf16.msra.mxu0 0
  %81 = vmatprep.subr.bf16.mxu0 0
  %82 = vmatpush1.bf16.msra.mxu0 0
  %83 = vmatprep.mubr.bf16.mxu0 0
  %84 = vmatmul.mubr.bf16.gmra.mrb[0].mxu0 %v49
  %v85 = vpop.f32.mrb[0].mxu0
  %v86 = vadd.f32 %v33, %v85
  %v87 = vpop.f32.mrb[0].mxu0
  %v88 = vpop.f32.mrb[0].mxu0
  %v89 = vadd.f32 %v33, %v88
  %v90 = vpop.f32.mrb[0].mxu0
  %91 = vdwg.mxu0
  %v92 = vmax.f32 %v86, 0.0
  %v93 = vmax.f32 %v89, 0.0
  %v94 = vpack.c.bf16 %v93, %v92
  %v95 = vld [vmem:[%s3] sm:$0xf]
  %v96 = vld [vmem:[%s3 + $0x4] sm:$0xf]
  %v97 = vld [vmem:[%s3 + $0x8] sm:$0xf]
  %v98 = vld [vmem:[%s3 + $0xc] sm:$0xf]
  %v99 = vld [vmem:[%s3 + $0x10] sm:$0xf]
  %v100 = vld [vmem:[%s3 + $0x14] sm:$0xf]
  %v101 = vld [vmem:[%s3 + $0x18] sm:$0xf]
  %v102 = vld [vmem:[%s3 + $0x1c] sm:$0xf]
  %v103 = vld [vmem:[%s4] sm:$0x1]
  %v105 = vlaneseq
  %v106 = vshrl.u32 %v105, 7
  %v107 = vsub.s32 0, %v106
  %v108 = vrot.slane %v103, %v107
  %v118 = vunpack.c.l.b16 %v95
  %v119 = vunpack.c.l.b16 %v96
  %v120 = vunpack.c.l.b16 %v97
  %v121 = vunpack.c.l.b16 %v98
  %v122 = vunpack.c.l.b16 %v99
  %v123 = vunpack.c.l.b16 %v100
  %v124 = vunpack.c.l.b16 %v101
  %v125 = vunpack.c.l.b16 %v102
  %v126 = vpack.c.b16 %v119, %v118
  %v127 = vpack.c.b16 %v121, %v120
  %v128 = vpack.c.b16 %v123, %v122
  %v129 = vpack.c.b16 %v125, %v124
  %vm134 = vcmask 523264
  %v136 = vsel %vm134, %v94, 0
  %138 = vmatprep.subr.bf16.mxu0 0
  %139 = vmatpush1.bf16.msra.mxu0 %v126
  %140 = vmatprep.subr.bf16.mxu0 0
  %141 = vmatpush1.bf16.msra.mxu0 %v127
  %142 = vmatprep.subr.bf16.mxu0 0
  %143 = vmatpush1.bf16.msra.mxu0 %v128
  %144 = vmatprep.subr.bf16.mxu0 0
  %145 = vmatpush1.bf16.msra.mxu0 %v129
  %146 = vmatprep.subr.bf16.mxu0 0
  %147 = vmatpush1.bf16.msra.mxu0 0
  %148 = vmatprep.subr.bf16.mxu0 0
  %149 = vmatpush1.bf16.msra.mxu0 0
  %150 = vmatprep.subr.bf16.mxu0 0
  %151 = vmatpush1.bf16.msra.mxu0 0
  %152 = vmatprep.subr.bf16.mxu0 0
  %153 = vmatpush1.bf16.msra.mxu0 0
  %154 = vmatprep.subr.bf16.mxu0 0
  %155 = vmatpush1.bf16.msra.mxu0 0
  %156 = vmatprep.subr.bf16.mxu0 0
  %157 = vmatpush1.bf16.msra.mxu0 0
  %158 = vmatprep.subr.bf16.mxu0 0
  %159 = vmatpush1.bf16.msra.mxu0 0
  %160 = vmatprep.subr.bf16.mxu0 0
  %161 = vmatpush1.bf16.msra.mxu0 0
  %162 = vmatprep.subr.bf16.mxu0 0
  %163 = vmatpush1.bf16.msra.mxu0 0
  %164 = vmatprep.subr.bf16.mxu0 0
  %165 = vmatpush1.bf16.msra.mxu0 0
  %166 = vmatprep.subr.bf16.mxu0 0
  %167 = vmatpush1.bf16.msra.mxu0 0
  %168 = vmatprep.subr.bf16.mxu0 0
  %169 = vmatpush1.bf16.msra.mxu0 0
  %170 = vmatprep.mubr.bf16.mxu0 0
  %171 = vmatmul.mubr.bf16.gmra.mrb[0].mxu0 %v136
  %v172 = vpop.f32.mrb[0].mxu0
  %v173 = vadd.f32 %v108, %v172
  %v174 = vpop.f32.mrb[0].mxu0
  %v175 = vpop.f32.mrb[0].mxu0
  %v176 = vadd.f32 %v108, %v175
  %v177 = vpop.f32.mrb[0].mxu0
  %178 = vdwg.mxu0
  %179 = vst.msk [vmem:[%s5] sm:$0xff] %vm47, %v173
  %180 = vst.msk [vmem:[%s5 + $0x8] sm:$0xff] %vm47, %v176
  // Predicated region
  $region22: #{transformer_forward.41} parent=0 // pred_check
    _
  $region23: #{transformer_forward.41} parent=0 // pred_check_branch
    %182 = sbr.rel (0) target = $region25
  $region24: #{transformer_forward.41} parent=0 // pred_region
    _
  $region25: #{transformer_forward.41} parent=0 // pred_fallthru
    _
  // Predicated region
  $region26: #{transformer_forward.41} parent=0 // pred_check
    _
  $region27: #{transformer_forward.41} parent=0 // pred_check_branch
    %184 = sbr.rel (0) target = $region29
  $region28: #{transformer_forward.41} parent=0 // pred_region
    _
  $region29: #{transformer_forward.41} parent=0 // pred_fallthru
    _

// kernel: transformer_forward.38
$region0: #{transformer_forward.38}
  #allocation0 [shape = 'u32[]', space=smem, size = 0x4, offset = 0x4, fixed_abs, tag = 'smem constant byte address 0x4 - core index']
  #allocation1 [shape = 'u32[144,128]{1,0:T(1,128)}', space=vmem, size = 0x12000, scoped, tag = 'internal scratch']
  #allocation2 [shape = 'f32[8,1]{1,0:T(8,128)}', space=vmem, size = 0x1000, scoped, tag = 'scratch operand']
  #allocation3 [shape = 'f32[8,1]{1,0:T(8,128)}', space=vmem, size = 0x1000, scoped, tag = 'scratch operand']
  #allocation4 [shape = 'f32[8,8]{1,0:T(8,128)}', space=vmem, size = 0x1000, scoped, tag = 'scratch operand']
  %s0 = inlined_call_operand.vmem [shape: f32[2,4,8,8], index: 0, kind: input, shape index: {}]
  %s1 = inlined_call_operand.vmem [shape: f32[2,4,8,8], index: 1, kind: input, shape index: {}]
  %s2 = inlined_call_operand.vmem [shape: f32[2,4,8,8], index: 2, kind: input, shape index: {}]
  %s3 = inlined_call_operand.vmem [shape: f32[2,1,8], index: 3, kind: input, shape index: {}]
  %s4 = inlined_call_operand.vmem [shape: f32[2,4,8,8], index: 4, kind: output, shape index: {}]
  %s5 = sld [smem:[#allocation0]]
  $region57: #{transformer_forward.38} parent=0
    _
  %s7 = ssub.s32 1, %s5
  %s8 = scalar_select 0, %s7, %s5
  loop: start=0, step=1, limit=10
  $region2: #{transformer_forward.38} parent=0 // loop_pre_header
    _
  $region3: #{transformer_forward.38} parent=0 // loop_header
    %s10 = sphi 0, %s14
    %p11 = scmp.ge.s32.totalorder %s10, 10
    %s17 = sphi 0, %s43
    %s18 = sphi 0, %s39
    %s19 = sphi 0, %s35
    %s20 = sphi 0, %s31
    %s21 = sphi 0, %s17
    %s22 = sphi 0, %s18
    %s23 = sphi 0, %s19
    %s24 = sphi 0, %s20
    %s25 = sphi 0, %s21
    %s26 = sphi 0, %s22
    %s27 = sphi 0, %s23
    %s28 = sphi 0, %s24
    %s50 = sphi 0, %s52
    %s53 = sphi 0, %s50
    %s54 = sphi 0, %s53
    %s70 = sphi 0, %s54
    %s80 = sphi 0, %s82
    %s83 = sphi 0, %s80
    %s84 = sphi 0, %s83
    %s100 = sphi 0, %s84
    %s110 = sphi 0, %s112
    %s113 = sphi 0, %s110
    %s114 = sphi 0, %s113
    %s130 = sphi 0, %s114
    %s138 = sphi 0, %s140
    %s141 = sphi 0, %s138
    %s142 = sphi 0, %s141
    %s158 = sphi 0, %s142
    %s168 = sphi 0, %s170
    %s171 = sphi 0, %s168
    %s172 = sphi 0, %s171
    %s188 = sphi 0, %s172
  $region4: #{transformer_forward.38} parent=0 // loop_header_branch
    %13 = sbr.rel (%p11) target = $region8
  $region5: #{transformer_forward.38} parent=0 // loop_body
    %s15 = ssub.s32 %s10, 1
    %s16 = ssub.s32 %s10, 2
    %s29 = sadd.s32 1, %s20
    %p30 = scmp.ge.s32.totalorder %s29, 1
    %s31 = scalar_select %p30, 0, %s29
    %s32 = sadd.s32 1, %s19
    %s33 = scalar_select %p30, %s32, %s19
    %p34 = scmp.ge.s32.totalorder %s33, 1
    %s35 = scalar_select %p34, 0, %s33
    %s36 = sadd.s32 1, %s18
    %s37 = scalar_select %p34, %s36, %s18
    %p38 = scmp.ge.s32.totalorder %s37, 4
    %s39 = scalar_select %p38, 0, %s37
    %s40 = sadd.s32 1, %s17
    %s41 = scalar_select %p38, %s40, %s17
    %p42 = scmp.ge.s32.totalorder %s41, 2
    %s43 = scalar_select %p42, 0, %s41
    %s44 = ssub.s32 %s17, %s43
    %s45 = ssub.s32 %s18, %s39
    %s46 = sor.u32 %s44, %s45
    %s47 = ssub.s32 %s19, %s35
    %s48 = sor.u32 %s46, %s47
    %p49 = scmp.eq.s32.totalorder %s48, 0
    %s51 = sadd.s32 %s50, 1
    %s52 = scalar_select %p49, %s50, %s51
    %p55 = pneg %p49
    %p56 = scmp.eq.s32.totalorder %s10, 7
    %p57 = por %p55, %p56
    %p58 = scmp.ne.s32.totalorder %s50, %s53
    %p59 = scmp.eq.s32.totalorder %s10, 0
    %p60 = por %p58, %p59
    %p61 = scmp.ne.s32.totalorder %s50, %s53
    %p62 = scmp.eq.s32.totalorder %s15, 7
    %p63 = por %p61, %p62
    %p64 = scmp.ne.s32.totalorder %s53, %s54
    %p65 = scmp.eq.s32.totalorder %s15, 0
    %p66 = por %p64, %p65
    %p67 = scmp.ne.s32.totalorder %s53, %s54
    %p68 = scmp.eq.s32.totalorder %s16, 7
    %p69 = por %p67, %p68
    %p71 = scmp.ne.s32.totalorder %s54, %s70
    %p72 = scmp.eq.s32.totalorder %s16, 0
    %p73 = por %p71, %p72
    %s74 = ssub.s32 %s17, %s43
    %s75 = ssub.s32 %s18, %s39
    %s76 = sor.u32 %s74, %s75
    %s77 = ssub.s32 %s20, %s31
    %s78 = sor.u32 %s76, %s77
    %p79 = scmp.eq.s32.totalorder %s78, 0
    %s81 = sadd.s32 %s80, 1
    %s82 = scalar_select %p79, %s80, %s81
    %p85 = pneg %p79
    %p86 = scmp.eq.s32.totalorder %s10, 7
    %p87 = por %p85, %p86
    %p88 = scmp.ne.s32.totalorder %s80, %s83
    %p89 = scmp.eq.s32.totalorder %s10, 0
    %p90 = por %p88, %p89
    %p91 = scmp.ne.s32.totalorder %s80, %s83
    %p92 = scmp.eq.s32.totalorder %s15, 7
    %p93 = por %p91, %p92
    %p94 = scmp.ne.s32.totalorder %s83, %s84
    %p95 = scmp.eq.s32.totalorder %s15, 0
    %p96 = por %p94, %p95
    %p97 = scmp.ne.s32.totalorder %s83, %s84
    %p98 = scmp.eq.s32.totalorder %s16, 7
    %p99 = por %p97, %p98
    %p101 = scmp.ne.s32.totalorder %s84, %s100
    %p102 = scmp.eq.s32.totalorder %s16, 0
    %p103 = por %p101, %p102
    %s104 = ssub.s32 %s17, %s43
    %s105 = ssub.s32 %s18, %s39
    %s106 = sor.u32 %s104, %s105
    %s107 = ssub.s32 %s20, %s31
    %s108 = sor.u32 %s106, %s107
    %p109 = scmp.eq.s32.totalorder %s108, 0
    %s111 = sadd.s32 %s110, 1
    %s112 = scalar_select %p109, %s110, %s111
    %p115 = pneg %p109
    %p116 = scmp.eq.s32.totalorder %s10, 7
    %p117 = por %p115, %p116
    %p118 = scmp.ne.s32.totalorder %s110, %s113
    %p119 = scmp.eq.s32.totalorder %s10, 0
    %p120 = por %p118, %p119
    %p121 = scmp.ne.s32.totalorder %s110, %s113
    %p122 = scmp.eq.s32.totalorder %s15, 7
    %p123 = por %p121, %p122
    %p124 = scmp.ne.s32.totalorder %s113, %s114
    %p125 = scmp.eq.s32.totalorder %s15, 0
    %p126 = por %p124, %p125
    %p127 = scmp.ne.s32.totalorder %s113, %s114
    %p128 = scmp.eq.s32.totalorder %s16, 7
    %p129 = por %p127, %p128
    %p131 = scmp.ne.s32.totalorder %s114, %s130
    %p132 = scmp.eq.s32.totalorder %s16, 0
    %p133 = por %p131, %p132
    %s134 = ssub.s32 %s17, %s43
    %s135 = ssub.s32 %s20, %s31
    %s136 = sor.u32 %s134, %s135
    %p137 = scmp.eq.s32.totalorder %s136, 0
    %s139 = sadd.s32 %s138, 1
    %s140 = scalar_select %p137, %s138, %s139
    %p143 = pneg %p137
    %p144 = scmp.eq.s32.totalorder %s10, 7
    %p145 = por %p143, %p144
    %p146 = scmp.ne.s32.totalorder %s138, %s141
    %p147 = scmp.eq.s32.totalorder %s10, 0
    %p148 = por %p146, %p147
    %p149 = scmp.ne.s32.totalorder %s138, %s141
    %p150 = scmp.eq.s32.totalorder %s15, 7
    %p151 = por %p149, %p150
    %p152 = scmp.ne.s32.totalorder %s141, %s142
    %p153 = scmp.eq.s32.totalorder %s15, 0
    %p154 = por %p152, %p153
    %p155 = scmp.ne.s32.totalorder %s141, %s142
    %p156 = scmp.eq.s32.totalorder %s16, 7
    %p157 = por %p155, %p156
    %p159 = scmp.ne.s32.totalorder %s142, %s158
    %p160 = scmp.eq.s32.totalorder %s16, 0
    %p161 = por %p159, %p160
    %s162 = ssub.s32 %s17, %s43
    %s163 = ssub.s32 %s18, %s39
    %s164 = sor.u32 %s162, %s163
    %s165 = ssub.s32 %s19, %s35
    %s166 = sor.u32 %s164, %s165
    %p167 = scmp.eq.s32.totalorder %s166, 0
    %s169 = sadd.s32 %s168, 1
    %s170 = scalar_select %p167, %s168, %s169
    %p173 = pneg %p167
    %p174 = scmp.eq.s32.totalorder %s10, 7
    %p175 = por %p173, %p174
    %p176 = scmp.ne.s32.totalorder %s168, %s171
    %p177 = scmp.eq.s32.totalorder %s10, 0
    %p178 = por %p176, %p177
    %p179 = scmp.ne.s32.totalorder %s168, %s171
    %p180 = scmp.eq.s32.totalorder %s15, 7
    %p181 = por %p179, %p180
    %p182 = scmp.ne.s32.totalorder %s171, %s172
    %p183 = scmp.eq.s32.totalorder %s15, 0
    %p184 = por %p182, %p183
    %p185 = scmp.ne.s32.totalorder %s171, %s172
    %p186 = scmp.eq.s32.totalorder %s16, 7
    %p187 = por %p185, %p186
    %p189 = scmp.ne.s32.totalorder %s172, %s188
    %p190 = scmp.eq.s32.totalorder %s16, 0
    %p191 = por %p189, %p190
    %p192 = scmp.le.s32.totalorder 1, %s10
    %p193 = scmp.lt.s32.totalorder %s10, 9
    %p194 = pnand %p192, %p193
    %p195 = pneg %p194
    // Predicated region
    $region9: #{transformer_forward.38} parent=5 // pred_check
      _
    $region10: #{transformer_forward.38} parent=5 // pred_check_branch
      %197 = sbr.rel (%p194) target = $region12
    $region11: #{transformer_forward.38} parent=5 // pred_region
      %s198 = ssub.s32 %s10, 1
    $region12: #{transformer_forward.38} parent=5 // pred_fallthru
      _
    %p199 = scmp.lt.s32.totalorder %s10, 8
    // Predicated region
    $region13: #{transformer_forward.38} parent=5 // pred_check
      %p200 = pneg %p199
    $region14: #{transformer_forward.38} parent=5 // pred_check_branch
      %202 = sbr.rel (%p200) target = $region16
    $region15: #{transformer_forward.38} parent=5 // pred_region
      // Predicated region
      $region17: #{transformer_forward.38} parent=15 // pred_check
        %p203 = pneg %p60
      $region18: #{transformer_forward.38} parent=15 // pred_check_branch
        %205 = sbr.rel (%p203) target = $region20
      $region19: #{transformer_forward.38} parent=15 // pred_region
        %p206 = scmp.lt.s32.totalorder %s17, 1
        %s207 = scalar_select %p206, %s17, 1
        %p208 = scmp.lt.s32.totalorder %s18, 3
        %s209 = scalar_select %p208, %s18, 3
        %p210 = scmp.lt.s32.totalorder %s19, 0
        %s211 = scalar_select %p210, %s19, 0
        %s212 = sadd.s32 %s211, %s209
        %s213 = smul.addr %s207, 4
        %s214 = sadd.s32 %s212, %s213
        %s215 = smul.addr %s214, 8
        %s216 = scalar_lea.vmem %s0, %s215
      $region20: #{transformer_forward.38} parent=15 // pred_fallthru
        _
      // Predicated region
      $region21: #{transformer_forward.38} parent=15 // pred_check
        %p217 = pneg %p90
      $region22: #{transformer_forward.38} parent=15 // pred_check_branch
        %219 = sbr.rel (%p217) target = $region24
      $region23: #{transformer_forward.38} parent=15 // pred_region
        %p220 = scmp.lt.s32.totalorder %s17, 1
        %s221 = scalar_select %p220, %s17, 1
        %p222 = scmp.lt.s32.totalorder %s18, 3
        %s223 = scalar_select %p222, %s18, 3
        %p224 = scmp.lt.s32.totalorder %s20, 0
        %s225 = scalar_select %p224, %s20, 0
        %s226 = sadd.s32 %s225, %s223
        %s227 = smul.addr %s221, 4
        %s228 = sadd.s32 %s226, %s227
        %s229 = smul.addr %s228, 8
        %s230 = scalar_lea.vmem %s1, %s229
      $region24: #{transformer_forward.38} parent=15 // pred_fallthru
        _
      // Predicated region
      $region25: #{transformer_forward.38} parent=15 // pred_check
        %p231 = pneg %p120
      $region26: #{transformer_forward.38} parent=15 // pred_check_branch
        %233 = sbr.rel (%p231) target = $region28
      $region27: #{transformer_forward.38} parent=15 // pred_region
        %p234 = scmp.lt.s32.totalorder %s17, 1
        %s235 = scalar_select %p234, %s17, 1
        %p236 = scmp.lt.s32.totalorder %s18, 3
        %s237 = scalar_select %p236, %s18, 3
        %p238 = scmp.lt.s32.totalorder %s20, 0
        %s239 = scalar_select %p238, %s20, 0
        %s240 = sadd.s32 %s239, %s237
        %s241 = smul.addr %s235, 4
        %s242 = sadd.s32 %s240, %s241
        %s243 = smul.addr %s242, 8
        %s244 = scalar_lea.vmem %s2, %s243
      $region28: #{transformer_forward.38} parent=15 // pred_fallthru
        _
      // Predicated region
      $region29: #{transformer_forward.38} parent=15 // pred_check
        %p245 = pneg %p148
      $region30: #{transformer_forward.38} parent=15 // pred_check_branch
        %247 = sbr.rel (%p245) target = $region32
      $region31: #{transformer_forward.38} parent=15 // pred_region
        %p248 = scmp.lt.s32.totalorder %s17, 1
        %s249 = scalar_select %p248, %s17, 1
        %p250 = scmp.lt.s32.totalorder %s20, 0
        %s251 = scalar_select %p250, %s20, 0
        %s252 = sadd.s32 %s251, %s249
        %s253 = scalar_lea.vmem %s3, %s252
      $region32: #{transformer_forward.38} parent=15 // pred_fallthru
        _
    $region16: #{transformer_forward.38} parent=5 // pred_fallthru
      _
    %p254 = scmp.le.s32.totalorder 1, %s10
    %p255 = scmp.lt.s32.totalorder %s10, 9
    %p256 = pnand %p254, %p255
    %p257 = pneg %p256
    // Predicated region
    $region33: #{transformer_forward.38} parent=5 // pred_check
      _
    $region34: #{transformer_forward.38} parent=5 // pred_check_branch
      %259 = sbr.rel (%p256) target = $region36
    $region35: #{transformer_forward.38} parent=5 // pred_region
      %s260 = ssub.s32 %s10, 1
      %p261 = scmp.lt.s32.totalorder %s21, 1
      %s262 = scalar_select %p261, %s21, 1
      %p263 = scmp.lt.s32.totalorder %s22, 3
      %s264 = scalar_select %p263, %s22, 3
      %p265 = scmp.lt.s32.totalorder %s23, 0
      %s266 = scalar_select %p265, %s23, 0
      %s267 = sadd.s32 %s266, %s264
      %s268 = smul.addr %s262, 4
      %s269 = sadd.s32 %s267, %s268
      %s270 = smul.addr %s269, 8
      %s271 = scalar_lea.vmem %s0, %s270
      %p272 = pneg %p66
      %p273 = pneg %p63
      %p274 = scmp.lt.s32.totalorder %s21, 1
      %s275 = scalar_select %p274, %s21, 1
      %p276 = scmp.lt.s32.totalorder %s22, 3
      %s277 = scalar_select %p276, %s22, 3
      %p278 = scmp.lt.s32.totalorder %s24, 0
      %s279 = scalar_select %p278, %s24, 0
      %s280 = sadd.s32 %s279, %s277
      %s281 = smul.addr %s275, 4
      %s282 = sadd.s32 %s280, %s281
      %s283 = smul.addr %s282, 8
      %s284 = scalar_lea.vmem %s1, %s283
      %p285 = pneg %p96
      %p286 = pneg %p93
      %p287 = scmp.lt.s32.totalorder %s21, 1
      %s288 = scalar_select %p287, %s21, 1
      %p289 = scmp.lt.s32.totalorder %s22, 3
      %s290 = scalar_select %p289, %s22, 3
      %p291 = scmp.lt.s32.totalorder %s24, 0
      %s292 = scalar_select %p291, %s24, 0
      %s293 = sadd.s32 %s292, %s290
      %s294 = smul.addr %s288, 4
      %s295 = sadd.s32 %s293, %s294
      %s296 = smul.addr %s295, 8
      %s297 = scalar_lea.vmem %s2, %s296
      %p298 = pneg %p126
      %p299 = pneg %p123
      %p300 = scmp.lt.s32.totalorder %s21, 1
      %s301 = scalar_select %p300, %s21, 1
      %p302 = scmp.lt.s32.totalorder %s24, 0
      %s303 = scalar_select %p302, %s24, 0
      %s304 = sadd.s32 %s303, %s301
      %s305 = scalar_lea.vmem %s3, %s304
      %p306 = pneg %p154
      %p307 = pneg %p151
      %p308 = pneg %p184
      %p309 = pneg %p181
      %p310 = scmp.lt.s32.totalorder %s21, 1
      %s311 = scalar_select %p310, %s21, 1
      %p312 = scmp.lt.s32.totalorder %s22, 3
      %s313 = scalar_select %p312, %s22, 3
      %p314 = scmp.lt.s32.totalorder %s23, 0
      %s315 = scalar_select %p314, %s23, 0
      %s316 = sadd.s32 %s315, %s313
      %s317 = smul.addr %s311, 4
      %s318 = sadd.s32 %s316, %s317
      %s319 = smul.addr %s318, 8
      %s320 = scalar_lea.vmem %s4, %s319
      %p321 = scmp.lt.s32.totalorder %s21, 1
      %s322 = scalar_select %p321, %s21, 1
      %p323 = scmp.lt.s32.totalorder %s22, 3
      %s324 = scalar_select %p323, %s22, 3
      %p325 = scmp.lt.s32.totalorder %s23, 0
      %s326 = scalar_select %p325, %s23, 0
      %s327 = sadd.s32 %s326, %s324
      %s328 = smul.addr %s322, 4
      %s329 = sadd.s32 %s327, %s328
      %s330 = smul.addr %s329, 8
      %s331 = scalar_lea.vmem %s0, %s330
      %p332 = scmp.lt.s32.totalorder %s21, 1
      %s333 = scalar_select %p332, %s21, 1
      %p334 = scmp.lt.s32.totalorder %s22, 3
      %s335 = scalar_select %p334, %s22, 3
      %p336 = scmp.lt.s32.totalorder %s24, 0
      %s337 = scalar_select %p336, %s24, 0
      %s338 = sadd.s32 %s337, %s335
      %s339 = smul.addr %s333, 4
      %s340 = sadd.s32 %s338, %s339
      %s341 = smul.addr %s340, 8
      %s342 = scalar_lea.vmem %s1, %s341
      %p343 = scmp.lt.s32.totalorder %s21, 1
      %s344 = scalar_select %p343, %s21, 1
      %p345 = scmp.lt.s32.totalorder %s22, 3
      %s346 = scalar_select %p345, %s22, 3
      %p347 = scmp.lt.s32.totalorder %s24, 0
      %s348 = scalar_select %p347, %s24, 0
      %s349 = sadd.s32 %s348, %s346
      %s350 = smul.addr %s344, 4
      %s351 = sadd.s32 %s349, %s350
      %s352 = smul.addr %s351, 8
      %s353 = scalar_lea.vmem %s2, %s352
      %p354 = scmp.lt.s32.totalorder %s21, 1
      %s355 = scalar_select %p354, %s21, 1
      %p356 = scmp.lt.s32.totalorder %s24, 0
      %s357 = scalar_select %p356, %s24, 0
      %s358 = sadd.s32 %s357, %s355
      %s359 = scalar_lea.vmem %s3, %s358
      %p360 = scmp.lt.s32.totalorder %s21, 1
      %s361 = scalar_select %p360, %s21, 1
      %p362 = scmp.lt.s32.totalorder %s22, 3
      %s363 = scalar_select %p362, %s22, 3
      %p364 = scmp.lt.s32.totalorder %s23, 0
      %s365 = scalar_select %p364, %s23, 0
      %s366 = sadd.s32 %s365, %s363
      %s367 = smul.addr %s361, 4
      %s368 = sadd.s32 %s366, %s367
      %s369 = smul.addr %s368, 8
      %s370 = scalar_lea.vmem %s4, %s369
      %p372 = scmp.eq.s32.totalorder %s24, 0
      // Predicated region
      $region37: #{transformer_forward.38} parent=35 // pred_check
        %p373 = pneg %p372
      $region38: #{transformer_forward.38} parent=35 // pred_check_branch
        %375 = sbr.rel (%p373) target = $region40
      $region39: #{transformer_forward.38} parent=35 // pred_region
        %vm376 = vcmask 7168
        %377 = vst.msk [vmem:[#allocation2] sm:$0xff] %vm376, -inf
        %378 = vst.msk [vmem:[#allocation3] sm:$0xff] %vm376, 0.0
        %vm379 = vcmask 64512
        %380 = vst.msk [vmem:[#allocation4] sm:$0xff] %vm379, 0.0
      $region40: #{transformer_forward.38} parent=35 // pred_fallthru
        _
      %v381 = vld [vmem:[%s331] sm:$0xff]
      %v382 = vmul.f32 %v381, 0.35355338
      %v383 = vpack.c.bf16 %v382, %v382
      %v384 = vld [vmem:[%s342] sm:$0xff]
      %v385 = vpack.c.bf16 %v384, %v384
      %v386 = vld [vmem:[%s359] sm:$0x1]
      %v388 = vlaneseq
      %v389 = vshrl.u32 %v388, 7
      %v390 = vsub.s32 0, %v389
      %v391 = vrot.slane %v386, %v390
      %vm393 = vcmask 64512
      %v395 = vsel %vm393, %v383, 0
      %v398 = vsel %vm393, %v385, 0
      %400 = vmatprep.subr.bf16.mxu0 0
      %401 = vmatpush1.bf16.xpose.msra.mxu0 %v398
      %402 = vmatprep.subr.bf16.mxu0 0
      %403 = vmatpush1.bf16.xpose.msra.mxu0 0
      %404 = vmatprep.subr.bf16.mxu0 0
      %405 = vmatpush1.bf16.xpose.msra.mxu0 0
      %406 = vmatprep.subr.bf16.mxu0 0
      %407 = vmatpush1.bf16.xpose.msra.mxu0 0
      %408 = vmatprep.subr.bf16.mxu0 0
      %409 = vmatpush1.bf16.xpose.msra.mxu0 0
      %410 = vmatprep.subr.bf16.mxu0 0
      %411 = vmatpush1.bf16.xpose.msra.mxu0 0
      %412 = vmatprep.subr.bf16.mxu0 0
      %413 = vmatpush1.bf16.xpose.msra.mxu0 0
      %414 = vmatprep.subr.bf16.mxu0 0
      %415 = vmatpush1.bf16.xpose.msra.mxu0 0
      %416 = vmatprep.subr.bf16.mxu0 0
      %417 = vmatpush1.bf16.xpose.msra.mxu0 0
      %418 = vmatprep.subr.bf16.mxu0 0
      %419 = vmatpush1.bf16.xpose.msra.mxu0 0
      %420 = vmatprep.subr.bf16.mxu0 0
      %421 = vmatpush1.bf16.xpose.msra.mxu0 0
      %422 = vmatprep.subr.bf16.mxu0 0
      %423 = vmatpush1.bf16.xpose.msra.mxu0 0
      %424 = vmatprep.subr.bf16.mxu0 0
      %425 = vmatpush1.bf16.xpose.msra.mxu0 0
      %426 = vmatprep.subr.bf16.mxu0 0
      %427 = vmatpush1.bf16.xpose.msra.mxu0 0
      %428 = vmatprep.subr.bf16.mxu0 0
      %429 = vmatpush1.bf16.xpose.msra.mxu0 0
      %430 = vmatprep.subr.bf16.mxu0 0
      %431 = vmatpush1.bf16.xpose.msra.mxu0 0
      %432 = vmatprep.mubr.bf16.mxu0 0
      %433 = vmatmul.mubr.bf16.gmra.mrb[0].mxu0 %v395
      %v434 = vpop.f32.mrb[0].mxu0
      %v435 = vadd.f32 %v391, %v434
      %v436 = vpop.f32.mrb[0].mxu0
      %v437 = vpop.f32.mrb[0].mxu0
      %v438 = vpop.f32.mrb[0].mxu0
      %439 = vdwg.mxu0
      %v440 = vld [vmem:[#allocation2] sm:$0xff]
      %v441 = vsel %vm393, %v435, -inf
      %442 = vmax.xlane.f32.xlu0 %v441
      %v443 = vpop.xlane.xlu0 %442
      %v444 = vmax.f32 %v440, %v443
      %v445 = vsub.f32 %v440, %v444
      %v446 = vmul.f32 %v445, 1.442695
      %v447 = vpow.pop %v446
      %449 = vset.pattern.permute.xlu0 0
      %450 = vperm.xlu0 %449, %v444
      %v451 = vpop.permute.xlu0 %450
      %v453 = vsub.f32 %v435, %v451
      %v454 = vmul.f32 %v453, 1.442695
      %v455 = vpow.pop %v454
      %v456 = vld [vmem:[#allocation3] sm:$0xff]
      %v457 = vmul.f32 %v447, %v456
      %v458 = vsel %vm393, %v455, 0.0
      %459 = vadd.xlane.f32.xlu0 %v458
      %v460 = vpop.xlane.xlu0 %459
      %v461 = vadd.f32 %v457, %v460
      %vm462 = vcmask 7168
      %463 = vst.msk [vmem:[#allocation3] sm:$0xff] %vm462, %v461
      %v464 = vld [vmem:[#allocation4] sm:$0xff]
      %466 = vset.pattern.permute.xlu0 0
      %467 = vperm.xlu0 %466, %v447
      %v468 = vpop.permute.xlu0 %467
      %v470 = vmul.f32 %v468, %v464
      %v471 = vpack.c.bf16 %v455, %v455
      %v472 = vld [vmem:[%s353] sm:$0xff]
      %v473 = vpack.c.bf16 %v472, %v472
      %v475 = vsel %vm393, %v471, 0
      %vm477 = vcmask 1043456
      %v479 = vsel %vm477, %v473, 0
      %481 = vmatprep.subr.bf16.mxu0 0
      %482 = vmatpush1.bf16.msra.mxu0 %v479
      %483 = vmatprep.subr.bf16.mxu0 0
      %484 = vmatpush1.bf16.msra.mxu0 0
      %485 = vmatprep.subr.bf16.mxu0 0
      %486 = vmatpush1.bf16.msra.mxu0 0
      %487 = vmatprep.subr.bf16.mxu0 0
      %488 = vmatpush1.bf16.msra.mxu0 0
      %489 = vmatprep.subr.bf16.mxu0 0
      %490 = vmatpush1.bf16.msra.mxu0 0
      %491 = vmatprep.subr.bf16.mxu0 0
      %492 = vmatpush1.bf16.msra.mxu0 0
      %493 = vmatprep.subr.bf16.mxu0 0
      %494 = vmatpush1.bf16.msra.mxu0 0
      %495 = vmatprep.subr.bf16.mxu0 0
      %496 = vmatpush1.bf16.msra.mxu0 0
      %497 = vmatprep.subr.bf16.mxu0 0
      %498 = vmatpush1.bf16.msra.mxu0 0
      %499 = vmatprep.subr.bf16.mxu0 0
      %500 = vmatpush1.bf16.msra.mxu0 0
      %501 = vmatprep.subr.bf16.mxu0 0
      %502 = vmatpush1.bf16.msra.mxu0 0
      %503 = vmatprep.subr.bf16.mxu0 0
      %504 = vmatpush1.bf16.msra.mxu0 0
      %505 = vmatprep.subr.bf16.mxu0 0
      %506 = vmatpush1.bf16.msra.mxu0 0
      %507 = vmatprep.subr.bf16.mxu0 0
      %508 = vmatpush1.bf16.msra.mxu0 0
      %509 = vmatprep.subr.bf16.mxu0 0
      %510 = vmatpush1.bf16.msra.mxu0 0
      %511 = vmatprep.subr.bf16.mxu0 0
      %512 = vmatpush1.bf16.msra.mxu0 0
      %513 = vmatprep.mubr.bf16.mxu0 0
      %514 = vmatmul.mubr.bf16.gmra.mrb[0].mxu0 %v475
      %v515 = vpop.f32.mrb[0].mxu0
      %v516 = vadd.f32 0.0, %v515
      %v517 = vpop.f32.mrb[0].mxu0
      %v518 = vpop.f32.mrb[0].mxu0
      %v519 = vpop.f32.mrb[0].mxu0
      %520 = vdwg.mxu0
      %v521 = vadd.f32 %v470, %v516
      %522 = vst.msk [vmem:[#allocation4] sm:$0xff] %vm393, %v521
      %523 = vst.msk [vmem:[#allocation2] sm:$0xff] %vm462, %v444
      // Predicated region
      $region41: #{transformer_forward.38} parent=35 // pred_check
        %p524 = pneg %p372
      $region42: #{transformer_forward.38} parent=35 // pred_check_branch
        %526 = sbr.rel (%p524) target = $region44
      $region43: #{transformer_forward.38} parent=35 // pred_region
        %v527 = vld [vmem:[#allocation4] sm:$0xff]
        %v528 = vld [vmem:[#allocation3] sm:$0xff]
        %v529 = vrcp.pop %v528
        %531 = vset.pattern.permute.xlu0 0
        %532 = vperm.xlu0 %531, %v529
        %v533 = vpop.permute.xlu0 %532
        %v535 = vmul.f32 %v527, %v533
        %536 = vst.msk [vmem:[%s370] sm:$0xff] %vm393, %v535
      $region44: #{transformer_forward.38} parent=35 // pred_fallthru
        _
      %p537 = scmp.lt.s32.totalorder %s21, 1
      %s538 = scalar_select %p537, %s21, 1
      %p539 = scmp.lt.s32.totalorder %s22, 3
      %s540 = scalar_select %p539, %s22, 3
      %p541 = scmp.lt.s32.totalorder %s23, 0
      %s542 = scalar_select %p541, %s23, 0
      %s543 = sadd.s32 %s542, %s540
      %s544 = smul.addr %s538, 4
      %s545 = sadd.s32 %s543, %s544
      %s546 = smul.addr %s545, 8
      %s547 = scalar_lea.vmem %s4, %s546
      // Predicated region
      $region45: #{transformer_forward.38} parent=35 // pred_check
        %p548 = pneg %p181
      $region46: #{transformer_forward.38} parent=35 // pred_check_branch
        %550 = sbr.rel (%p548) target = $region48
      $region47: #{transformer_forward.38} parent=35 // pred_region
        _
      $region48: #{transformer_forward.38} parent=35 // pred_fallthru
        _
    $region36: #{transformer_forward.38} parent=5 // pred_fallthru
      _
    %p551 = scmp.le.s32.totalorder 2, %s10
    // Predicated region
    $region49: #{transformer_forward.38} parent=5 // pred_check
      %p552 = pneg %p551
    $region50: #{transformer_forward.38} parent=5 // pred_check_branch
      %554 = sbr.rel (%p552) target = $region52
    $region51: #{transformer_forward.38} parent=5 // pred_region
      %s555 = ssub.s32 %s10, 2
      // Predicated region
      $region53: #{transformer_forward.38} parent=51 // pred_check
        %p556 = pneg %p187
      $region54: #{transformer_forward.38} parent=51 // pred_check_branch
        %558 = sbr.rel (%p556) target = $region56
      $region55: #{transformer_forward.38} parent=51 // pred_region
        %p559 = scmp.lt.s32.totalorder %s25, 1
        %s560 = scalar_select %p559, %s25, 1
        %p561 = scmp.lt.s32.totalorder %s26, 3
        %s562 = scalar_select %p561, %s26, 3
        %p563 = scmp.lt.s32.totalorder %s27, 0
        %s564 = scalar_select %p563, %s27, 0
        %s565 = sadd.s32 %s564, %s562
        %s566 = smul.addr %s560, 4
        %s567 = sadd.s32 %s565, %s566
        %s568 = smul.addr %s567, 8
        %s569 = scalar_lea.vmem %s4, %s568
      $region56: #{transformer_forward.38} parent=51 // pred_fallthru
        _
    $region52: #{transformer_forward.38} parent=5 // pred_fallthru
      _
  $region6: #{transformer_forward.38} parent=0 // loop_footer
    %s14 = sadd.s32 1, %s10
  $region7: #{transformer_forward.38} parent=0 // loop_footer_branch
    %9 = sbr.rel target = $region3
  $region8: #{transformer_forward.38} parent=0 // loop_exit
    _

// kernel: transformer_forward.73
$region0: #{transformer_forward.73}
  #allocation0 [shape = 'u32[]', space=smem, size = 0x4, offset = 0x4, fixed_abs, tag = 'smem constant byte address 0x4 - core index']
  #allocation1 [shape = 'u32[144,128]{1,0:T(1,128)}', space=vmem, size = 0x12000, scoped, tag = 'internal scratch']
  %s0 = inlined_call_operand.vmem [shape: f32[16,32], index: 0, kind: input, shape index: {}]
  %s1 = inlined_call_operand.vmem [shape: bf16[32,11], index: 1, kind: input, shape index: {}]
  %s2 = inlined_call_operand.hbm [shape: f32[16,11], index: 2, kind: output, shape index: {}]
  %s3 = sld [smem:[#allocation0]]
  $region18: #{transformer_forward.73} parent=0
    _
  %s5 = ssub.s32 1, %s3
  %s6 = scalar_select 0, %s5, %s3
  $region1: #{transformer_forward.73} parent=0
    #allocation2 [shape = 'u8[8192]{0}', space=vmem, size = 0x2000, scoped, tag = 'output window, operand 0, single buffered']
    #allocation3 [shape = 's32[1]{0}', space=sflag, size = 0x4, scoped, tag = 'scoped memory for transformer_forward.73']
    %7 = vsyncpa [#allocation3], 0
    // Predicated region
    $region2: #{transformer_forward.73} parent=1 // pred_check
      _
    $region3: #{transformer_forward.73} parent=1 // pred_check_branch
      %9 = sbr.rel (0) target = $region5
    $region4: #{transformer_forward.73} parent=1 // pred_region
      _
    $region5: #{transformer_forward.73} parent=1 // pred_fallthru
      _
    // Predicated region
    $region6: #{transformer_forward.73} parent=1 // pred_check
      _
    $region7: #{transformer_forward.73} parent=1 // pred_check_branch
      %11 = sbr.rel (0) target = $region9
    $region8: #{transformer_forward.73} parent=1 // pred_region
      _
    $region9: #{transformer_forward.73} parent=1 // pred_fallthru
      _
    %v13 = vld [vmem:[%s0] sm:$0xff]
    %v14 = vld [vmem:[%s0 + $0x8] sm:$0xff]
    %v15 = vpack.c.bf16 %v14, %v13
    %v16 = vld [vmem:[%s1] sm:$0xf]
    %v17 = vld [vmem:[%s1 + $0x4] sm:$0xf]
    %v18 = vld [vmem:[%s1 + $0x8] sm:$0xf]
    %v19 = vld [vmem:[%s1 + $0xc] sm:$0xf]
    %v24 = vunpack.c.l.b16 %v16
    %v25 = vunpack.c.l.b16 %v17
    %v26 = vunpack.c.l.b16 %v18
    %v27 = vunpack.c.l.b16 %v19
    %v28 = vpack.c.b16 %v25, %v24
    %v29 = vpack.c.b16 %v27, %v26
    %vm32 = vcmask 261120
    %v34 = vsel %vm32, %v15, 0
    %36 = vmatprep.subr.bf16.mxu0 0
    %37 = vmatpush1.bf16.msra.mxu0 %v28
    %38 = vmatprep.subr.bf16.mxu0 0
    %39 = vmatpush1.bf16.msra.mxu0 %v29
    %40 = vmatprep.subr.bf16.mxu0 0
    %41 = vmatpush1.bf16.msra.mxu0 0
    %42 = vmatprep.subr.bf16.mxu0 0
    %43 = vmatpush1.bf16.msra.mxu0 0
    %44 = vmatprep.subr.bf16.mxu0 0
    %45 = vmatpush1.bf16.msra.mxu0 0
    %46 = vmatprep.subr.bf16.mxu0 0
    %47 = vmatpush1.bf16.msra.mxu0 0
    %48 = vmatprep.subr.bf16.mxu0 0
    %49 = vmatpush1.bf16.msra.mxu0 0
    %50 = vmatprep.subr.bf16.mxu0 0
    %51 = vmatpush1.bf16.msra.mxu0 0
    %52 = vmatprep.subr.bf16.mxu0 0
    %53 = vmatpush1.bf16.msra.mxu0 0
    %54 = vmatprep.subr.bf16.mxu0 0
    %55 = vmatpush1.bf16.msra.mxu0 0
    %56 = vmatprep.subr.bf16.mxu0 0
    %57 = vmatpush1.bf16.msra.mxu0 0
    %58 = vmatprep.subr.bf16.mxu0 0
    %59 = vmatpush1.bf16.msra.mxu0 0
    %60 = vmatprep.subr.bf16.mxu0 0
    %61 = vmatpush1.bf16.msra.mxu0 0
    %62 = vmatprep.subr.bf16.mxu0 0
    %63 = vmatpush1.bf16.msra.mxu0 0
    %64 = vmatprep.subr.bf16.mxu0 0
    %65 = vmatpush1.bf16.msra.mxu0 0
    %66 = vmatprep.subr.bf16.mxu0 0
    %67 = vmatpush1.bf16.msra.mxu0 0
    %68 = vmatprep.mubr.bf16.mxu0 0
    %69 = vmatmul.mubr.bf16.gmra.mrb[0].mxu0 %v34
    %v70 = vpop.f32.mrb[0].mxu0
    %v71 = vadd.f32 0.0, %v70
    %v72 = vpop.f32.mrb[0].mxu0
    %v73 = vpop.f32.mrb[0].mxu0
    %v74 = vadd.f32 0.0, %v73
    %v75 = vpop.f32.mrb[0].mxu0
    %76 = vdwg.mxu0
    %vm77 = vcmask 89088
    %78 = vst.msk [vmem:[#allocation2] sm:$0xff] %vm77, %v71
    %79 = vst.msk [vmem:[#allocation2 + $0x8] sm:$0xff] %vm77, %v74
    // Predicated region
    $region10: #{transformer_forward.73} parent=1 // pred_check
      _
    $region11: #{transformer_forward.73} parent=1 // pred_check_branch
      %81 = sbr.rel (0) target = $region13
    $region12: #{transformer_forward.73} parent=1 // pred_region
      %s83 = ssub.s32 256, 256
      %84 = vsyncadd [#allocation3], %s83
      %s85 = sshll.u32 [#allocation2], 4
      %s86 = int_to_ptr.vmem [resolvable:$true] %s85
      %91 = dma.vmem_to_hbm [thread:$0]  %s86, 256, %s2, [#allocation3], 128, 128, 8
    $region13: #{transformer_forward.73} parent=1 // pred_fallthru
      _
    // Predicated region
    $region14: #{transformer_forward.73} parent=1 // pred_check
      _
    $region15: #{transformer_forward.73} parent=1 // pred_check_branch
      %93 = sbr.rel (0) target = $region17
    $region16: #{transformer_forward.73} parent=1 // pred_region
      %94 = dma.done [#allocation3], 256
    $region17: #{transformer_forward.73} parent=1 // pred_fallthru
      _
    %95 = vsyncpa [#allocation3], 1

</llo_original>
